<compile_context>
chip_gen: v5e
topology: v5e:2x2
jax: 0.10.0
libtpu: 0.0.40
codegen_flags: <defaults>
</compile_context>

<pallas_src>
import functools

import jax
import jax.numpy as jnp
from jax.experimental import pallas as pl
from jax.experimental.pallas import tpu as pltpu

NEG_SLOPE = 0.2      # GATv2Conv default negative_slope
MASK_NEG = -1e9      # additive mask for non-edges


# ----------------------------------------------------------------------------
# Fused kernel: 3x (GATv2Conv + head_linear [+ReLU]) + mean-pool + MLP.
# ----------------------------------------------------------------------------
def _encoder_kernel(adj_ref, x_ref, pool_ref, expand_ref, *rest,
                    heads, out_ch, n_nodes):
    # rest = [wlr, blr, att_abs, att_lin, att_exp, gbias, wh, bh] x 3 layers,
    #        then w1, b1, w2, b2, then out_ref.
    layer_refs = [rest[i * 8:(i + 1) * 8] for i in range(3)]
    w1_ref, b1_ref, w2_ref, b2_ref = rest[24:28]
    out_ref = rest[28]

    n = n_nodes
    hc = heads * out_ch
    hn = heads * n

    # Additive mask tiled across head blocks (shared by all layers):
    # 0 on edges, -1e9 on non-edges.  adj arrives as int8.
    neg = (adj_ref[...].astype(jnp.float32) - 1.0) * (-MASK_NEG)   # [N, N]
    neg = -neg
    neg_p = jnp.tile(neg, (1, heads))                              # [N, H*N]

    expand_bf = expand_ref[...].astype(jnp.bfloat16)               # [HC, C*H*N]

    def gat_layer(x, refs, relu):
        (wlr_ref, blr_ref, att_abs_ref, att_lin_ref, att_exp_ref,
         gb_ref, wh_ref, bh_ref) = refs

        # Fused lin_l | lin_r projection: one MXU dot (bf16 in, f32 acc).
        xlr = jnp.dot(x.astype(jnp.bfloat16),
                      wlr_ref[...].astype(jnp.bfloat16),
                      preferred_element_type=jnp.float32) + blr_ref[...]
        xl = xlr[:, :hc]            # source projection (also the value) [N, HC]
        xr = xlr[:, hc:]            # target projection                  [N, HC]
        xl_bf = xl.astype(jnp.bfloat16)
        xr_bf = xr.astype(jnp.bfloat16)

        # ---- head-lane-packed attention logits ------------------------------
        # xl_packed[c, h*N + j] = xl[j, h*C + c]
        xl_t = xl.T                                                # [HC, N]
        xl_packed = jnp.concatenate(
            [xl_t[h * out_ch:(h + 1) * out_ch, :] for h in range(heads)],
            axis=1)                                                # [C, H*N]

        # xr_b[i, c*H*N + h*N + j] = xr[i, h*C + c]  (lane broadcast via MXU)
        xr_b = jnp.dot(xr_bf, expand_bf,
                       preferred_element_type=jnp.float32)         # [N, C*H*N]

        # Linear part of the lrelu decomposition (0.6 factor folded on host):
        # lin[i, h*N+j] = 0.6 * ( att_h . xr[i,h,:]  +  att_h . xl[j,h,:] )
        lin = jnp.dot(xr_bf, att_exp_ref[...].astype(jnp.bfloat16),
                      preferred_element_type=jnp.float32)          # [N, H*N]
        lin = lin + jnp.sum(att_lin_ref[...] * xl_packed,
                            axis=0, keepdims=True)                 # + [1, H*N]

        # Nonlinear part: 0.4 * sum_c att[h,c] * |xl + xr|  (0.4 folded on host).
        att_abs = att_abs_ref[...]                                 # [C, H*N]
        acc = None
        for c in range(out_ch):                   # 8 iterations on [N, H*N]
            z = xr_b[:, c * hn:(c + 1) * hn] + xl_packed[c:c + 1, :]
            t = att_abs[c:c + 1, :] * jnp.abs(z)
            acc = t if acc is None else acc + t

        logit = lin + acc + neg_p                                  # [N, H*N]

        # ---- per-head masked softmax + aggregation (results stay in vregs) --
        outs = []
        for h in range(heads):
            seg = logit[:, h * n:(h + 1) * n]                      # [N, N]
            seg = seg - jnp.max(seg, axis=1, keepdims=True)
            p = jnp.exp(seg)
            alpha = p * pl.reciprocal(jnp.sum(p, axis=1, keepdims=True),
                                      approx=True)
            outs.append(jnp.dot(alpha.astype(jnp.bfloat16),
                                xl_bf[:, h * out_ch:(h + 1) * out_ch],
                                preferred_element_type=jnp.float32))
        gat = jnp.concatenate(outs, axis=1) + gb_ref[...]          # [N, HC]

        # head_linear (+ optional ReLU), bf16 MXU operands / f32 accumulate.
        y = jnp.dot(gat.astype(jnp.bfloat16),
                    wh_ref[...].astype(jnp.bfloat16),
                    preferred_element_type=jnp.float32) + bh_ref[...]
        if relu:
            y = jnp.maximum(y, 0.0)
        return y

    x = x_ref[...]
    x = gat_layer(x, layer_refs[0], relu=True)     # conv1 + head_linear1 + relu
    x = gat_layer(x, layer_refs[1], relu=True)     # conv2 + head_linear2 + relu
    x = gat_layer(x, layer_refs[2], relu=False)    # conv3 + head_linear3

    # global_mean_pool as a dense pooling matmul, then the 2-layer MLP.
    pooled = jnp.dot(pool_ref[...].astype(jnp.bfloat16), x.astype(jnp.bfloat16),
                     preferred_element_type=jnp.float32)           # [B, GH]
    h1 = jnp.maximum(
        jnp.dot(pooled.astype(jnp.bfloat16), w1_ref[...].astype(jnp.bfloat16),
                preferred_element_type=jnp.float32) + b1_ref[...], 0.0)
    out_ref[...] = jnp.dot(h1.astype(jnp.bfloat16),
                           w2_ref[...].astype(jnp.bfloat16),
                           preferred_element_type=jnp.float32) + b2_ref[...]


# ----------------------------------------------------------------------------
# Wrapper: host-side derived constants + pallas_call.
# ----------------------------------------------------------------------------
def gat_encoder_v2(x, adj_i8, pool, params, *, heads, out_ch):
    n = x.shape[0]
    b = pool.shape[0]
    nout_dim = params["mlp"]["w2"].shape[1]
    hc = heads * out_ch
    hn = heads * n

    # expand_all[h*C+c, c'*H*N + h'*N + j] = 1 iff (h==h' and c==c')
    k = jnp.arange(hc)
    m = jnp.arange(out_ch * hn)
    c_of_m = m // hn
    h_of_m = (m % hn) // n
    expand_all = ((k[:, None] % out_ch == c_of_m[None, :])
                  & (k[:, None] // out_ch == h_of_m[None, :])).astype(jnp.float32)

    rows = jnp.arange(hc)            # h*C + c
    cols = jnp.arange(hn)            # h'*N + j
    blk = (rows[:, None] // out_ch) == (cols[None, :] // n)

    lrelu_pos = 0.5 * (1.0 + NEG_SLOPE)      # 0.6
    lrelu_abs = 0.5 * (1.0 - NEG_SLOPE)      # 0.4

    def layer_consts(att):                   # att [H, C]
        att_lanes = jnp.repeat(att.T, n, axis=1)               # [C, H*N]
        att_exp = jnp.where(blk, att.reshape(-1)[:, None], 0.0)  # [HC, H*N]
        return lrelu_abs * att_lanes, lrelu_pos * att_lanes, lrelu_pos * att_exp

    vmem = pl.BlockSpec(memory_space=pltpu.MemorySpace.VMEM)

    args = [adj_i8, x, pool, expand_all]
    for lname in ("l1", "l2", "l3"):
        p = params[lname]
        a_abs, a_lin, a_exp = layer_consts(p["att"])
        args += [p["wlr"], p["blr"], a_abs, a_lin, a_exp,
                 p["gbias"], p["wh"], p["bh"]]
    mlp = params["mlp"]
    args += [mlp["w1"], mlp["b1"], mlp["w2"], mlp["b2"]]

    kernel = functools.partial(_encoder_kernel, heads=heads, out_ch=out_ch,
                               n_nodes=n)
    return pl.pallas_call(
        kernel,
        out_shape=jax.ShapeDtypeStruct((b, nout_dim), jnp.float32),
        in_specs=[vmem] * len(args),
        out_specs=vmem,
        compiler_params=pltpu.CompilerParams(vmem_limit_bytes=32 * 1024 * 1024),
    )(*args)


# ----------------------------------------------------------------------------
# Pure-JAX f32 reference (eval-mode GATv2 semantics) for a sanity check.
# ----------------------------------------------------------------------------
def reference_forward(x, adj_mask, pool, params, *, heads, out_ch):
    hc = heads * out_ch

    def gat_layer(x, p, relu):
        xlr = x @ p["wlr"] + p["blr"]
        xl, xr = xlr[:, :hc], xlr[:, hc:]
        xl3 = xl.reshape(-1, heads, out_ch)
        xr3 = xr.reshape(-1, heads, out_ch)
        z = xr3[:, None, :, :] + xl3[None, :, :, :]           # [i, j, h, c]
        z = jnp.where(z > 0, z, NEG_SLOPE * z)
        e = jnp.einsum("ijhc,hc->ijh", z, p["att"])
        e = jnp.where(adj_mask[:, :, None], e, MASK_NEG)
        a = jax.nn.softmax(e, axis=1)
        out = jnp.einsum("ijh,jhc->ihc", a, xl3).reshape(-1, hc) + p["gbias"]
        y = out @ p["wh"] + p["bh"]
        return jnp.maximum(y, 0.0) if relu else y

    x = gat_layer(x, params["l1"], True)
    x = gat_layer(x, params["l2"], True)
    x = gat_layer(x, params["l3"], False)
    pooled = pool @ x
    h1 = jnp.maximum(pooled @ params["mlp"]["w1"] + params["mlp"]["b1"], 0.0)
    return h1 @ params["mlp"]["w2"] + params["mlp"]["b2"]


# ----------------------------------------------------------------------------
# Parameter init (deterministic, synthetic — not a checkpoint load).
# ----------------------------------------------------------------------------
def _init_gat_params(key, fin, heads, out_ch, gh):
    hcdim = heads * out_ch
    ks = jax.random.split(key, 6)
    s = 0.1
    return {
        # fused [Wl | Wr] projection weight / bias (lin_l and lin_r biases)
        "wlr": s * jax.random.normal(ks[0], (fin, 2 * hcdim), jnp.float32),
        "blr": s * jax.random.normal(ks[1], (1, 2 * hcdim), jnp.float32),
        "att": s * jax.random.normal(ks[2], (heads, out_ch), jnp.float32),
        "gbias": s * jax.random.normal(ks[3], (1, hcdim), jnp.float32),
        "wh": s * jax.random.normal(ks[4], (hcdim, gh), jnp.float32),
        "bh": s * jax.random.normal(ks[5], (1, gh), jnp.float32),
    }


if __name__ == "__main__":
    # small, module-consistent sizes
    num_node_features = 16
    graph_hidden_channels = 8
    nheads = 4
    nhid = 32
    nout = 16
    N = 12           # total nodes across the batch
    B = 2            # graphs in the batch

    key = jax.random.PRNGKey(0)
    kx, kadj, k1, k2, k3, kw1, kb1, kw2, kb2 = jax.random.split(key, 9)

    # node features
    x = jax.random.normal(kx, (N, num_node_features), jnp.float32)

    # batch assignment: nodes 0..5 -> graph 0, nodes 6..11 -> graph 1
    batch = jnp.array([0] * 6 + [1] * 6, dtype=jnp.int32)

    # dense adjacency adj[target, source]; edges only within a graph; + self loops
    same_graph = batch[:, None] == batch[None, :]
    rand_edges = jax.random.bernoulli(kadj, 0.4, (N, N))
    adj_bool = (same_graph & rand_edges).at[jnp.arange(N), jnp.arange(N)].set(True)
    adj_i8 = adj_bool.astype(jnp.int8)        # int8 mask shipped to the kernel

    # mean-pool matrix: pool[b, n] = 1/|graph b| if node n in graph b else 0
    onehot = (batch[None, :] == jnp.arange(B)[:, None]).astype(jnp.float32)
    pool = onehot / jnp.sum(onehot, axis=1, keepdims=True)

    params = {
        "l1": _init_gat_params(k1, num_node_features, nheads,
                               graph_hidden_channels, graph_hidden_channels),
        "l2": _init_gat_params(k2, graph_hidden_channels, nheads,
                               graph_hidden_channels, graph_hidden_channels),
        "l3": _init_gat_params(k3, graph_hidden_channels, nheads,
                               graph_hidden_channels, graph_hidden_channels),
        "mlp": {
            "w1": 0.1 * jax.random.normal(kw1, (graph_hidden_channels, nhid), jnp.float32),
            "b1": 0.1 * jax.random.normal(kb1, (1, nhid), jnp.float32),
            "w2": 0.1 * jax.random.normal(kw2, (nhid, nout), jnp.float32),
            "b2": 0.1 * jax.random.normal(kb2, (1, nout), jnp.float32),
        },
    }

    fwd = jax.jit(functools.partial(gat_encoder_v2, heads=nheads,
                                    out_ch=graph_hidden_channels))
    out = jax.block_until_ready(fwd(x, adj_i8, pool, params))
    assert out.shape == (B, nout), out.shape

    # Loose-tolerance sanity check vs the f32 reference (bf16 MXU operands +
    # approx reciprocal introduce ~1e-3-level deviations).
    ref = reference_forward(x, adj_bool, pool, params,
                            heads=nheads, out_ch=graph_hidden_channels)
    max_err = float(jnp.max(jnp.abs(out - ref)))
    assert max_err < 5e-2, f"mismatch vs reference: max abs err {max_err}"

    print("KERNEL_OK")
</pallas_src>

<mosaic_0001>
module attributes {stable_mosaic.version = 11 : i64} {
  func.func @_encoder_kernel(%arg0: memref<12x12xi8, #tpu.memory_space<vmem>>, %arg1: memref<12x16xf32, #tpu.memory_space<vmem>>, %arg2: memref<2x12xf32, #tpu.memory_space<vmem>>, %arg3: memref<32x384xf32, #tpu.memory_space<vmem>>, %arg4: memref<16x64xf32, #tpu.memory_space<vmem>>, %arg5: memref<1x64xf32, #tpu.memory_space<vmem>>, %arg6: memref<8x48xf32, #tpu.memory_space<vmem>>, %arg7: memref<8x48xf32, #tpu.memory_space<vmem>>, %arg8: memref<32x48xf32, #tpu.memory_space<vmem>>, %arg9: memref<1x32xf32, #tpu.memory_space<vmem>>, %arg10: memref<32x8xf32, #tpu.memory_space<vmem>>, %arg11: memref<1x8xf32, #tpu.memory_space<vmem>>, %arg12: memref<8x64xf32, #tpu.memory_space<vmem>>, %arg13: memref<1x64xf32, #tpu.memory_space<vmem>>, %arg14: memref<8x48xf32, #tpu.memory_space<vmem>>, %arg15: memref<8x48xf32, #tpu.memory_space<vmem>>, %arg16: memref<32x48xf32, #tpu.memory_space<vmem>>, %arg17: memref<1x32xf32, #tpu.memory_space<vmem>>, %arg18: memref<32x8xf32, #tpu.memory_space<vmem>>, %arg19: memref<1x8xf32, #tpu.memory_space<vmem>>, %arg20: memref<8x64xf32, #tpu.memory_space<vmem>>, %arg21: memref<1x64xf32, #tpu.memory_space<vmem>>, %arg22: memref<8x48xf32, #tpu.memory_space<vmem>>, %arg23: memref<8x48xf32, #tpu.memory_space<vmem>>, %arg24: memref<32x48xf32, #tpu.memory_space<vmem>>, %arg25: memref<1x32xf32, #tpu.memory_space<vmem>>, %arg26: memref<32x8xf32, #tpu.memory_space<vmem>>, %arg27: memref<1x8xf32, #tpu.memory_space<vmem>>, %arg28: memref<8x32xf32, #tpu.memory_space<vmem>>, %arg29: memref<1x32xf32, #tpu.memory_space<vmem>>, %arg30: memref<32x16xf32, #tpu.memory_space<vmem>>, %arg31: memref<1x16xf32, #tpu.memory_space<vmem>>, %arg32: memref<2x16xf32, #tpu.memory_space<vmem>>) attributes {dimension_semantics = [], scalar_prefetch = 0 : i64, scratch_operands = 0 : i64, tpu.core_type = #tpu.core_type<tc>} {
    %c0 = arith.constant 0 : index
    %c0_0 = arith.constant 0 : index
    %0 = vector.load %arg0[%c0, %c0_0] : memref<12x12xi8, #tpu.memory_space<vmem>>, vector<12x12xi8>
    %1 = arith.sitofp %0 : vector<12x12xi8> to vector<12x12xf32>
    %cst = arith.constant 1.000000e+00 : f32
    %2 = vector.broadcast %cst : f32 to vector<12x12xf32>
    %3 = arith.subf %1, %2 : vector<12x12xf32>
    %cst_1 = arith.constant 1.000000e+09 : f32
    %4 = vector.broadcast %cst_1 : f32 to vector<12x12xf32>
    %5 = arith.mulf %3, %4 : vector<12x12xf32>
    %cst_2 = arith.constant 0.000000e+00 : f32
    %6 = vector.broadcast %cst_2 : f32 to vector<12x12xf32>
    %7 = arith.subf %6, %5 : vector<12x12xf32>
    %8 = tpu.concatenate %7, %7, %7, %7 in 1 : vector<12x12xf32>, vector<12x12xf32>, vector<12x12xf32>, vector<12x12xf32> -> vector<12x48xf32>
    %c0_3 = arith.constant 0 : index
    %c0_4 = arith.constant 0 : index
    %9 = vector.load %arg3[%c0_3, %c0_4] : memref<32x384xf32, #tpu.memory_space<vmem>>, vector<32x384xf32>
    %10 = arith.truncf %9 : vector<32x384xf32> to vector<32x384xbf16>
    %c0_5 = arith.constant 0 : index
    %c0_6 = arith.constant 0 : index
    %11 = vector.load %arg1[%c0_5, %c0_6] : memref<12x16xf32, #tpu.memory_space<vmem>>, vector<12x16xf32>
    %12 = arith.truncf %11 : vector<12x16xf32> to vector<12x16xbf16>
    %c0_7 = arith.constant 0 : index
    %c0_8 = arith.constant 0 : index
    %13 = vector.load %arg4[%c0_7, %c0_8] : memref<16x64xf32, #tpu.memory_space<vmem>>, vector<16x64xf32>
    %14 = arith.truncf %13 : vector<16x64xf32> to vector<16x64xbf16>
    %cst_9 = arith.constant dense<0.000000e+00> : vector<12x64xf32>
    %15 = tpu.matmul %12, %14, %cst_9 {dimension_numbers = #tpu.dot_dimension_numbers<[1], [0], [0], [1], [0, 0, 1, 1], [], []>} : vector<12x16xbf16>, vector<16x64xbf16>, vector<12x64xf32> -> vector<12x64xf32>
    %c0_10 = arith.constant 0 : index
    %c0_11 = arith.constant 0 : index
    %16 = vector.load %arg5[%c0_10, %c0_11] : memref<1x64xf32, #tpu.memory_space<vmem>>, vector<1x64xf32>
    %17 = vector.broadcast %16 : vector<1x64xf32> to vector<12x64xf32>
    %18 = arith.addf %15, %17 : vector<12x64xf32>
    %19 = vector.extract_strided_slice %18 {offsets = [0, 0], sizes = [12, 32], strides = [1, 1]} : vector<12x64xf32> to vector<12x32xf32>
    %20 = vector.extract_strided_slice %18 {offsets = [0, 32], sizes = [12, 32], strides = [1, 1]} : vector<12x64xf32> to vector<12x32xf32>
    %21 = arith.truncf %19 : vector<12x32xf32> to vector<12x32xbf16>
    %22 = arith.truncf %20 : vector<12x32xf32> to vector<12x32xbf16>
    %23 = tpu.transpose %19, [1, 0] : vector<12x32xf32> -> vector<32x12xf32>
    %24 = vector.extract_strided_slice %23 {offsets = [0, 0], sizes = [8, 12], strides = [1, 1]} : vector<32x12xf32> to vector<8x12xf32>
    %25 = vector.extract_strided_slice %23 {offsets = [8, 0], sizes = [8, 12], strides = [1, 1]} : vector<32x12xf32> to vector<8x12xf32>
    %26 = vector.extract_strided_slice %23 {offsets = [16, 0], sizes = [8, 12], strides = [1, 1]} : vector<32x12xf32> to vector<8x12xf32>
    %27 = vector.extract_strided_slice %23 {offsets = [24, 0], sizes = [8, 12], strides = [1, 1]} : vector<32x12xf32> to vector<8x12xf32>
    %28 = tpu.concatenate %24, %25, %26, %27 in 1 : vector<8x12xf32>, vector<8x12xf32>, vector<8x12xf32>, vector<8x12xf32> -> vector<8x48xf32>
    %cst_12 = arith.constant dense<0.000000e+00> : vector<12x384xf32>
    %29 = tpu.matmul %22, %10, %cst_12 {dimension_numbers = #tpu.dot_dimension_numbers<[1], [0], [0], [1], [0, 0, 1, 1], [], []>} : vector<12x32xbf16>, vector<32x384xbf16>, vector<12x384xf32> -> vector<12x384xf32>
    %c0_13 = arith.constant 0 : index
    %c0_14 = arith.constant 0 : index
    %30 = vector.load %arg8[%c0_13, %c0_14] : memref<32x48xf32, #tpu.memory_space<vmem>>, vector<32x48xf32>
    %31 = arith.truncf %30 : vector<32x48xf32> to vector<32x48xbf16>
    %cst_15 = arith.constant dense<0.000000e+00> : vector<12x48xf32>
    %32 = tpu.matmul %22, %31, %cst_15 {dimension_numbers = #tpu.dot_dimension_numbers<[1], [0], [0], [1], [0, 0, 1, 1], [], []>} : vector<12x32xbf16>, vector<32x48xbf16>, vector<12x48xf32> -> vector<12x48xf32>
    %c0_16 = arith.constant 0 : index
    %c0_17 = arith.constant 0 : index
    %33 = vector.load %arg7[%c0_16, %c0_17] : memref<8x48xf32, #tpu.memory_space<vmem>>, vector<8x48xf32>
    %34 = arith.mulf %33, %28 : vector<8x48xf32>
    %cst_18 = arith.constant dense<0.000000e+00> : vector<48xf32>
    %35 = vector.multi_reduction <add>, %34, %cst_18 [0] : vector<8x48xf32> to vector<48xf32>
    %36 = vector.shape_cast %35 : vector<48xf32> to vector<1x48xf32>
    %37 = vector.broadcast %36 : vector<1x48xf32> to vector<12x48xf32>
    %38 = arith.addf %32, %37 : vector<12x48xf32>
    %c0_19 = arith.constant 0 : index
    %c0_20 = arith.constant 0 : index
    %39 = vector.load %arg6[%c0_19, %c0_20] : memref<8x48xf32, #tpu.memory_space<vmem>>, vector<8x48xf32>
    %40 = vector.extract_strided_slice %29 {offsets = [0, 0], sizes = [12, 48], strides = [1, 1]} : vector<12x384xf32> to vector<12x48xf32>
    %41 = vector.extract_strided_slice %28 {offsets = [0, 0], sizes = [1, 48], strides = [1, 1]} : vector<8x48xf32> to vector<1x48xf32>
    %42 = vector.broadcast %41 : vector<1x48xf32> to vector<12x48xf32>
    %43 = arith.addf %40, %42 : vector<12x48xf32>
    %44 = vector.extract_strided_slice %39 {offsets = [0, 0], sizes = [1, 48], strides = [1, 1]} : vector<8x48xf32> to vector<1x48xf32>
    %45 = math.absf %43 : vector<12x48xf32>
    %46 = vector.broadcast %44 : vector<1x48xf32> to vector<12x48xf32>
    %47 = arith.mulf %46, %45 : vector<12x48xf32>
    %48 = vector.extract_strided_slice %29 {offsets = [0, 48], sizes = [12, 48], strides = [1, 1]} : vector<12x384xf32> to vector<12x48xf32>
    %49 = vector.extract_strided_slice %28 {offsets = [1, 0], sizes = [1, 48], strides = [1, 1]} : vector<8x48xf32> to vector<1x48xf32>
    %50 = vector.broadcast %49 : vector<1x48xf32> to vector<12x48xf32>
    %51 = arith.addf %48, %50 : vector<12x48xf32>
    %52 = vector.extract_strided_slice %39 {offsets = [1, 0], sizes = [1, 48], strides = [1, 1]} : vector<8x48xf32> to vector<1x48xf32>
    %53 = math.absf %51 : vector<12x48xf32>
    %54 = vector.broadcast %52 : vector<1x48xf32> to vector<12x48xf32>
    %55 = arith.mulf %54, %53 : vector<12x48xf32>
    %56 = arith.addf %47, %55 : vector<12x48xf32>
    %57 = vector.extract_strided_slice %29 {offsets = [0, 96], sizes = [12, 48], strides = [1, 1]} : vector<12x384xf32> to vector<12x48xf32>
    %58 = vector.extract_strided_slice %28 {offsets = [2, 0], sizes = [1, 48], strides = [1, 1]} : vector<8x48xf32> to vector<1x48xf32>
    %59 = vector.broadcast %58 : vector<1x48xf32> to vector<12x48xf32>
    %60 = arith.addf %57, %59 : vector<12x48xf32>
    %61 = vector.extract_strided_slice %39 {offsets = [2, 0], sizes = [1, 48], strides = [1, 1]} : vector<8x48xf32> to vector<1x48xf32>
    %62 = math.absf %60 : vector<12x48xf32>
    %63 = vector.broadcast %61 : vector<1x48xf32> to vector<12x48xf32>
    %64 = arith.mulf %63, %62 : vector<12x48xf32>
    %65 = arith.addf %56, %64 : vector<12x48xf32>
    %66 = vector.extract_strided_slice %29 {offsets = [0, 144], sizes = [12, 48], strides = [1, 1]} : vector<12x384xf32> to vector<12x48xf32>
    %67 = vector.extract_strided_slice %28 {offsets = [3, 0], sizes = [1, 48], strides = [1, 1]} : vector<8x48xf32> to vector<1x48xf32>
    %68 = vector.broadcast %67 : vector<1x48xf32> to vector<12x48xf32>
    %69 = arith.addf %66, %68 : vector<12x48xf32>
    %70 = vector.extract_strided_slice %39 {offsets = [3, 0], sizes = [1, 48], strides = [1, 1]} : vector<8x48xf32> to vector<1x48xf32>
    %71 = math.absf %69 : vector<12x48xf32>
    %72 = vector.broadcast %70 : vector<1x48xf32> to vector<12x48xf32>
    %73 = arith.mulf %72, %71 : vector<12x48xf32>
    %74 = arith.addf %65, %73 : vector<12x48xf32>
    %75 = vector.extract_strided_slice %29 {offsets = [0, 192], sizes = [12, 48], strides = [1, 1]} : vector<12x384xf32> to vector<12x48xf32>
    %76 = vector.extract_strided_slice %28 {offsets = [4, 0], sizes = [1, 48], strides = [1, 1]} : vector<8x48xf32> to vector<1x48xf32>
    %77 = vector.broadcast %76 : vector<1x48xf32> to vector<12x48xf32>
    %78 = arith.addf %75, %77 : vector<12x48xf32>
    %79 = vector.extract_strided_slice %39 {offsets = [4, 0], sizes = [1, 48], strides = [1, 1]} : vector<8x48xf32> to vector<1x48xf32>
    %80 = math.absf %78 : vector<12x48xf32>
    %81 = vector.broadcast %79 : vector<1x48xf32> to vector<12x48xf32>
    %82 = arith.mulf %81, %80 : vector<12x48xf32>
    %83 = arith.addf %74, %82 : vector<12x48xf32>
    %84 = vector.extract_strided_slice %29 {offsets = [0, 240], sizes = [12, 48], strides = [1, 1]} : vector<12x384xf32> to vector<12x48xf32>
    %85 = vector.extract_strided_slice %28 {offsets = [5, 0], sizes = [1, 48], strides = [1, 1]} : vector<8x48xf32> to vector<1x48xf32>
    %86 = vector.broadcast %85 : vector<1x48xf32> to vector<12x48xf32>
    %87 = arith.addf %84, %86 : vector<12x48xf32>
    %88 = vector.extract_strided_slice %39 {offsets = [5, 0], sizes = [1, 48], strides = [1, 1]} : vector<8x48xf32> to vector<1x48xf32>
    %89 = math.absf %87 : vector<12x48xf32>
    %90 = vector.broadcast %88 : vector<1x48xf32> to vector<12x48xf32>
    %91 = arith.mulf %90, %89 : vector<12x48xf32>
    %92 = arith.addf %83, %91 : vector<12x48xf32>
    %93 = vector.extract_strided_slice %29 {offsets = [0, 288], sizes = [12, 48], strides = [1, 1]} : vector<12x384xf32> to vector<12x48xf32>
    %94 = vector.extract_strided_slice %28 {offsets = [6, 0], sizes = [1, 48], strides = [1, 1]} : vector<8x48xf32> to vector<1x48xf32>
    %95 = vector.broadcast %94 : vector<1x48xf32> to vector<12x48xf32>
    %96 = arith.addf %93, %95 : vector<12x48xf32>
    %97 = vector.extract_strided_slice %39 {offsets = [6, 0], sizes = [1, 48], strides = [1, 1]} : vector<8x48xf32> to vector<1x48xf32>
    %98 = math.absf %96 : vector<12x48xf32>
    %99 = vector.broadcast %97 : vector<1x48xf32> to vector<12x48xf32>
    %100 = arith.mulf %99, %98 : vector<12x48xf32>
    %101 = arith.addf %92, %100 : vector<12x48xf32>
    %102 = vector.extract_strided_slice %29 {offsets = [0, 336], sizes = [12, 48], strides = [1, 1]} : vector<12x384xf32> to vector<12x48xf32>
    %103 = vector.extract_strided_slice %28 {offsets = [7, 0], sizes = [1, 48], strides = [1, 1]} : vector<8x48xf32> to vector<1x48xf32>
    %104 = vector.broadcast %103 : vector<1x48xf32> to vector<12x48xf32>
    %105 = arith.addf %102, %104 : vector<12x48xf32>
    %106 = vector.extract_strided_slice %39 {offsets = [7, 0], sizes = [1, 48], strides = [1, 1]} : vector<8x48xf32> to vector<1x48xf32>
    %107 = math.absf %105 : vector<12x48xf32>
    %108 = vector.broadcast %106 : vector<1x48xf32> to vector<12x48xf32>
    %109 = arith.mulf %108, %107 : vector<12x48xf32>
    %110 = arith.addf %101, %109 : vector<12x48xf32>
    %111 = arith.addf %38, %110 : vector<12x48xf32>
    %112 = arith.addf %111, %8 : vector<12x48xf32>
    %113 = vector.extract_strided_slice %112 {offsets = [0, 0], sizes = [12, 12], strides = [1, 1]} : vector<12x48xf32> to vector<12x12xf32>
    %cst_21 = arith.constant dense<0xFF800000> : vector<12xf32>
    %114 = vector.multi_reduction <maximumf>, %113, %cst_21 [1] : vector<12x12xf32> to vector<12xf32>
    %115 = vector.shape_cast %114 : vector<12xf32> to vector<12x1xf32>
    %116 = vector.broadcast %115 : vector<12x1xf32> to vector<12x12xf32>
    %117 = arith.subf %113, %116 : vector<12x12xf32>
    %118 = math.exp %117 : vector<12x12xf32>
    %cst_22 = arith.constant dense<0.000000e+00> : vector<12xf32>
    %119 = vector.multi_reduction <add>, %118, %cst_22 [1] : vector<12x12xf32> to vector<12xf32>
    %120 = vector.shape_cast %119 : vector<12xf32> to vector<12x1xf32>
    %121 = tpu.reciprocal %120 {approx = true} : vector<12x1xf32> -> vector<12x1xf32>
    %122 = vector.broadcast %121 : vector<12x1xf32> to vector<12x12xf32>
    %123 = arith.mulf %118, %122 : vector<12x12xf32>
    %124 = arith.truncf %123 : vector<12x12xf32> to vector<12x12xbf16>
    %125 = vector.extract_strided_slice %21 {offsets = [0, 0], sizes = [12, 8], strides = [1, 1]} : vector<12x32xbf16> to vector<12x8xbf16>
    %cst_23 = arith.constant dense<0.000000e+00> : vector<12x8xf32>
    %126 = tpu.matmul %124, %125, %cst_23 {dimension_numbers = #tpu.dot_dimension_numbers<[1], [0], [0], [1], [0, 0, 1, 1], [], []>} : vector<12x12xbf16>, vector<12x8xbf16>, vector<12x8xf32> -> vector<12x8xf32>
    %127 = vector.extract_strided_slice %112 {offsets = [0, 12], sizes = [12, 12], strides = [1, 1]} : vector<12x48xf32> to vector<12x12xf32>
    %cst_24 = arith.constant dense<0xFF800000> : vector<12xf32>
    %128 = vector.multi_reduction <maximumf>, %127, %cst_24 [1] : vector<12x12xf32> to vector<12xf32>
    %129 = vector.shape_cast %128 : vector<12xf32> to vector<12x1xf32>
    %130 = vector.broadcast %129 : vector<12x1xf32> to vector<12x12xf32>
    %131 = arith.subf %127, %130 : vector<12x12xf32>
    %132 = math.exp %131 : vector<12x12xf32>
    %cst_25 = arith.constant dense<0.000000e+00> : vector<12xf32>
    %133 = vector.multi_reduction <add>, %132, %cst_25 [1] : vector<12x12xf32> to vector<12xf32>
    %134 = vector.shape_cast %133 : vector<12xf32> to vector<12x1xf32>
    %135 = tpu.reciprocal %134 {approx = true} : vector<12x1xf32> -> vector<12x1xf32>
    %136 = vector.broadcast %135 : vector<12x1xf32> to vector<12x12xf32>
    %137 = arith.mulf %132, %136 : vector<12x12xf32>
    %138 = arith.truncf %137 : vector<12x12xf32> to vector<12x12xbf16>
    %139 = vector.extract_strided_slice %21 {offsets = [0, 8], sizes = [12, 8], strides = [1, 1]} : vector<12x32xbf16> to vector<12x8xbf16>
    %cst_26 = arith.constant dense<0.000000e+00> : vector<12x8xf32>
    %140 = tpu.matmul %138, %139, %cst_26 {dimension_numbers = #tpu.dot_dimension_numbers<[1], [0], [0], [1], [0, 0, 1, 1], [], []>} : vector<12x12xbf16>, vector<12x8xbf16>, vector<12x8xf32> -> vector<12x8xf32>
    %141 = vector.extract_strided_slice %112 {offsets = [0, 24], sizes = [12, 12], strides = [1, 1]} : vector<12x48xf32> to vector<12x12xf32>
    %cst_27 = arith.constant dense<0xFF800000> : vector<12xf32>
    %142 = vector.multi_reduction <maximumf>, %141, %cst_27 [1] : vector<12x12xf32> to vector<12xf32>
    %143 = vector.shape_cast %142 : vector<12xf32> to vector<12x1xf32>
    %144 = vector.broadcast %143 : vector<12x1xf32> to vector<12x12xf32>
    %145 = arith.subf %141, %144 : vector<12x12xf32>
    %146 = math.exp %145 : vector<12x12xf32>
    %cst_28 = arith.constant dense<0.000000e+00> : vector<12xf32>
    %147 = vector.multi_reduction <add>, %146, %cst_28 [1] : vector<12x12xf32> to vector<12xf32>
    %148 = vector.shape_cast %147 : vector<12xf32> to vector<12x1xf32>
    %149 = tpu.reciprocal %148 {approx = true} : vector<12x1xf32> -> vector<12x1xf32>
    %150 = vector.broadcast %149 : vector<12x1xf32> to vector<12x12xf32>
    %151 = arith.mulf %146, %150 : vector<12x12xf32>
    %152 = arith.truncf %151 : vector<12x12xf32> to vector<12x12xbf16>
    %153 = vector.extract_strided_slice %21 {offsets = [0, 16], sizes = [12, 8], strides = [1, 1]} : vector<12x32xbf16> to vector<12x8xbf16>
    %cst_29 = arith.constant dense<0.000000e+00> : vector<12x8xf32>
    %154 = tpu.matmul %152, %153, %cst_29 {dimension_numbers = #tpu.dot_dimension_numbers<[1], [0], [0], [1], [0, 0, 1, 1], [], []>} : vector<12x12xbf16>, vector<12x8xbf16>, vector<12x8xf32> -> vector<12x8xf32>
    %155 = vector.extract_strided_slice %112 {offsets = [0, 36], sizes = [12, 12], strides = [1, 1]} : vector<12x48xf32> to vector<12x12xf32>
    %cst_30 = arith.constant dense<0xFF800000> : vector<12xf32>
    %156 = vector.multi_reduction <maximumf>, %155, %cst_30 [1] : vector<12x12xf32> to vector<12xf32>
    %157 = vector.shape_cast %156 : vector<12xf32> to vector<12x1xf32>
    %158 = vector.broadcast %157 : vector<12x1xf32> to vector<12x12xf32>
    %159 = arith.subf %155, %158 : vector<12x12xf32>
    %160 = math.exp %159 : vector<12x12xf32>
    %cst_31 = arith.constant dense<0.000000e+00> : vector<12xf32>
    %161 = vector.multi_reduction <add>, %160, %cst_31 [1] : vector<12x12xf32> to vector<12xf32>
    %162 = vector.shape_cast %161 : vector<12xf32> to vector<12x1xf32>
    %163 = tpu.reciprocal %162 {approx = true} : vector<12x1xf32> -> vector<12x1xf32>
    %164 = vector.broadcast %163 : vector<12x1xf32> to vector<12x12xf32>
    %165 = arith.mulf %160, %164 : vector<12x12xf32>
    %166 = arith.truncf %165 : vector<12x12xf32> to vector<12x12xbf16>
    %167 = vector.extract_strided_slice %21 {offsets = [0, 24], sizes = [12, 8], strides = [1, 1]} : vector<12x32xbf16> to vector<12x8xbf16>
    %cst_32 = arith.constant dense<0.000000e+00> : vector<12x8xf32>
    %168 = tpu.matmul %166, %167, %cst_32 {dimension_numbers = #tpu.dot_dimension_numbers<[1], [0], [0], [1], [0, 0, 1, 1], [], []>} : vector<12x12xbf16>, vector<12x8xbf16>, vector<12x8xf32> -> vector<12x8xf32>
    %169 = tpu.concatenate %126, %140, %154, %168 in 1 : vector<12x8xf32>, vector<12x8xf32>, vector<12x8xf32>, vector<12x8xf32> -> vector<12x32xf32>
    %c0_33 = arith.constant 0 : index
    %c0_34 = arith.constant 0 : index
    %170 = vector.load %arg9[%c0_33, %c0_34] : memref<1x32xf32, #tpu.memory_space<vmem>>, vector<1x32xf32>
    %171 = vector.broadcast %170 : vector<1x32xf32> to vector<12x32xf32>
    %172 = arith.addf %169, %171 : vector<12x32xf32>
    %173 = arith.truncf %172 : vector<12x32xf32> to vector<12x32xbf16>
    %c0_35 = arith.constant 0 : index
    %c0_36 = arith.constant 0 : index
    %174 = vector.load %arg10[%c0_35, %c0_36] : memref<32x8xf32, #tpu.memory_space<vmem>>, vector<32x8xf32>
    %175 = arith.truncf %174 : vector<32x8xf32> to vector<32x8xbf16>
    %cst_37 = arith.constant dense<0.000000e+00> : vector<12x8xf32>
    %176 = tpu.matmul %173, %175, %cst_37 {dimension_numbers = #tpu.dot_dimension_numbers<[1], [0], [0], [1], [0, 0, 1, 1], [], []>} : vector<12x32xbf16>, vector<32x8xbf16>, vector<12x8xf32> -> vector<12x8xf32>
    %c0_38 = arith.constant 0 : index
    %c0_39 = arith.constant 0 : index
    %177 = vector.load %arg11[%c0_38, %c0_39] : memref<1x8xf32, #tpu.memory_space<vmem>>, vector<1x8xf32>
    %178 = vector.broadcast %177 : vector<1x8xf32> to vector<12x8xf32>
    %179 = arith.addf %176, %178 : vector<12x8xf32>
    %cst_40 = arith.constant 0.000000e+00 : f32
    %180 = vector.broadcast %cst_40 : f32 to vector<12x8xf32>
    %181 = arith.maximumf %179, %180 : vector<12x8xf32>
    %182 = arith.truncf %181 : vector<12x8xf32> to vector<12x8xbf16>
    %c0_41 = arith.constant 0 : index
    %c0_42 = arith.constant 0 : index
    %183 = vector.load %arg12[%c0_41, %c0_42] : memref<8x64xf32, #tpu.memory_space<vmem>>, vector<8x64xf32>
    %184 = arith.truncf %183 : vector<8x64xf32> to vector<8x64xbf16>
    %cst_43 = arith.constant dense<0.000000e+00> : vector<12x64xf32>
    %185 = tpu.matmul %182, %184, %cst_43 {dimension_numbers = #tpu.dot_dimension_numbers<[1], [0], [0], [1], [0, 0, 1, 1], [], []>} : vector<12x8xbf16>, vector<8x64xbf16>, vector<12x64xf32> -> vector<12x64xf32>
    %c0_44 = arith.constant 0 : index
    %c0_45 = arith.constant 0 : index
    %186 = vector.load %arg13[%c0_44, %c0_45] : memref<1x64xf32, #tpu.memory_space<vmem>>, vector<1x64xf32>
    %187 = vector.broadcast %186 : vector<1x64xf32> to vector<12x64xf32>
    %188 = arith.addf %185, %187 : vector<12x64xf32>
    %189 = vector.extract_strided_slice %188 {offsets = [0, 0], sizes = [12, 32], strides = [1, 1]} : vector<12x64xf32> to vector<12x32xf32>
    %190 = vector.extract_strided_slice %188 {offsets = [0, 32], sizes = [12, 32], strides = [1, 1]} : vector<12x64xf32> to vector<12x32xf32>
    %191 = arith.truncf %189 : vector<12x32xf32> to vector<12x32xbf16>
    %192 = arith.truncf %190 : vector<12x32xf32> to vector<12x32xbf16>
    %193 = tpu.transpose %189, [1, 0] : vector<12x32xf32> -> vector<32x12xf32>
    %194 = vector.extract_strided_slice %193 {offsets = [0, 0], sizes = [8, 12], strides = [1, 1]} : vector<32x12xf32> to vector<8x12xf32>
    %195 = vector.extract_strided_slice %193 {offsets = [8, 0], sizes = [8, 12], strides = [1, 1]} : vector<32x12xf32> to vector<8x12xf32>
    %196 = vector.extract_strided_slice %193 {offsets = [16, 0], sizes = [8, 12], strides = [1, 1]} : vector<32x12xf32> to vector<8x12xf32>
    %197 = vector.extract_strided_slice %193 {offsets = [24, 0], sizes = [8, 12], strides = [1, 1]} : vector<32x12xf32> to vector<8x12xf32>
    %198 = tpu.concatenate %194, %195, %196, %197 in 1 : vector<8x12xf32>, vector<8x12xf32>, vector<8x12xf32>, vector<8x12xf32> -> vector<8x48xf32>
    %cst_46 = arith.constant dense<0.000000e+00> : vector<12x384xf32>
    %199 = tpu.matmul %192, %10, %cst_46 {dimension_numbers = #tpu.dot_dimension_numbers<[1], [0], [0], [1], [0, 0, 1, 1], [], []>} : vector<12x32xbf16>, vector<32x384xbf16>, vector<12x384xf32> -> vector<12x384xf32>
    %c0_47 = arith.constant 0 : index
    %c0_48 = arith.constant 0 : index
    %200 = vector.load %arg16[%c0_47, %c0_48] : memref<32x48xf32, #tpu.memory_space<vmem>>, vector<32x48xf32>
    %201 = arith.truncf %200 : vector<32x48xf32> to vector<32x48xbf16>
    %cst_49 = arith.constant dense<0.000000e+00> : vector<12x48xf32>
    %202 = tpu.matmul %192, %201, %cst_49 {dimension_numbers = #tpu.dot_dimension_numbers<[1], [0], [0], [1], [0, 0, 1, 1], [], []>} : vector<12x32xbf16>, vector<32x48xbf16>, vector<12x48xf32> -> vector<12x48xf32>
    %c0_50 = arith.constant 0 : index
    %c0_51 = arith.constant 0 : index
    %203 = vector.load %arg15[%c0_50, %c0_51] : memref<8x48xf32, #tpu.memory_space<vmem>>, vector<8x48xf32>
    %204 = arith.mulf %203, %198 : vector<8x48xf32>
    %cst_52 = arith.constant dense<0.000000e+00> : vector<48xf32>
    %205 = vector.multi_reduction <add>, %204, %cst_52 [0] : vector<8x48xf32> to vector<48xf32>
    %206 = vector.shape_cast %205 : vector<48xf32> to vector<1x48xf32>
    %207 = vector.broadcast %206 : vector<1x48xf32> to vector<12x48xf32>
    %208 = arith.addf %202, %207 : vector<12x48xf32>
    %c0_53 = arith.constant 0 : index
    %c0_54 = arith.constant 0 : index
    %209 = vector.load %arg14[%c0_53, %c0_54] : memref<8x48xf32, #tpu.memory_space<vmem>>, vector<8x48xf32>
    %210 = vector.extract_strided_slice %199 {offsets = [0, 0], sizes = [12, 48], strides = [1, 1]} : vector<12x384xf32> to vector<12x48xf32>
    %211 = vector.extract_strided_slice %198 {offsets = [0, 0], sizes = [1, 48], strides = [1, 1]} : vector<8x48xf32> to vector<1x48xf32>
    %212 = vector.broadcast %211 : vector<1x48xf32> to vector<12x48xf32>
    %213 = arith.addf %210, %212 : vector<12x48xf32>
    %214 = vector.extract_strided_slice %209 {offsets = [0, 0], sizes = [1, 48], strides = [1, 1]} : vector<8x48xf32> to vector<1x48xf32>
    %215 = math.absf %213 : vector<12x48xf32>
    %216 = vector.broadcast %214 : vector<1x48xf32> to vector<12x48xf32>
    %217 = arith.mulf %216, %215 : vector<12x48xf32>
    %218 = vector.extract_strided_slice %199 {offsets = [0, 48], sizes = [12, 48], strides = [1, 1]} : vector<12x384xf32> to vector<12x48xf32>
    %219 = vector.extract_strided_slice %198 {offsets = [1, 0], sizes = [1, 48], strides = [1, 1]} : vector<8x48xf32> to vector<1x48xf32>
    %220 = vector.broadcast %219 : vector<1x48xf32> to vector<12x48xf32>
    %221 = arith.addf %218, %220 : vector<12x48xf32>
    %222 = vector.extract_strided_slice %209 {offsets = [1, 0], sizes = [1, 48], strides = [1, 1]} : vector<8x48xf32> to vector<1x48xf32>
    %223 = math.absf %221 : vector<12x48xf32>
    %224 = vector.broadcast %222 : vector<1x48xf32> to vector<12x48xf32>
    %225 = arith.mulf %224, %223 : vector<12x48xf32>
    %226 = arith.addf %217, %225 : vector<12x48xf32>
    %227 = vector.extract_strided_slice %199 {offsets = [0, 96], sizes = [12, 48], strides = [1, 1]} : vector<12x384xf32> to vector<12x48xf32>
    %228 = vector.extract_strided_slice %198 {offsets = [2, 0], sizes = [1, 48], strides = [1, 1]} : vector<8x48xf32> to vector<1x48xf32>
    %229 = vector.broadcast %228 : vector<1x48xf32> to vector<12x48xf32>
    %230 = arith.addf %227, %229 : vector<12x48xf32>
    %231 = vector.extract_strided_slice %209 {offsets = [2, 0], sizes = [1, 48], strides = [1, 1]} : vector<8x48xf32> to vector<1x48xf32>
    %232 = math.absf %230 : vector<12x48xf32>
    %233 = vector.broadcast %231 : vector<1x48xf32> to vector<12x48xf32>
    %234 = arith.mulf %233, %232 : vector<12x48xf32>
    %235 = arith.addf %226, %234 : vector<12x48xf32>
    %236 = vector.extract_strided_slice %199 {offsets = [0, 144], sizes = [12, 48], strides = [1, 1]} : vector<12x384xf32> to vector<12x48xf32>
    %237 = vector.extract_strided_slice %198 {offsets = [3, 0], sizes = [1, 48], strides = [1, 1]} : vector<8x48xf32> to vector<1x48xf32>
    %238 = vector.broadcast %237 : vector<1x48xf32> to vector<12x48xf32>
    %239 = arith.addf %236, %238 : vector<12x48xf32>
    %240 = vector.extract_strided_slice %209 {offsets = [3, 0], sizes = [1, 48], strides = [1, 1]} : vector<8x48xf32> to vector<1x48xf32>
    %241 = math.absf %239 : vector<12x48xf32>
    %242 = vector.broadcast %240 : vector<1x48xf32> to vector<12x48xf32>
    %243 = arith.mulf %242, %241 : vector<12x48xf32>
    %244 = arith.addf %235, %243 : vector<12x48xf32>
    %245 = vector.extract_strided_slice %199 {offsets = [0, 192], sizes = [12, 48], strides = [1, 1]} : vector<12x384xf32> to vector<12x48xf32>
    %246 = vector.extract_strided_slice %198 {offsets = [4, 0], sizes = [1, 48], strides = [1, 1]} : vector<8x48xf32> to vector<1x48xf32>
    %247 = vector.broadcast %246 : vector<1x48xf32> to vector<12x48xf32>
    %248 = arith.addf %245, %247 : vector<12x48xf32>
    %249 = vector.extract_strided_slice %209 {offsets = [4, 0], sizes = [1, 48], strides = [1, 1]} : vector<8x48xf32> to vector<1x48xf32>
    %250 = math.absf %248 : vector<12x48xf32>
    %251 = vector.broadcast %249 : vector<1x48xf32> to vector<12x48xf32>
    %252 = arith.mulf %251, %250 : vector<12x48xf32>
    %253 = arith.addf %244, %252 : vector<12x48xf32>
    %254 = vector.extract_strided_slice %199 {offsets = [0, 240], sizes = [12, 48], strides = [1, 1]} : vector<12x384xf32> to vector<12x48xf32>
    %255 = vector.extract_strided_slice %198 {offsets = [5, 0], sizes = [1, 48], strides = [1, 1]} : vector<8x48xf32> to vector<1x48xf32>
    %256 = vector.broadcast %255 : vector<1x48xf32> to vector<12x48xf32>
    %257 = arith.addf %254, %256 : vector<12x48xf32>
    %258 = vector.extract_strided_slice %209 {offsets = [5, 0], sizes = [1, 48], strides = [1, 1]} : vector<8x48xf32> to vector<1x48xf32>
    %259 = math.absf %257 : vector<12x48xf32>
    %260 = vector.broadcast %258 : vector<1x48xf32> to vector<12x48xf32>
    %261 = arith.mulf %260, %259 : vector<12x48xf32>
    %262 = arith.addf %253, %261 : vector<12x48xf32>
    %263 = vector.extract_strided_slice %199 {offsets = [0, 288], sizes = [12, 48], strides = [1, 1]} : vector<12x384xf32> to vector<12x48xf32>
    %264 = vector.extract_strided_slice %198 {offsets = [6, 0], sizes = [1, 48], strides = [1, 1]} : vector<8x48xf32> to vector<1x48xf32>
    %265 = vector.broadcast %264 : vector<1x48xf32> to vector<12x48xf32>
    %266 = arith.addf %263, %265 : vector<12x48xf32>
    %267 = vector.extract_strided_slice %209 {offsets = [6, 0], sizes = [1, 48], strides = [1, 1]} : vector<8x48xf32> to vector<1x48xf32>
    %268 = math.absf %266 : vector<12x48xf32>
    %269 = vector.broadcast %267 : vector<1x48xf32> to vector<12x48xf32>
    %270 = arith.mulf %269, %268 : vector<12x48xf32>
    %271 = arith.addf %262, %270 : vector<12x48xf32>
    %272 = vector.extract_strided_slice %199 {offsets = [0, 336], sizes = [12, 48], strides = [1, 1]} : vector<12x384xf32> to vector<12x48xf32>
    %273 = vector.extract_strided_slice %198 {offsets = [7, 0], sizes = [1, 48], strides = [1, 1]} : vector<8x48xf32> to vector<1x48xf32>
    %274 = vector.broadcast %273 : vector<1x48xf32> to vector<12x48xf32>
    %275 = arith.addf %272, %274 : vector<12x48xf32>
    %276 = vector.extract_strided_slice %209 {offsets = [7, 0], sizes = [1, 48], strides = [1, 1]} : vector<8x48xf32> to vector<1x48xf32>
    %277 = math.absf %275 : vector<12x48xf32>
    %278 = vector.broadcast %276 : vector<1x48xf32> to vector<12x48xf32>
    %279 = arith.mulf %278, %277 : vector<12x48xf32>
    %280 = arith.addf %271, %279 : vector<12x48xf32>
    %281 = arith.addf %208, %280 : vector<12x48xf32>
    %282 = arith.addf %281, %8 : vector<12x48xf32>
    %283 = vector.extract_strided_slice %282 {offsets = [0, 0], sizes = [12, 12], strides = [1, 1]} : vector<12x48xf32> to vector<12x12xf32>
    %cst_55 = arith.constant dense<0xFF800000> : vector<12xf32>
    %284 = vector.multi_reduction <maximumf>, %283, %cst_55 [1] : vector<12x12xf32> to vector<12xf32>
    %285 = vector.shape_cast %284 : vector<12xf32> to vector<12x1xf32>
    %286 = vector.broadcast %285 : vector<12x1xf32> to vector<12x12xf32>
    %287 = arith.subf %283, %286 : vector<12x12xf32>
    %288 = math.exp %287 : vector<12x12xf32>
    %cst_56 = arith.constant dense<0.000000e+00> : vector<12xf32>
    %289 = vector.multi_reduction <add>, %288, %cst_56 [1] : vector<12x12xf32> to vector<12xf32>
    %290 = vector.shape_cast %289 : vector<12xf32> to vector<12x1xf32>
    %291 = tpu.reciprocal %290 {approx = true} : vector<12x1xf32> -> vector<12x1xf32>
    %292 = vector.broadcast %291 : vector<12x1xf32> to vector<12x12xf32>
    %293 = arith.mulf %288, %292 : vector<12x12xf32>
    %294 = arith.truncf %293 : vector<12x12xf32> to vector<12x12xbf16>
    %295 = vector.extract_strided_slice %191 {offsets = [0, 0], sizes = [12, 8], strides = [1, 1]} : vector<12x32xbf16> to vector<12x8xbf16>
    %cst_57 = arith.constant dense<0.000000e+00> : vector<12x8xf32>
    %296 = tpu.matmul %294, %295, %cst_57 {dimension_numbers = #tpu.dot_dimension_numbers<[1], [0], [0], [1], [0, 0, 1, 1], [], []>} : vector<12x12xbf16>, vector<12x8xbf16>, vector<12x8xf32> -> vector<12x8xf32>
    %297 = vector.extract_strided_slice %282 {offsets = [0, 12], sizes = [12, 12], strides = [1, 1]} : vector<12x48xf32> to vector<12x12xf32>
    %cst_58 = arith.constant dense<0xFF800000> : vector<12xf32>
    %298 = vector.multi_reduction <maximumf>, %297, %cst_58 [1] : vector<12x12xf32> to vector<12xf32>
    %299 = vector.shape_cast %298 : vector<12xf32> to vector<12x1xf32>
    %300 = vector.broadcast %299 : vector<12x1xf32> to vector<12x12xf32>
    %301 = arith.subf %297, %300 : vector<12x12xf32>
    %302 = math.exp %301 : vector<12x12xf32>
    %cst_59 = arith.constant dense<0.000000e+00> : vector<12xf32>
    %303 = vector.multi_reduction <add>, %302, %cst_59 [1] : vector<12x12xf32> to vector<12xf32>
    %304 = vector.shape_cast %303 : vector<12xf32> to vector<12x1xf32>
    %305 = tpu.reciprocal %304 {approx = true} : vector<12x1xf32> -> vector<12x1xf32>
    %306 = vector.broadcast %305 : vector<12x1xf32> to vector<12x12xf32>
    %307 = arith.mulf %302, %306 : vector<12x12xf32>
    %308 = arith.truncf %307 : vector<12x12xf32> to vector<12x12xbf16>
    %309 = vector.extract_strided_slice %191 {offsets = [0, 8], sizes = [12, 8], strides = [1, 1]} : vector<12x32xbf16> to vector<12x8xbf16>
    %cst_60 = arith.constant dense<0.000000e+00> : vector<12x8xf32>
    %310 = tpu.matmul %308, %309, %cst_60 {dimension_numbers = #tpu.dot_dimension_numbers<[1], [0], [0], [1], [0, 0, 1, 1], [], []>} : vector<12x12xbf16>, vector<12x8xbf16>, vector<12x8xf32> -> vector<12x8xf32>
    %311 = vector.extract_strided_slice %282 {offsets = [0, 24], sizes = [12, 12], strides = [1, 1]} : vector<12x48xf32> to vector<12x12xf32>
    %cst_61 = arith.constant dense<0xFF800000> : vector<12xf32>
    %312 = vector.multi_reduction <maximumf>, %311, %cst_61 [1] : vector<12x12xf32> to vector<12xf32>
    %313 = vector.shape_cast %312 : vector<12xf32> to vector<12x1xf32>
    %314 = vector.broadcast %313 : vector<12x1xf32> to vector<12x12xf32>
    %315 = arith.subf %311, %314 : vector<12x12xf32>
    %316 = math.exp %315 : vector<12x12xf32>
    %cst_62 = arith.constant dense<0.000000e+00> : vector<12xf32>
    %317 = vector.multi_reduction <add>, %316, %cst_62 [1] : vector<12x12xf32> to vector<12xf32>
    %318 = vector.shape_cast %317 : vector<12xf32> to vector<12x1xf32>
    %319 = tpu.reciprocal %318 {approx = true} : vector<12x1xf32> -> vector<12x1xf32>
    %320 = vector.broadcast %319 : vector<12x1xf32> to vector<12x12xf32>
    %321 = arith.mulf %316, %320 : vector<12x12xf32>
    %322 = arith.truncf %321 : vector<12x12xf32> to vector<12x12xbf16>
    %323 = vector.extract_strided_slice %191 {offsets = [0, 16], sizes = [12, 8], strides = [1, 1]} : vector<12x32xbf16> to vector<12x8xbf16>
    %cst_63 = arith.constant dense<0.000000e+00> : vector<12x8xf32>
    %324 = tpu.matmul %322, %323, %cst_63 {dimension_numbers = #tpu.dot_dimension_numbers<[1], [0], [0], [1], [0, 0, 1, 1], [], []>} : vector<12x12xbf16>, vector<12x8xbf16>, vector<12x8xf32> -> vector<12x8xf32>
    %325 = vector.extract_strided_slice %282 {offsets = [0, 36], sizes = [12, 12], strides = [1, 1]} : vector<12x48xf32> to vector<12x12xf32>
    %cst_64 = arith.constant dense<0xFF800000> : vector<12xf32>
    %326 = vector.multi_reduction <maximumf>, %325, %cst_64 [1] : vector<12x12xf32> to vector<12xf32>
    %327 = vector.shape_cast %326 : vector<12xf32> to vector<12x1xf32>
    %328 = vector.broadcast %327 : vector<12x1xf32> to vector<12x12xf32>
    %329 = arith.subf %325, %328 : vector<12x12xf32>
    %330 = math.exp %329 : vector<12x12xf32>
    %cst_65 = arith.constant dense<0.000000e+00> : vector<12xf32>
    %331 = vector.multi_reduction <add>, %330, %cst_65 [1] : vector<12x12xf32> to vector<12xf32>
    %332 = vector.shape_cast %331 : vector<12xf32> to vector<12x1xf32>
    %333 = tpu.reciprocal %332 {approx = true} : vector<12x1xf32> -> vector<12x1xf32>
    %334 = vector.broadcast %333 : vector<12x1xf32> to vector<12x12xf32>
    %335 = arith.mulf %330, %334 : vector<12x12xf32>
    %336 = arith.truncf %335 : vector<12x12xf32> to vector<12x12xbf16>
    %337 = vector.extract_strided_slice %191 {offsets = [0, 24], sizes = [12, 8], strides = [1, 1]} : vector<12x32xbf16> to vector<12x8xbf16>
    %cst_66 = arith.constant dense<0.000000e+00> : vector<12x8xf32>
    %338 = tpu.matmul %336, %337, %cst_66 {dimension_numbers = #tpu.dot_dimension_numbers<[1], [0], [0], [1], [0, 0, 1, 1], [], []>} : vector<12x12xbf16>, vector<12x8xbf16>, vector<12x8xf32> -> vector<12x8xf32>
    %339 = tpu.concatenate %296, %310, %324, %338 in 1 : vector<12x8xf32>, vector<12x8xf32>, vector<12x8xf32>, vector<12x8xf32> -> vector<12x32xf32>
    %c0_67 = arith.constant 0 : index
    %c0_68 = arith.constant 0 : index
    %340 = vector.load %arg17[%c0_67, %c0_68] : memref<1x32xf32, #tpu.memory_space<vmem>>, vector<1x32xf32>
    %341 = vector.broadcast %340 : vector<1x32xf32> to vector<12x32xf32>
    %342 = arith.addf %339, %341 : vector<12x32xf32>
    %343 = arith.truncf %342 : vector<12x32xf32> to vector<12x32xbf16>
    %c0_69 = arith.constant 0 : index
    %c0_70 = arith.constant 0 : index
    %344 = vector.load %arg18[%c0_69, %c0_70] : memref<32x8xf32, #tpu.memory_space<vmem>>, vector<32x8xf32>
    %345 = arith.truncf %344 : vector<32x8xf32> to vector<32x8xbf16>
    %cst_71 = arith.constant dense<0.000000e+00> : vector<12x8xf32>
    %346 = tpu.matmul %343, %345, %cst_71 {dimension_numbers = #tpu.dot_dimension_numbers<[1], [0], [0], [1], [0, 0, 1, 1], [], []>} : vector<12x32xbf16>, vector<32x8xbf16>, vector<12x8xf32> -> vector<12x8xf32>
    %c0_72 = arith.constant 0 : index
    %c0_73 = arith.constant 0 : index
    %347 = vector.load %arg19[%c0_72, %c0_73] : memref<1x8xf32, #tpu.memory_space<vmem>>, vector<1x8xf32>
    %348 = vector.broadcast %347 : vector<1x8xf32> to vector<12x8xf32>
    %349 = arith.addf %346, %348 : vector<12x8xf32>
    %cst_74 = arith.constant 0.000000e+00 : f32
    %350 = vector.broadcast %cst_74 : f32 to vector<12x8xf32>
    %351 = arith.maximumf %349, %350 : vector<12x8xf32>
    %352 = arith.truncf %351 : vector<12x8xf32> to vector<12x8xbf16>
    %c0_75 = arith.constant 0 : index
    %c0_76 = arith.constant 0 : index
    %353 = vector.load %arg20[%c0_75, %c0_76] : memref<8x64xf32, #tpu.memory_space<vmem>>, vector<8x64xf32>
    %354 = arith.truncf %353 : vector<8x64xf32> to vector<8x64xbf16>
    %cst_77 = arith.constant dense<0.000000e+00> : vector<12x64xf32>
    %355 = tpu.matmul %352, %354, %cst_77 {dimension_numbers = #tpu.dot_dimension_numbers<[1], [0], [0], [1], [0, 0, 1, 1], [], []>} : vector<12x8xbf16>, vector<8x64xbf16>, vector<12x64xf32> -> vector<12x64xf32>
    %c0_78 = arith.constant 0 : index
    %c0_79 = arith.constant 0 : index
    %356 = vector.load %arg21[%c0_78, %c0_79] : memref<1x64xf32, #tpu.memory_space<vmem>>, vector<1x64xf32>
    %357 = vector.broadcast %356 : vector<1x64xf32> to vector<12x64xf32>
    %358 = arith.addf %355, %357 : vector<12x64xf32>
    %359 = vector.extract_strided_slice %358 {offsets = [0, 0], sizes = [12, 32], strides = [1, 1]} : vector<12x64xf32> to vector<12x32xf32>
    %360 = vector.extract_strided_slice %358 {offsets = [0, 32], sizes = [12, 32], strides = [1, 1]} : vector<12x64xf32> to vector<12x32xf32>
    %361 = arith.truncf %359 : vector<12x32xf32> to vector<12x32xbf16>
    %362 = arith.truncf %360 : vector<12x32xf32> to vector<12x32xbf16>
    %363 = tpu.transpose %359, [1, 0] : vector<12x32xf32> -> vector<32x12xf32>
    %364 = vector.extract_strided_slice %363 {offsets = [0, 0], sizes = [8, 12], strides = [1, 1]} : vector<32x12xf32> to vector<8x12xf32>
    %365 = vector.extract_strided_slice %363 {offsets = [8, 0], sizes = [8, 12], strides = [1, 1]} : vector<32x12xf32> to vector<8x12xf32>
    %366 = vector.extract_strided_slice %363 {offsets = [16, 0], sizes = [8, 12], strides = [1, 1]} : vector<32x12xf32> to vector<8x12xf32>
    %367 = vector.extract_strided_slice %363 {offsets = [24, 0], sizes = [8, 12], strides = [1, 1]} : vector<32x12xf32> to vector<8x12xf32>
    %368 = tpu.concatenate %364, %365, %366, %367 in 1 : vector<8x12xf32>, vector<8x12xf32>, vector<8x12xf32>, vector<8x12xf32> -> vector<8x48xf32>
    %cst_80 = arith.constant dense<0.000000e+00> : vector<12x384xf32>
    %369 = tpu.matmul %362, %10, %cst_80 {dimension_numbers = #tpu.dot_dimension_numbers<[1], [0], [0], [1], [0, 0, 1, 1], [], []>} : vector<12x32xbf16>, vector<32x384xbf16>, vector<12x384xf32> -> vector<12x384xf32>
    %c0_81 = arith.constant 0 : index
    %c0_82 = arith.constant 0 : index
    %370 = vector.load %arg24[%c0_81, %c0_82] : memref<32x48xf32, #tpu.memory_space<vmem>>, vector<32x48xf32>
    %371 = arith.truncf %370 : vector<32x48xf32> to vector<32x48xbf16>
    %cst_83 = arith.constant dense<0.000000e+00> : vector<12x48xf32>
    %372 = tpu.matmul %362, %371, %cst_83 {dimension_numbers = #tpu.dot_dimension_numbers<[1], [0], [0], [1], [0, 0, 1, 1], [], []>} : vector<12x32xbf16>, vector<32x48xbf16>, vector<12x48xf32> -> vector<12x48xf32>
    %c0_84 = arith.constant 0 : index
    %c0_85 = arith.constant 0 : index
    %373 = vector.load %arg23[%c0_84, %c0_85] : memref<8x48xf32, #tpu.memory_space<vmem>>, vector<8x48xf32>
    %374 = arith.mulf %373, %368 : vector<8x48xf32>
    %cst_86 = arith.constant dense<0.000000e+00> : vector<48xf32>
    %375 = vector.multi_reduction <add>, %374, %cst_86 [0] : vector<8x48xf32> to vector<48xf32>
    %376 = vector.shape_cast %375 : vector<48xf32> to vector<1x48xf32>
    %377 = vector.broadcast %376 : vector<1x48xf32> to vector<12x48xf32>
    %378 = arith.addf %372, %377 : vector<12x48xf32>
    %c0_87 = arith.constant 0 : index
    %c0_88 = arith.constant 0 : index
    %379 = vector.load %arg22[%c0_87, %c0_88] : memref<8x48xf32, #tpu.memory_space<vmem>>, vector<8x48xf32>
    %380 = vector.extract_strided_slice %369 {offsets = [0, 0], sizes = [12, 48], strides = [1, 1]} : vector<12x384xf32> to vector<12x48xf32>
    %381 = vector.extract_strided_slice %368 {offsets = [0, 0], sizes = [1, 48], strides = [1, 1]} : vector<8x48xf32> to vector<1x48xf32>
    %382 = vector.broadcast %381 : vector<1x48xf32> to vector<12x48xf32>
    %383 = arith.addf %380, %382 : vector<12x48xf32>
    %384 = vector.extract_strided_slice %379 {offsets = [0, 0], sizes = [1, 48], strides = [1, 1]} : vector<8x48xf32> to vector<1x48xf32>
    %385 = math.absf %383 : vector<12x48xf32>
    %386 = vector.broadcast %384 : vector<1x48xf32> to vector<12x48xf32>
    %387 = arith.mulf %386, %385 : vector<12x48xf32>
    %388 = vector.extract_strided_slice %369 {offsets = [0, 48], sizes = [12, 48], strides = [1, 1]} : vector<12x384xf32> to vector<12x48xf32>
    %389 = vector.extract_strided_slice %368 {offsets = [1, 0], sizes = [1, 48], strides = [1, 1]} : vector<8x48xf32> to vector<1x48xf32>
    %390 = vector.broadcast %389 : vector<1x48xf32> to vector<12x48xf32>
    %391 = arith.addf %388, %390 : vector<12x48xf32>
    %392 = vector.extract_strided_slice %379 {offsets = [1, 0], sizes = [1, 48], strides = [1, 1]} : vector<8x48xf32> to vector<1x48xf32>
    %393 = math.absf %391 : vector<12x48xf32>
    %394 = vector.broadcast %392 : vector<1x48xf32> to vector<12x48xf32>
    %395 = arith.mulf %394, %393 : vector<12x48xf32>
    %396 = arith.addf %387, %395 : vector<12x48xf32>
    %397 = vector.extract_strided_slice %369 {offsets = [0, 96], sizes = [12, 48], strides = [1, 1]} : vector<12x384xf32> to vector<12x48xf32>
    %398 = vector.extract_strided_slice %368 {offsets = [2, 0], sizes = [1, 48], strides = [1, 1]} : vector<8x48xf32> to vector<1x48xf32>
    %399 = vector.broadcast %398 : vector<1x48xf32> to vector<12x48xf32>
    %400 = arith.addf %397, %399 : vector<12x48xf32>
    %401 = vector.extract_strided_slice %379 {offsets = [2, 0], sizes = [1, 48], strides = [1, 1]} : vector<8x48xf32> to vector<1x48xf32>
    %402 = math.absf %400 : vector<12x48xf32>
    %403 = vector.broadcast %401 : vector<1x48xf32> to vector<12x48xf32>
    %404 = arith.mulf %403, %402 : vector<12x48xf32>
    %405 = arith.addf %396, %404 : vector<12x48xf32>
    %406 = vector.extract_strided_slice %369 {offsets = [0, 144], sizes = [12, 48], strides = [1, 1]} : vector<12x384xf32> to vector<12x48xf32>
    %407 = vector.extract_strided_slice %368 {offsets = [3, 0], sizes = [1, 48], strides = [1, 1]} : vector<8x48xf32> to vector<1x48xf32>
    %408 = vector.broadcast %407 : vector<1x48xf32> to vector<12x48xf32>
    %409 = arith.addf %406, %408 : vector<12x48xf32>
    %410 = vector.extract_strided_slice %379 {offsets = [3, 0], sizes = [1, 48], strides = [1, 1]} : vector<8x48xf32> to vector<1x48xf32>
    %411 = math.absf %409 : vector<12x48xf32>
    %412 = vector.broadcast %410 : vector<1x48xf32> to vector<12x48xf32>
    %413 = arith.mulf %412, %411 : vector<12x48xf32>
    %414 = arith.addf %405, %413 : vector<12x48xf32>
    %415 = vector.extract_strided_slice %369 {offsets = [0, 192], sizes = [12, 48], strides = [1, 1]} : vector<12x384xf32> to vector<12x48xf32>
    %416 = vector.extract_strided_slice %368 {offsets = [4, 0], sizes = [1, 48], strides = [1, 1]} : vector<8x48xf32> to vector<1x48xf32>
    %417 = vector.broadcast %416 : vector<1x48xf32> to vector<12x48xf32>
    %418 = arith.addf %415, %417 : vector<12x48xf32>
    %419 = vector.extract_strided_slice %379 {offsets = [4, 0], sizes = [1, 48], strides = [1, 1]} : vector<8x48xf32> to vector<1x48xf32>
    %420 = math.absf %418 : vector<12x48xf32>
    %421 = vector.broadcast %419 : vector<1x48xf32> to vector<12x48xf32>
    %422 = arith.mulf %421, %420 : vector<12x48xf32>
    %423 = arith.addf %414, %422 : vector<12x48xf32>
    %424 = vector.extract_strided_slice %369 {offsets = [0, 240], sizes = [12, 48], strides = [1, 1]} : vector<12x384xf32> to vector<12x48xf32>
    %425 = vector.extract_strided_slice %368 {offsets = [5, 0], sizes = [1, 48], strides = [1, 1]} : vector<8x48xf32> to vector<1x48xf32>
    %426 = vector.broadcast %425 : vector<1x48xf32> to vector<12x48xf32>
    %427 = arith.addf %424, %426 : vector<12x48xf32>
    %428 = vector.extract_strided_slice %379 {offsets = [5, 0], sizes = [1, 48], strides = [1, 1]} : vector<8x48xf32> to vector<1x48xf32>
    %429 = math.absf %427 : vector<12x48xf32>
    %430 = vector.broadcast %428 : vector<1x48xf32> to vector<12x48xf32>
    %431 = arith.mulf %430, %429 : vector<12x48xf32>
    %432 = arith.addf %423, %431 : vector<12x48xf32>
    %433 = vector.extract_strided_slice %369 {offsets = [0, 288], sizes = [12, 48], strides = [1, 1]} : vector<12x384xf32> to vector<12x48xf32>
    %434 = vector.extract_strided_slice %368 {offsets = [6, 0], sizes = [1, 48], strides = [1, 1]} : vector<8x48xf32> to vector<1x48xf32>
    %435 = vector.broadcast %434 : vector<1x48xf32> to vector<12x48xf32>
    %436 = arith.addf %433, %435 : vector<12x48xf32>
    %437 = vector.extract_strided_slice %379 {offsets = [6, 0], sizes = [1, 48], strides = [1, 1]} : vector<8x48xf32> to vector<1x48xf32>
    %438 = math.absf %436 : vector<12x48xf32>
    %439 = vector.broadcast %437 : vector<1x48xf32> to vector<12x48xf32>
    %440 = arith.mulf %439, %438 : vector<12x48xf32>
    %441 = arith.addf %432, %440 : vector<12x48xf32>
    %442 = vector.extract_strided_slice %369 {offsets = [0, 336], sizes = [12, 48], strides = [1, 1]} : vector<12x384xf32> to vector<12x48xf32>
    %443 = vector.extract_strided_slice %368 {offsets = [7, 0], sizes = [1, 48], strides = [1, 1]} : vector<8x48xf32> to vector<1x48xf32>
    %444 = vector.broadcast %443 : vector<1x48xf32> to vector<12x48xf32>
    %445 = arith.addf %442, %444 : vector<12x48xf32>
    %446 = vector.extract_strided_slice %379 {offsets = [7, 0], sizes = [1, 48], strides = [1, 1]} : vector<8x48xf32> to vector<1x48xf32>
    %447 = math.absf %445 : vector<12x48xf32>
    %448 = vector.broadcast %446 : vector<1x48xf32> to vector<12x48xf32>
    %449 = arith.mulf %448, %447 : vector<12x48xf32>
    %450 = arith.addf %441, %449 : vector<12x48xf32>
    %451 = arith.addf %378, %450 : vector<12x48xf32>
    %452 = arith.addf %451, %8 : vector<12x48xf32>
    %453 = vector.extract_strided_slice %452 {offsets = [0, 0], sizes = [12, 12], strides = [1, 1]} : vector<12x48xf32> to vector<12x12xf32>
    %cst_89 = arith.constant dense<0xFF800000> : vector<12xf32>
    %454 = vector.multi_reduction <maximumf>, %453, %cst_89 [1] : vector<12x12xf32> to vector<12xf32>
    %455 = vector.shape_cast %454 : vector<12xf32> to vector<12x1xf32>
    %456 = vector.broadcast %455 : vector<12x1xf32> to vector<12x12xf32>
    %457 = arith.subf %453, %456 : vector<12x12xf32>
    %458 = math.exp %457 : vector<12x12xf32>
    %cst_90 = arith.constant dense<0.000000e+00> : vector<12xf32>
    %459 = vector.multi_reduction <add>, %458, %cst_90 [1] : vector<12x12xf32> to vector<12xf32>
    %460 = vector.shape_cast %459 : vector<12xf32> to vector<12x1xf32>
    %461 = tpu.reciprocal %460 {approx = true} : vector<12x1xf32> -> vector<12x1xf32>
    %462 = vector.broadcast %461 : vector<12x1xf32> to vector<12x12xf32>
    %463 = arith.mulf %458, %462 : vector<12x12xf32>
    %464 = arith.truncf %463 : vector<12x12xf32> to vector<12x12xbf16>
    %465 = vector.extract_strided_slice %361 {offsets = [0, 0], sizes = [12, 8], strides = [1, 1]} : vector<12x32xbf16> to vector<12x8xbf16>
    %cst_91 = arith.constant dense<0.000000e+00> : vector<12x8xf32>
    %466 = tpu.matmul %464, %465, %cst_91 {dimension_numbers = #tpu.dot_dimension_numbers<[1], [0], [0], [1], [0, 0, 1, 1], [], []>} : vector<12x12xbf16>, vector<12x8xbf16>, vector<12x8xf32> -> vector<12x8xf32>
    %467 = vector.extract_strided_slice %452 {offsets = [0, 12], sizes = [12, 12], strides = [1, 1]} : vector<12x48xf32> to vector<12x12xf32>
    %cst_92 = arith.constant dense<0xFF800000> : vector<12xf32>
    %468 = vector.multi_reduction <maximumf>, %467, %cst_92 [1] : vector<12x12xf32> to vector<12xf32>
    %469 = vector.shape_cast %468 : vector<12xf32> to vector<12x1xf32>
    %470 = vector.broadcast %469 : vector<12x1xf32> to vector<12x12xf32>
    %471 = arith.subf %467, %470 : vector<12x12xf32>
    %472 = math.exp %471 : vector<12x12xf32>
    %cst_93 = arith.constant dense<0.000000e+00> : vector<12xf32>
    %473 = vector.multi_reduction <add>, %472, %cst_93 [1] : vector<12x12xf32> to vector<12xf32>
    %474 = vector.shape_cast %473 : vector<12xf32> to vector<12x1xf32>
    %475 = tpu.reciprocal %474 {approx = true} : vector<12x1xf32> -> vector<12x1xf32>
    %476 = vector.broadcast %475 : vector<12x1xf32> to vector<12x12xf32>
    %477 = arith.mulf %472, %476 : vector<12x12xf32>
    %478 = arith.truncf %477 : vector<12x12xf32> to vector<12x12xbf16>
    %479 = vector.extract_strided_slice %361 {offsets = [0, 8], sizes = [12, 8], strides = [1, 1]} : vector<12x32xbf16> to vector<12x8xbf16>
    %cst_94 = arith.constant dense<0.000000e+00> : vector<12x8xf32>
    %480 = tpu.matmul %478, %479, %cst_94 {dimension_numbers = #tpu.dot_dimension_numbers<[1], [0], [0], [1], [0, 0, 1, 1], [], []>} : vector<12x12xbf16>, vector<12x8xbf16>, vector<12x8xf32> -> vector<12x8xf32>
    %481 = vector.extract_strided_slice %452 {offsets = [0, 24], sizes = [12, 12], strides = [1, 1]} : vector<12x48xf32> to vector<12x12xf32>
    %cst_95 = arith.constant dense<0xFF800000> : vector<12xf32>
    %482 = vector.multi_reduction <maximumf>, %481, %cst_95 [1] : vector<12x12xf32> to vector<12xf32>
    %483 = vector.shape_cast %482 : vector<12xf32> to vector<12x1xf32>
    %484 = vector.broadcast %483 : vector<12x1xf32> to vector<12x12xf32>
    %485 = arith.subf %481, %484 : vector<12x12xf32>
    %486 = math.exp %485 : vector<12x12xf32>
    %cst_96 = arith.constant dense<0.000000e+00> : vector<12xf32>
    %487 = vector.multi_reduction <add>, %486, %cst_96 [1] : vector<12x12xf32> to vector<12xf32>
    %488 = vector.shape_cast %487 : vector<12xf32> to vector<12x1xf32>
    %489 = tpu.reciprocal %488 {approx = true} : vector<12x1xf32> -> vector<12x1xf32>
    %490 = vector.broadcast %489 : vector<12x1xf32> to vector<12x12xf32>
    %491 = arith.mulf %486, %490 : vector<12x12xf32>
    %492 = arith.truncf %491 : vector<12x12xf32> to vector<12x12xbf16>
    %493 = vector.extract_strided_slice %361 {offsets = [0, 16], sizes = [12, 8], strides = [1, 1]} : vector<12x32xbf16> to vector<12x8xbf16>
    %cst_97 = arith.constant dense<0.000000e+00> : vector<12x8xf32>
    %494 = tpu.matmul %492, %493, %cst_97 {dimension_numbers = #tpu.dot_dimension_numbers<[1], [0], [0], [1], [0, 0, 1, 1], [], []>} : vector<12x12xbf16>, vector<12x8xbf16>, vector<12x8xf32> -> vector<12x8xf32>
    %495 = vector.extract_strided_slice %452 {offsets = [0, 36], sizes = [12, 12], strides = [1, 1]} : vector<12x48xf32> to vector<12x12xf32>
    %cst_98 = arith.constant dense<0xFF800000> : vector<12xf32>
    %496 = vector.multi_reduction <maximumf>, %495, %cst_98 [1] : vector<12x12xf32> to vector<12xf32>
    %497 = vector.shape_cast %496 : vector<12xf32> to vector<12x1xf32>
    %498 = vector.broadcast %497 : vector<12x1xf32> to vector<12x12xf32>
    %499 = arith.subf %495, %498 : vector<12x12xf32>
    %500 = math.exp %499 : vector<12x12xf32>
    %cst_99 = arith.constant dense<0.000000e+00> : vector<12xf32>
    %501 = vector.multi_reduction <add>, %500, %cst_99 [1] : vector<12x12xf32> to vector<12xf32>
    %502 = vector.shape_cast %501 : vector<12xf32> to vector<12x1xf32>
    %503 = tpu.reciprocal %502 {approx = true} : vector<12x1xf32> -> vector<12x1xf32>
    %504 = vector.broadcast %503 : vector<12x1xf32> to vector<12x12xf32>
    %505 = arith.mulf %500, %504 : vector<12x12xf32>
    %506 = arith.truncf %505 : vector<12x12xf32> to vector<12x12xbf16>
    %507 = vector.extract_strided_slice %361 {offsets = [0, 24], sizes = [12, 8], strides = [1, 1]} : vector<12x32xbf16> to vector<12x8xbf16>
    %cst_100 = arith.constant dense<0.000000e+00> : vector<12x8xf32>
    %508 = tpu.matmul %506, %507, %cst_100 {dimension_numbers = #tpu.dot_dimension_numbers<[1], [0], [0], [1], [0, 0, 1, 1], [], []>} : vector<12x12xbf16>, vector<12x8xbf16>, vector<12x8xf32> -> vector<12x8xf32>
    %509 = tpu.concatenate %466, %480, %494, %508 in 1 : vector<12x8xf32>, vector<12x8xf32>, vector<12x8xf32>, vector<12x8xf32> -> vector<12x32xf32>
    %c0_101 = arith.constant 0 : index
    %c0_102 = arith.constant 0 : index
    %510 = vector.load %arg25[%c0_101, %c0_102] : memref<1x32xf32, #tpu.memory_space<vmem>>, vector<1x32xf32>
    %511 = vector.broadcast %510 : vector<1x32xf32> to vector<12x32xf32>
    %512 = arith.addf %509, %511 : vector<12x32xf32>
    %513 = arith.truncf %512 : vector<12x32xf32> to vector<12x32xbf16>
    %c0_103 = arith.constant 0 : index
    %c0_104 = arith.constant 0 : index
    %514 = vector.load %arg26[%c0_103, %c0_104] : memref<32x8xf32, #tpu.memory_space<vmem>>, vector<32x8xf32>
    %515 = arith.truncf %514 : vector<32x8xf32> to vector<32x8xbf16>
    %cst_105 = arith.constant dense<0.000000e+00> : vector<12x8xf32>
    %516 = tpu.matmul %513, %515, %cst_105 {dimension_numbers = #tpu.dot_dimension_numbers<[1], [0], [0], [1], [0, 0, 1, 1], [], []>} : vector<12x32xbf16>, vector<32x8xbf16>, vector<12x8xf32> -> vector<12x8xf32>
    %c0_106 = arith.constant 0 : index
    %c0_107 = arith.constant 0 : index
    %517 = vector.load %arg27[%c0_106, %c0_107] : memref<1x8xf32, #tpu.memory_space<vmem>>, vector<1x8xf32>
    %518 = vector.broadcast %517 : vector<1x8xf32> to vector<12x8xf32>
    %519 = arith.addf %516, %518 : vector<12x8xf32>
    %c0_108 = arith.constant 0 : index
    %c0_109 = arith.constant 0 : index
    %520 = vector.load %arg2[%c0_108, %c0_109] : memref<2x12xf32, #tpu.memory_space<vmem>>, vector<2x12xf32>
    %521 = arith.truncf %520 : vector<2x12xf32> to vector<2x12xbf16>
    %522 = arith.truncf %519 : vector<12x8xf32> to vector<12x8xbf16>
    %cst_110 = arith.constant dense<0.000000e+00> : vector<2x8xf32>
    %523 = tpu.matmul %521, %522, %cst_110 {dimension_numbers = #tpu.dot_dimension_numbers<[1], [0], [0], [1], [0, 0, 1, 1], [], []>} : vector<2x12xbf16>, vector<12x8xbf16>, vector<2x8xf32> -> vector<2x8xf32>
    %524 = arith.truncf %523 : vector<2x8xf32> to vector<2x8xbf16>
    %c0_111 = arith.constant 0 : index
    %c0_112 = arith.constant 0 : index
    %525 = vector.load %arg28[%c0_111, %c0_112] : memref<8x32xf32, #tpu.memory_space<vmem>>, vector<8x32xf32>
    %526 = arith.truncf %525 : vector<8x32xf32> to vector<8x32xbf16>
    %cst_113 = arith.constant dense<0.000000e+00> : vector<2x32xf32>
    %527 = tpu.matmul %524, %526, %cst_113 {dimension_numbers = #tpu.dot_dimension_numbers<[1], [0], [0], [1], [0, 0, 1, 1], [], []>} : vector<2x8xbf16>, vector<8x32xbf16>, vector<2x32xf32> -> vector<2x32xf32>
    %c0_114 = arith.constant 0 : index
    %c0_115 = arith.constant 0 : index
    %528 = vector.load %arg29[%c0_114, %c0_115] : memref<1x32xf32, #tpu.memory_space<vmem>>, vector<1x32xf32>
    %529 = vector.broadcast %528 : vector<1x32xf32> to vector<2x32xf32>
    %530 = arith.addf %527, %529 : vector<2x32xf32>
    %cst_116 = arith.constant 0.000000e+00 : f32
    %531 = vector.broadcast %cst_116 : f32 to vector<2x32xf32>
    %532 = arith.maximumf %530, %531 : vector<2x32xf32>
    %533 = arith.truncf %532 : vector<2x32xf32> to vector<2x32xbf16>
    %c0_117 = arith.constant 0 : index
    %c0_118 = arith.constant 0 : index
    %534 = vector.load %arg30[%c0_117, %c0_118] : memref<32x16xf32, #tpu.memory_space<vmem>>, vector<32x16xf32>
    %535 = arith.truncf %534 : vector<32x16xf32> to vector<32x16xbf16>
    %cst_119 = arith.constant dense<0.000000e+00> : vector<2x16xf32>
    %536 = tpu.matmul %533, %535, %cst_119 {dimension_numbers = #tpu.dot_dimension_numbers<[1], [0], [0], [1], [0, 0, 1, 1], [], []>} : vector<2x32xbf16>, vector<32x16xbf16>, vector<2x16xf32> -> vector<2x16xf32>
    %c0_120 = arith.constant 0 : index
    %c0_121 = arith.constant 0 : index
    %537 = vector.load %arg31[%c0_120, %c0_121] : memref<1x16xf32, #tpu.memory_space<vmem>>, vector<1x16xf32>
    %538 = vector.broadcast %537 : vector<1x16xf32> to vector<2x16xf32>
    %539 = arith.addf %536, %538 : vector<2x16xf32>
    %c0_122 = arith.constant 0 : index
    %c0_123 = arith.constant 0 : index
    %540 = vector.load %arg32[%c0_122, %c0_123] : memref<2x16xf32, #tpu.memory_space<vmem>>, vector<2x16xf32>
    tpu.vector_store %arg32[%c0_122, %c0_123], %539 {strides = array<i32>} : memref<2x16xf32, #tpu.memory_space<vmem>>, vector<2x16xf32>,
    return
  }
}

</mosaic_0001>

<llo_original>
// kernel: gat_encoder_v2.1
$region0: #{gat_encoder_v2.1}
  #allocation0 [shape = 'u32[]', space=smem, size = 0x4, offset = 0x4, fixed_abs, tag = 'smem constant byte address 0x4 - core index']
  #allocation1 [shape = 'u32[72,128]{1,0:T(1,128)}', space=vmem, size = 0x9000, scoped, tag = 'internal scratch']
  %s0 = inlined_call_operand.smem [shape: u32[33], index: -1, kind: input, shape index: {}]
  %s1 = sld [smem:[%s0]]
  %s2 = scalar_lea.smem %s0, 1
  %s3 = sld [smem:[%s2]]
  %s4 = scalar_lea.smem %s0, 2
  %s5 = sld [smem:[%s4]]
  %s6 = scalar_lea.smem %s0, 3
  %s7 = sld [smem:[%s6]]
  %s8 = scalar_lea.smem %s0, 4
  %s9 = sld [smem:[%s8]]
  %s10 = scalar_lea.smem %s0, 5
  %s11 = sld [smem:[%s10]]
  %s12 = scalar_lea.smem %s0, 6
  %s13 = sld [smem:[%s12]]
  %s14 = scalar_lea.smem %s0, 7
  %s15 = sld [smem:[%s14]]
  %s16 = scalar_lea.smem %s0, 8
  %s17 = sld [smem:[%s16]]
  %s18 = scalar_lea.smem %s0, 9
  %s19 = sld [smem:[%s18]]
  %s20 = scalar_lea.smem %s0, 10
  %s21 = sld [smem:[%s20]]
  %s22 = scalar_lea.smem %s0, 11
  %s23 = sld [smem:[%s22]]
  %s24 = scalar_lea.smem %s0, 12
  %s25 = sld [smem:[%s24]]
  %s26 = scalar_lea.smem %s0, 13
  %s27 = sld [smem:[%s26]]
  %s28 = scalar_lea.smem %s0, 14
  %s29 = sld [smem:[%s28]]
  %s30 = scalar_lea.smem %s0, 15
  %s31 = sld [smem:[%s30]]
  %s32 = scalar_lea.smem %s0, 16
  %s33 = sld [smem:[%s32]]
  %s34 = scalar_lea.smem %s0, 17
  %s35 = sld [smem:[%s34]]
  %s36 = scalar_lea.smem %s0, 18
  %s37 = sld [smem:[%s36]]
  %s38 = scalar_lea.smem %s0, 19
  %s39 = sld [smem:[%s38]]
  %s40 = scalar_lea.smem %s0, 20
  %s41 = sld [smem:[%s40]]
  %s42 = scalar_lea.smem %s0, 21
  %s43 = sld [smem:[%s42]]
  %s44 = scalar_lea.smem %s0, 22
  %s45 = sld [smem:[%s44]]
  %s46 = scalar_lea.smem %s0, 23
  %s47 = sld [smem:[%s46]]
  %s48 = scalar_lea.smem %s0, 24
  %s49 = sld [smem:[%s48]]
  %s50 = scalar_lea.smem %s0, 25
  %s51 = sld [smem:[%s50]]
  %s52 = scalar_lea.smem %s0, 26
  %s53 = sld [smem:[%s52]]
  %s54 = scalar_lea.smem %s0, 27
  %s55 = sld [smem:[%s54]]
  %s56 = scalar_lea.smem %s0, 28
  %s57 = sld [smem:[%s56]]
  %s58 = scalar_lea.smem %s0, 29
  %s59 = sld [smem:[%s58]]
  %s60 = scalar_lea.smem %s0, 30
  %s61 = sld [smem:[%s60]]
  %s62 = scalar_lea.smem %s0, 31
  %s63 = sld [smem:[%s62]]
  %s64 = scalar_lea.smem %s0, 32
  %s65 = sld [smem:[%s64]]
  %s66 = sld [smem:[#allocation0]]
  $region138: #{gat_encoder_v2.1} parent=0
    _
  %s68 = ssub.s32 1, %s66
  %s69 = scalar_select 0, %s68, %s66
  $region1: #{gat_encoder_v2.1} parent=0
    #allocation2 [shape = 'u8[1024]{0}', space=vmem, size = 0x400, scoped, tag = 'output window, operand 0, single buffered']
    #allocation3 [shape = 's32[1]{0}', space=sflag, size = 0x4, scoped, tag = 'scoped memory for gat_encoder_v2.1']
    %70 = vsyncpa [#allocation3], 0
    // Predicated region
    $region2: #{gat_encoder_v2.1} parent=1 // pred_check
      _
    $region3: #{gat_encoder_v2.1} parent=1 // pred_check_branch
      %72 = sbr.rel (0) target = $region5
    $region4: #{gat_encoder_v2.1} parent=1 // pred_region
      _
    $region5: #{gat_encoder_v2.1} parent=1 // pred_fallthru
      _
    // Predicated region
    $region6: #{gat_encoder_v2.1} parent=1 // pred_check
      _
    $region7: #{gat_encoder_v2.1} parent=1 // pred_check_branch
      %74 = sbr.rel (0) target = $region9
    $region8: #{gat_encoder_v2.1} parent=1 // pred_region
      _
    $region9: #{gat_encoder_v2.1} parent=1 // pred_fallthru
      _
    // Predicated region
    $region10: #{gat_encoder_v2.1} parent=1 // pred_check
      _
    $region11: #{gat_encoder_v2.1} parent=1 // pred_check_branch
      %76 = sbr.rel (0) target = $region13
    $region12: #{gat_encoder_v2.1} parent=1 // pred_region
      _
    $region13: #{gat_encoder_v2.1} parent=1 // pred_fallthru
      _
    // Predicated region
    $region14: #{gat_encoder_v2.1} parent=1 // pred_check
      _
    $region15: #{gat_encoder_v2.1} parent=1 // pred_check_branch
      %78 = sbr.rel (0) target = $region17
    $region16: #{gat_encoder_v2.1} parent=1 // pred_region
      _
    $region17: #{gat_encoder_v2.1} parent=1 // pred_fallthru
      _
    // Predicated region
    $region18: #{gat_encoder_v2.1} parent=1 // pred_check
      _
    $region19: #{gat_encoder_v2.1} parent=1 // pred_check_branch
      %80 = sbr.rel (0) target = $region21
    $region20: #{gat_encoder_v2.1} parent=1 // pred_region
      _
    $region21: #{gat_encoder_v2.1} parent=1 // pred_fallthru
      _
    // Predicated region
    $region22: #{gat_encoder_v2.1} parent=1 // pred_check
      _
    $region23: #{gat_encoder_v2.1} parent=1 // pred_check_branch
      %82 = sbr.rel (0) target = $region25
    $region24: #{gat_encoder_v2.1} parent=1 // pred_region
      _
    $region25: #{gat_encoder_v2.1} parent=1 // pred_fallthru
      _
    // Predicated region
    $region26: #{gat_encoder_v2.1} parent=1 // pred_check
      _
    $region27: #{gat_encoder_v2.1} parent=1 // pred_check_branch
      %84 = sbr.rel (0) target = $region29
    $region28: #{gat_encoder_v2.1} parent=1 // pred_region
      _
    $region29: #{gat_encoder_v2.1} parent=1 // pred_fallthru
      _
    // Predicated region
    $region30: #{gat_encoder_v2.1} parent=1 // pred_check
      _
    $region31: #{gat_encoder_v2.1} parent=1 // pred_check_branch
      %86 = sbr.rel (0) target = $region33
    $region32: #{gat_encoder_v2.1} parent=1 // pred_region
      _
    $region33: #{gat_encoder_v2.1} parent=1 // pred_fallthru
      _
    // Predicated region
    $region34: #{gat_encoder_v2.1} parent=1 // pred_check
      _
    $region35: #{gat_encoder_v2.1} parent=1 // pred_check_branch
      %88 = sbr.rel (0) target = $region37
    $region36: #{gat_encoder_v2.1} parent=1 // pred_region
      _
    $region37: #{gat_encoder_v2.1} parent=1 // pred_fallthru
      _
    // Predicated region
    $region38: #{gat_encoder_v2.1} parent=1 // pred_check
      _
    $region39: #{gat_encoder_v2.1} parent=1 // pred_check_branch
      %90 = sbr.rel (0) target = $region41
    $region40: #{gat_encoder_v2.1} parent=1 // pred_region
      _
    $region41: #{gat_encoder_v2.1} parent=1 // pred_fallthru
      _
    // Predicated region
    $region42: #{gat_encoder_v2.1} parent=1 // pred_check
      _
    $region43: #{gat_encoder_v2.1} parent=1 // pred_check_branch
      %92 = sbr.rel (0) target = $region45
    $region44: #{gat_encoder_v2.1} parent=1 // pred_region
      _
    $region45: #{gat_encoder_v2.1} parent=1 // pred_fallthru
      _
    // Predicated region
    $region46: #{gat_encoder_v2.1} parent=1 // pred_check
      _
    $region47: #{gat_encoder_v2.1} parent=1 // pred_check_branch
      %94 = sbr.rel (0) target = $region49
    $region48: #{gat_encoder_v2.1} parent=1 // pred_region
      _
    $region49: #{gat_encoder_v2.1} parent=1 // pred_fallthru
      _
    // Predicated region
    $region50: #{gat_encoder_v2.1} parent=1 // pred_check
      _
    $region51: #{gat_encoder_v2.1} parent=1 // pred_check_branch
      %96 = sbr.rel (0) target = $region53
    $region52: #{gat_encoder_v2.1} parent=1 // pred_region
      _
    $region53: #{gat_encoder_v2.1} parent=1 // pred_fallthru
      _
    // Predicated region
    $region54: #{gat_encoder_v2.1} parent=1 // pred_check
      _
    $region55: #{gat_encoder_v2.1} parent=1 // pred_check_branch
      %98 = sbr.rel (0) target = $region57
    $region56: #{gat_encoder_v2.1} parent=1 // pred_region
      _
    $region57: #{gat_encoder_v2.1} parent=1 // pred_fallthru
      _
    // Predicated region
    $region58: #{gat_encoder_v2.1} parent=1 // pred_check
      _
    $region59: #{gat_encoder_v2.1} parent=1 // pred_check_branch
      %100 = sbr.rel (0) target = $region61
    $region60: #{gat_encoder_v2.1} parent=1 // pred_region
      _
    $region61: #{gat_encoder_v2.1} parent=1 // pred_fallthru
      _
    // Predicated region
    $region62: #{gat_encoder_v2.1} parent=1 // pred_check
      _
    $region63: #{gat_encoder_v2.1} parent=1 // pred_check_branch
      %102 = sbr.rel (0) target = $region65
    $region64: #{gat_encoder_v2.1} parent=1 // pred_region
      _
    $region65: #{gat_encoder_v2.1} parent=1 // pred_fallthru
      _
    // Predicated region
    $region66: #{gat_encoder_v2.1} parent=1 // pred_check
      _
    $region67: #{gat_encoder_v2.1} parent=1 // pred_check_branch
      %104 = sbr.rel (0) target = $region69
    $region68: #{gat_encoder_v2.1} parent=1 // pred_region
      _
    $region69: #{gat_encoder_v2.1} parent=1 // pred_fallthru
      _
    // Predicated region
    $region70: #{gat_encoder_v2.1} parent=1 // pred_check
      _
    $region71: #{gat_encoder_v2.1} parent=1 // pred_check_branch
      %106 = sbr.rel (0) target = $region73
    $region72: #{gat_encoder_v2.1} parent=1 // pred_region
      _
    $region73: #{gat_encoder_v2.1} parent=1 // pred_fallthru
      _
    // Predicated region
    $region74: #{gat_encoder_v2.1} parent=1 // pred_check
      _
    $region75: #{gat_encoder_v2.1} parent=1 // pred_check_branch
      %108 = sbr.rel (0) target = $region77
    $region76: #{gat_encoder_v2.1} parent=1 // pred_region
      _
    $region77: #{gat_encoder_v2.1} parent=1 // pred_fallthru
      _
    // Predicated region
    $region78: #{gat_encoder_v2.1} parent=1 // pred_check
      _
    $region79: #{gat_encoder_v2.1} parent=1 // pred_check_branch
      %110 = sbr.rel (0) target = $region81
    $region80: #{gat_encoder_v2.1} parent=1 // pred_region
      _
    $region81: #{gat_encoder_v2.1} parent=1 // pred_fallthru
      _
    // Predicated region
    $region82: #{gat_encoder_v2.1} parent=1 // pred_check
      _
    $region83: #{gat_encoder_v2.1} parent=1 // pred_check_branch
      %112 = sbr.rel (0) target = $region85
    $region84: #{gat_encoder_v2.1} parent=1 // pred_region
      _
    $region85: #{gat_encoder_v2.1} parent=1 // pred_fallthru
      _
    // Predicated region
    $region86: #{gat_encoder_v2.1} parent=1 // pred_check
      _
    $region87: #{gat_encoder_v2.1} parent=1 // pred_check_branch
      %114 = sbr.rel (0) target = $region89
    $region88: #{gat_encoder_v2.1} parent=1 // pred_region
      _
    $region89: #{gat_encoder_v2.1} parent=1 // pred_fallthru
      _
    // Predicated region
    $region90: #{gat_encoder_v2.1} parent=1 // pred_check
      _
    $region91: #{gat_encoder_v2.1} parent=1 // pred_check_branch
      %116 = sbr.rel (0) target = $region93
    $region92: #{gat_encoder_v2.1} parent=1 // pred_region
      _
    $region93: #{gat_encoder_v2.1} parent=1 // pred_fallthru
      _
    // Predicated region
    $region94: #{gat_encoder_v2.1} parent=1 // pred_check
      _
    $region95: #{gat_encoder_v2.1} parent=1 // pred_check_branch
      %118 = sbr.rel (0) target = $region97
    $region96: #{gat_encoder_v2.1} parent=1 // pred_region
      _
    $region97: #{gat_encoder_v2.1} parent=1 // pred_fallthru
      _
    // Predicated region
    $region98: #{gat_encoder_v2.1} parent=1 // pred_check
      _
    $region99: #{gat_encoder_v2.1} parent=1 // pred_check_branch
      %120 = sbr.rel (0) target = $region101
    $region100: #{gat_encoder_v2.1} parent=1 // pred_region
      _
    $region101: #{gat_encoder_v2.1} parent=1 // pred_fallthru
      _
    // Predicated region
    $region102: #{gat_encoder_v2.1} parent=1 // pred_check
      _
    $region103: #{gat_encoder_v2.1} parent=1 // pred_check_branch
      %122 = sbr.rel (0) target = $region105
    $region104: #{gat_encoder_v2.1} parent=1 // pred_region
      _
    $region105: #{gat_encoder_v2.1} parent=1 // pred_fallthru
      _
    // Predicated region
    $region106: #{gat_encoder_v2.1} parent=1 // pred_check
      _
    $region107: #{gat_encoder_v2.1} parent=1 // pred_check_branch
      %124 = sbr.rel (0) target = $region109
    $region108: #{gat_encoder_v2.1} parent=1 // pred_region
      _
    $region109: #{gat_encoder_v2.1} parent=1 // pred_fallthru
      _
    // Predicated region
    $region110: #{gat_encoder_v2.1} parent=1 // pred_check
      _
    $region111: #{gat_encoder_v2.1} parent=1 // pred_check_branch
      %126 = sbr.rel (0) target = $region113
    $region112: #{gat_encoder_v2.1} parent=1 // pred_region
      _
    $region113: #{gat_encoder_v2.1} parent=1 // pred_fallthru
      _
    // Predicated region
    $region114: #{gat_encoder_v2.1} parent=1 // pred_check
      _
    $region115: #{gat_encoder_v2.1} parent=1 // pred_check_branch
      %128 = sbr.rel (0) target = $region117
    $region116: #{gat_encoder_v2.1} parent=1 // pred_region
      _
    $region117: #{gat_encoder_v2.1} parent=1 // pred_fallthru
      _
    // Predicated region
    $region118: #{gat_encoder_v2.1} parent=1 // pred_check
      _
    $region119: #{gat_encoder_v2.1} parent=1 // pred_check_branch
      %130 = sbr.rel (0) target = $region121
    $region120: #{gat_encoder_v2.1} parent=1 // pred_region
      _
    $region121: #{gat_encoder_v2.1} parent=1 // pred_fallthru
      _
    // Predicated region
    $region122: #{gat_encoder_v2.1} parent=1 // pred_check
      _
    $region123: #{gat_encoder_v2.1} parent=1 // pred_check_branch
      %132 = sbr.rel (0) target = $region125
    $region124: #{gat_encoder_v2.1} parent=1 // pred_region
      _
    $region125: #{gat_encoder_v2.1} parent=1 // pred_fallthru
      _
    // Predicated region
    $region126: #{gat_encoder_v2.1} parent=1 // pred_check
      _
    $region127: #{gat_encoder_v2.1} parent=1 // pred_check_branch
      %134 = sbr.rel (0) target = $region129
    $region128: #{gat_encoder_v2.1} parent=1 // pred_region
      _
    $region129: #{gat_encoder_v2.1} parent=1 // pred_fallthru
      _
    %v136 = vld [vmem:[%s1] sm:$0x3]
    %v137 = vld [vmem:[%s1 + $0x2] sm:$0x1]
    %v138 = vunpack.c.0.s8 %v136
    %v139 = vunpack.c.0.s8 %v137
    %v140 = vcvt.s32.f32 %v138
    %v141 = vcvt.s32.f32 %v139
    %v142 = vsub.f32 %v140, 1.0
    %v143 = vsub.f32 %v141, 1.0
    %v144 = vmul.f32 %v142, 1e+09
    %v145 = vmul.f32 %v143, 1e+09
    %v146 = vsub.f32 0.0, %v144
    %v147 = vsub.f32 0.0, %v145
    %150 = vrot.lane.b32.xlu0 %v146, 12
    %v151 = vpop.permute.xlu0 %150
    %152 = vrot.lane.b32.xlu0 %v147, 12
    %v153 = vpop.permute.xlu0 %152
    %156 = vrot.lane.b32.xlu0 %v146, 24
    %v157 = vpop.permute.xlu0 %156
    %158 = vrot.lane.b32.xlu0 %v147, 24
    %v159 = vpop.permute.xlu0 %158
    %162 = vrot.lane.b32.xlu0 %v146, 36
    %v163 = vpop.permute.xlu0 %162
    %164 = vrot.lane.b32.xlu0 %v147, 36
    %v165 = vpop.permute.xlu0 %164
    %vm168 = vcmask 97280
    %v169 = vsel %vm168, %v146, %v151
    %v170 = vsel %vm168, %v147, %v153
    %vm171 = vcmask 195584
    %v172 = vsel %vm171, %v169, %v157
    %v173 = vsel %vm171, %v170, %v159
    %vm174 = vcmask 293888
    %v175 = vsel %vm174, %v172, %v163
    %v176 = vsel %vm174, %v173, %v165
    %v177 = vld [vmem:[%s7] sm:$0xff]
    %v178 = vld [vmem:[%s7 + $0x8] sm:$0xff]
    %v179 = vld [vmem:[%s7 + $0x10] sm:$0xff]
    %v180 = vld [vmem:[%s7 + $0x18] sm:$0xff]
    %v181 = vld [vmem:[%s7 + $0x20] sm:$0xff]
    %v182 = vld [vmem:[%s7 + $0x28] sm:$0xff]
    %v183 = vld [vmem:[%s7 + $0x30] sm:$0xff]
    %v184 = vld [vmem:[%s7 + $0x38] sm:$0xff]
    %v185 = vld [vmem:[%s7 + $0x40] sm:$0xff]
    %v186 = vld [vmem:[%s7 + $0x48] sm:$0xff]
    %v187 = vld [vmem:[%s7 + $0x50] sm:$0xff]
    %v188 = vld [vmem:[%s7 + $0x58] sm:$0xff]
    %v189 = vpack.c.bf16 %v180, %v177
    %v190 = vpack.c.bf16 %v181, %v178
    %v191 = vpack.c.bf16 %v182, %v179
    %v192 = vpack.c.bf16 %v186, %v183
    %v193 = vpack.c.bf16 %v187, %v184
    %v194 = vpack.c.bf16 %v188, %v185
    %v195 = vld [vmem:[%s3] sm:$0xff]
    %v196 = vld [vmem:[%s3 + $0x8] sm:$0xf]
    %v197 = vpack.c.bf16 %v196, %v195
    %v198 = vld [vmem:[%s9] sm:$0xff]
    %v199 = vld [vmem:[%s9 + $0x8] sm:$0xff]
    %v200 = vpack.c.bf16 %v199, %v198
    %v201 = vld [vmem:[%s11] sm:$0x1]
    %v203 = vperm.slane %v201, 0
    %vm205 = vcmask 130048
    %v207 = vsel %vm205, %v197, 0
    %209 = vmatpush.bf16.msra.mxu0 0
    %210 = vmatpush.bf16.msra.mxu0 0
    %211 = vmatpush.bf16.msra.mxu0 0
    %212 = vmatpush.bf16.msra.mxu0 0
    %213 = vmatpush.bf16.msra.mxu0 0
    %214 = vmatpush.bf16.msra.mxu0 0
    %215 = vmatpush.bf16.msra.mxu0 0
    %216 = vmatpush.bf16.msra.mxu0 %v200
    %217 = vmatmul.bf16.gmra.mxu0 %v207
    %v218 = vpop.f32.mrf.mxu0
    %v219 = vadd.f32 %v203, %v218
    %v220 = vpop.f32.mrf.mxu0
    %v221 = vadd.f32 %v203, %v220
    %222 = vdwg.mxu0
    %v223 = vpack.c.bf16 %v219, %v219
    %v224 = vpack.c.bf16 %v221, %v221
    %v225 = vpack.c.bf16 %v221, %v219
    %226 = vxpose.xlu0.b32.start [1/16] %v219, 128
    %227 = vxpose.xlu0.b32.cont [2/16] %v221, 128
    %228 = vxpose.xlu0.b32.cont [3/16] 0.0, 128
    %229 = vxpose.xlu0.b32.cont [4/16] 0.0, 128
    %230 = vxpose.xlu0.b32.cont [5/16] 0.0, 128
    %231 = vxpose.xlu0.b32.cont [6/16] 0.0, 128
    %232 = vxpose.xlu0.b32.cont [7/16] 0.0, 128
    %233 = vxpose.xlu0.b32.cont [8/16] 0.0, 128
    %234 = vxpose.xlu0.b32.cont [9/16] 0.0, 128
    %235 = vxpose.xlu0.b32.cont [10/16] 0.0, 128
    %236 = vxpose.xlu0.b32.cont [11/16] 0.0, 128
    %237 = vxpose.xlu0.b32.cont [12/16] 0.0, 128
    %238 = vxpose.xlu0.b32.cont [13/16] 0.0, 128
    %239 = vxpose.xlu0.b32.cont [14/16] 0.0, 128
    %240 = vxpose.xlu0.b32.cont [15/16] 0.0, 128
    %241 = vxpose.xlu0.b32.end [16/16] 0.0, 128
    %v242 = vpop.trf.xlu0
    %v243 = vpop.trf.xlu0
    %v244 = vpop.trf.xlu0
    %v245 = vpop.trf.xlu0
    %v246 = vpop.trf.xlu0
    %v247 = vpop.trf.xlu0
    %v248 = vpop.trf.xlu0
    %v249 = vpop.trf.xlu0
    %v250 = vpop.trf.xlu0
    %v251 = vpop.trf.xlu0
    %v252 = vpop.trf.xlu0
    %v253 = vpop.trf.xlu0
    %v254 = vpop.trf.xlu0
    %v255 = vpop.trf.xlu0
    %v256 = vpop.trf.xlu0
    %v257 = vpop.trf.xlu0
    %259 = vrot.lane.b32.xlu0 %v243, 12
    %v260 = vpop.permute.xlu0 %259
    %263 = vrot.lane.b32.xlu0 %v244, 24
    %v264 = vpop.permute.xlu0 %263
    %267 = vrot.lane.b32.xlu0 %v245, 36
    %v268 = vpop.permute.xlu0 %267
    %v270 = vsel %vm168, %v242, %v260
    %v271 = vsel %vm171, %v270, %v264
    %v272 = vsel %vm174, %v271, %v268
    %274 = vrot.lane.b32.xlu0 %v225, 96
    %v275 = vpop.permute.xlu0 %274
    %vm276 = vcmask 261120
    %v278 = vsel %vm276, %v275, 0
    %280 = vmatpush.bf16.msra.mxu0 0
    %281 = vmatpush.bf16.msra.mxu0 0
    %282 = vmatpush.bf16.msra.mxu0 0
    %283 = vmatpush.bf16.msra.mxu0 0
    %284 = vmatpush.bf16.msra.mxu0 0
    %285 = vmatpush.bf16.msra.mxu0 0
    %286 = vmatpush.bf16.msra.mxu0 %v192
    %287 = vmatpush.bf16.msra.mxu0 %v189
    %288 = vmatmul.bf16.gmra.mxu0 %v278
    %v289 = vpop.f32.mrf.mxu0
    %v290 = vadd.f32 0.0, %v289
    %v291 = vpop.f32.mrf.mxu0
    %v292 = vadd.f32 0.0, %v291
    %293 = vdwg.mxu0
    %294 = vmatpush.bf16.msra.mxu0 0
    %295 = vmatpush.bf16.msra.mxu0 0
    %296 = vmatpush.bf16.msra.mxu0 0
    %297 = vmatpush.bf16.msra.mxu0 0
    %298 = vmatpush.bf16.msra.mxu0 0
    %299 = vmatpush.bf16.msra.mxu0 0
    %300 = vmatpush.bf16.msra.mxu0 %v193
    %301 = vmatpush.bf16.msra.mxu0 %v190
    %302 = vmatmul.bf16.gmra.mxu0 %v278
    %v303 = vpop.f32.mrf.mxu0
    %v304 = vadd.f32 0.0, %v303
    %v305 = vpop.f32.mrf.mxu0
    %v306 = vadd.f32 0.0, %v305
    %307 = vdwg.mxu0
    %308 = vmatpush.bf16.msra.mxu0 0
    %309 = vmatpush.bf16.msra.mxu0 0
    %310 = vmatpush.bf16.msra.mxu0 0
    %311 = vmatpush.bf16.msra.mxu0 0
    %312 = vmatpush.bf16.msra.mxu0 0
    %313 = vmatpush.bf16.msra.mxu0 0
    %314 = vmatpush.bf16.msra.mxu0 %v194
    %315 = vmatpush.bf16.msra.mxu0 %v191
    %316 = vmatmul.bf16.gmra.mxu0 %v278
    %v317 = vpop.f32.mrf.mxu0
    %v318 = vadd.f32 0.0, %v317
    %v319 = vpop.f32.mrf.mxu0
    %v320 = vadd.f32 0.0, %v319
    %321 = vdwg.mxu0
    %v322 = vld [vmem:[%s17] sm:$0xff]
    %v323 = vld [vmem:[%s17 + $0x8] sm:$0xff]
    %v324 = vld [vmem:[%s17 + $0x10] sm:$0xff]
    %v325 = vld [vmem:[%s17 + $0x18] sm:$0xff]
    %v326 = vpack.c.bf16 %v323, %v322
    %v327 = vpack.c.bf16 %v325, %v324
    %v328 = vld [vmem:[%s15] sm:$0xff]
    %v329 = vmul.f32 %v328, %v272
    %vm330 = vcmask 392192
    %v331 = vsel %vm330, %v329, 0.0
    %v332 = vrot.slane %v331, 4
    %v333 = vadd.f32 %v331, %v332
    %v334 = vrot.slane %v333, 2
    %v335 = vadd.f32 %v333, %v334
    %v336 = vrot.slane %v335, 1
    %v337 = vadd.f32 %v335, %v336
    %338 = vmatpush.bf16.msra.mxu0 0
    %339 = vmatpush.bf16.msra.mxu0 0
    %340 = vmatpush.bf16.msra.mxu0 0
    %341 = vmatpush.bf16.msra.mxu0 0
    %342 = vmatpush.bf16.msra.mxu0 0
    %343 = vmatpush.bf16.msra.mxu0 0
    %344 = vmatpush.bf16.msra.mxu0 %v327
    %345 = vmatpush.bf16.msra.mxu0 %v326
    %346 = vmatmul.bf16.gmra.mxu0 %v278
    %v347 = vpop.f32.mrf.mxu0
    %v348 = vadd.f32 %v337, %v347
    %v349 = vpop.f32.mrf.mxu0
    %v350 = vadd.f32 %v337, %v349
    %351 = vdwg.mxu0
    %v352 = vld [vmem:[%s13] sm:$0xff]
    %v353 = vperm.slane %v272, 0
    %v354 = vadd.f32 %v290, %v353
    %v355 = vadd.f32 %v292, %v353
    %v356 = vand.u32 2147483647, %v354
    %v357 = vand.u32 2147483647, %v355
    %v358 = vperm.slane %v352, 0
    %v359 = vmul.f32 %v358, %v356
    %v360 = vmul.f32 %v358, %v357
    %v361 = vperm.slane %v272, 1
    %363 = vrot.lane.b32.xlu0 %v361, 48
    %v364 = vpop.permute.xlu0 %363
    %v366 = vadd.f32 %v290, %v364
    %v367 = vadd.f32 %v292, %v364
    %v368 = vand.u32 2147483647, %v366
    %v369 = vand.u32 2147483647, %v367
    %v370 = vperm.slane %v352, 1
    %373 = vrot.lane.b32.xlu0 %v368, 80
    %v374 = vpop.permute.xlu0 %373
    %375 = vrot.lane.b32.xlu0 %v369, 80
    %v376 = vpop.permute.xlu0 %375
    %v379 = vmul.f32 %v370, %v374
    %v380 = vmul.f32 %v370, %v376
    %v381 = vadd.f32 %v359, %v379
    %v382 = vadd.f32 %v360, %v380
    %v383 = vperm.slane %v272, 2
    %385 = vrot.lane.b32.xlu0 %v383, 96
    %v386 = vpop.permute.xlu0 %385
    %v388 = vadd.f32 %v290, %v386
    %v389 = vadd.f32 %v304, %v386
    %v390 = vadd.f32 %v292, %v386
    %v391 = vadd.f32 %v306, %v386
    %v392 = vand.u32 2147483647, %v388
    %v393 = vand.u32 2147483647, %v389
    %v394 = vand.u32 2147483647, %v390
    %v395 = vand.u32 2147483647, %v391
    %v396 = vperm.slane %v352, 2
    %401 = vrot.lane.b32.xlu0 %v392, 32
    %v402 = vpop.permute.xlu0 %401
    %403 = vrot.lane.b32.xlu0 %v393, 32
    %v404 = vpop.permute.xlu0 %403
    %405 = vrot.lane.b32.xlu0 %v394, 32
    %v406 = vpop.permute.xlu0 %405
    %407 = vrot.lane.b32.xlu0 %v395, 32
    %v408 = vpop.permute.xlu0 %407
    %v409 = vsel %vm276, %v402, %v404
    %v410 = vsel %vm276, %v406, %v408
    %v413 = vmul.f32 %v396, %v409
    %v414 = vmul.f32 %v396, %v410
    %v415 = vadd.f32 %v381, %v413
    %v416 = vadd.f32 %v382, %v414
    %v417 = vperm.slane %v272, 3
    %419 = vrot.lane.b32.xlu0 %v417, 16
    %v420 = vpop.permute.xlu0 %419
    %v422 = vadd.f32 %v304, %v420
    %v423 = vadd.f32 %v306, %v420
    %v424 = vand.u32 2147483647, %v422
    %v425 = vand.u32 2147483647, %v423
    %v426 = vperm.slane %v352, 3
    %429 = vrot.lane.b32.xlu0 %v424, 112
    %v430 = vpop.permute.xlu0 %429
    %431 = vrot.lane.b32.xlu0 %v425, 112
    %v432 = vpop.permute.xlu0 %431
    %v435 = vmul.f32 %v426, %v430
    %v436 = vmul.f32 %v426, %v432
    %v437 = vadd.f32 %v415, %v435
    %v438 = vadd.f32 %v416, %v436
    %v439 = vperm.slane %v272, 4
    %441 = vrot.lane.b32.xlu0 %v439, 64
    %v442 = vpop.permute.xlu0 %441
    %v444 = vadd.f32 %v304, %v442
    %v445 = vadd.f32 %v306, %v442
    %v446 = vand.u32 2147483647, %v444
    %v447 = vand.u32 2147483647, %v445
    %v448 = vperm.slane %v352, 4
    %451 = vrot.lane.b32.xlu0 %v446, 64
    %v452 = vpop.permute.xlu0 %451
    %453 = vrot.lane.b32.xlu0 %v447, 64
    %v454 = vpop.permute.xlu0 %453
    %v457 = vmul.f32 %v448, %v452
    %v458 = vmul.f32 %v448, %v454
    %v459 = vadd.f32 %v437, %v457
    %v460 = vadd.f32 %v438, %v458
    %v461 = vperm.slane %v272, 5
    %463 = vrot.lane.b32.xlu0 %v461, 112
    %v464 = vpop.permute.xlu0 %463
    %v466 = vadd.f32 %v304, %v464
    %v467 = vadd.f32 %v318, %v464
    %v468 = vadd.f32 %v306, %v464
    %v469 = vadd.f32 %v320, %v464
    %v470 = vand.u32 2147483647, %v466
    %v471 = vand.u32 2147483647, %v467
    %v472 = vand.u32 2147483647, %v468
    %v473 = vand.u32 2147483647, %v469
    %v474 = vperm.slane %v352, 5
    %479 = vrot.lane.b32.xlu0 %v470, 16
    %v480 = vpop.permute.xlu0 %479
    %481 = vrot.lane.b32.xlu0 %v471, 16
    %v482 = vpop.permute.xlu0 %481
    %483 = vrot.lane.b32.xlu0 %v472, 16
    %v484 = vpop.permute.xlu0 %483
    %485 = vrot.lane.b32.xlu0 %v473, 16
    %v486 = vpop.permute.xlu0 %485
    %v487 = vsel %vm205, %v480, %v482
    %v488 = vsel %vm205, %v484, %v486
    %v491 = vmul.f32 %v474, %v487
    %v492 = vmul.f32 %v474, %v488
    %v493 = vadd.f32 %v459, %v491
    %v494 = vadd.f32 %v460, %v492
    %v495 = vperm.slane %v272, 6
    %497 = vrot.lane.b32.xlu0 %v495, 32
    %v498 = vpop.permute.xlu0 %497
    %v500 = vadd.f32 %v318, %v498
    %v501 = vadd.f32 %v320, %v498
    %v502 = vand.u32 2147483647, %v500
    %v503 = vand.u32 2147483647, %v501
    %v504 = vperm.slane %v352, 6
    %507 = vrot.lane.b32.xlu0 %v502, 96
    %v508 = vpop.permute.xlu0 %507
    %509 = vrot.lane.b32.xlu0 %v503, 96
    %v510 = vpop.permute.xlu0 %509
    %v513 = vmul.f32 %v504, %v508
    %v514 = vmul.f32 %v504, %v510
    %v515 = vadd.f32 %v493, %v513
    %v516 = vadd.f32 %v494, %v514
    %v517 = vperm.slane %v272, 7
    %519 = vrot.lane.b32.xlu0 %v517, 80
    %v520 = vpop.permute.xlu0 %519
    %v522 = vadd.f32 %v318, %v520
    %v523 = vadd.f32 %v320, %v520
    %v524 = vand.u32 2147483647, %v522
    %v525 = vand.u32 2147483647, %v523
    %v526 = vperm.slane %v352, 7
    %529 = vrot.lane.b32.xlu0 %v524, 48
    %v530 = vpop.permute.xlu0 %529
    %531 = vrot.lane.b32.xlu0 %v525, 48
    %v532 = vpop.permute.xlu0 %531
    %v535 = vmul.f32 %v526, %v530
    %v536 = vmul.f32 %v526, %v532
    %v537 = vadd.f32 %v515, %v535
    %v538 = vadd.f32 %v516, %v536
    %v539 = vadd.f32 %v348, %v537
    %v540 = vadd.f32 %v350, %v538
    %v541 = vadd.f32 %v539, %v175
    %v542 = vadd.f32 %v540, %v176
    %v543 = vsel %vm168, %v541, -inf
    %544 = vmax.xlane.f32.xlu0 %v543
    %v545 = vpop.xlane.xlu0 %544
    %vm546 = vcmask 93184
    %v547 = vsel %vm546, %v542, -inf
    %548 = vmax.xlane.f32.xlu0 %v547
    %v549 = vpop.xlane.xlu0 %548
    %v550 = vsub.f32 %v541, %v545
    %v551 = vsub.f32 %v542, %v549
    %v552 = vmul.f32 %v550, 1.442695
    %v553 = vpow.pop %v552
    %v554 = vmul.f32 %v551, 1.442695
    %v555 = vpow.pop %v554
    %v556 = vsel %vm168, %v553, 0.0
    %557 = vadd.xlane.f32.xlu0 %v556
    %v558 = vpop.xlane.xlu0 %557
    %v559 = vsel %vm546, %v555, 0.0
    %560 = vadd.xlane.f32.xlu0 %v559
    %v561 = vpop.xlane.xlu0 %560
    %v562 = vrcp.pop %v558
    %v563 = vrcp.pop %v561
    %v564 = vmul.f32 %v553, %v562
    %v565 = vmul.f32 %v555, %v563
    %v566 = vpack.c.bf16 %v565, %v564
    %v569 = vunpack.c.l.b16 %v223
    %v570 = vunpack.c.l.b16 %v224
    %v571 = vpack.c.b16 %v570, %v569
    %v573 = vsel %vm168, %v566, 0
    %vm575 = vcmask 1045504
    %v577 = vsel %vm575, %v571, 0
    %579 = vmatpush.bf16.msra.mxu0 0
    %580 = vmatpush.bf16.msra.mxu0 0
    %581 = vmatpush.bf16.msra.mxu0 0
    %582 = vmatpush.bf16.msra.mxu0 0
    %583 = vmatpush.bf16.msra.mxu0 0
    %584 = vmatpush.bf16.msra.mxu0 0
    %585 = vmatpush.bf16.msra.mxu0 0
    %586 = vmatpush.bf16.msra.mxu0 %v577
    %587 = vmatmul.bf16.gmra.mxu0 %v573
    %v588 = vpop.f32.mrf.mxu0
    %v589 = vadd.f32 0.0, %v588
    %v590 = vpop.f32.mrf.mxu0
    %v591 = vadd.f32 0.0, %v590
    %592 = vdwg.mxu0
    %vm593 = vcmask 195680
    %v594 = vsel %vm593, %v541, -inf
    %595 = vmax.xlane.f32.xlu0 %v594
    %v596 = vpop.xlane.xlu0 %595
    %vm597 = vcmask 191584
    %v598 = vsel %vm597, %v542, -inf
    %599 = vmax.xlane.f32.xlu0 %v598
    %v600 = vpop.xlane.xlu0 %599
    %v601 = vsub.f32 %v541, %v596
    %v602 = vsub.f32 %v542, %v600
    %v603 = vmul.f32 %v601, 1.442695
    %v604 = vpow.pop %v603
    %v605 = vmul.f32 %v602, 1.442695
    %v606 = vpow.pop %v605
    %609 = vrot.lane.b32.xlu0 %v604, 116
    %v610 = vpop.permute.xlu0 %609
    %611 = vrot.lane.b32.xlu0 %v606, 116
    %v612 = vpop.permute.xlu0 %611
    %v615 = vsel %vm168, %v610, 0.0
    %616 = vadd.xlane.f32.xlu0 %v615
    %v617 = vpop.xlane.xlu0 %616
    %v618 = vsel %vm546, %v612, 0.0
    %619 = vadd.xlane.f32.xlu0 %v618
    %v620 = vpop.xlane.xlu0 %619
    %v621 = vrcp.pop %v617
    %v622 = vrcp.pop %v620
    %v623 = vmul.f32 %v604, %v621
    %v624 = vmul.f32 %v606, %v622
    %v625 = vpack.c.bf16 %v624, %v623
    %627 = vrot.lane.b32.xlu0 %v625, 116
    %v628 = vpop.permute.xlu0 %627
    %629 = vrot.lane.b32.xlu0 %v571, 120
    %v630 = vpop.permute.xlu0 %629
    %v632 = vsel %vm168, %v628, 0
    %v635 = vsel %vm575, %v630, 0
    %637 = vmatpush.bf16.msra.mxu0 0
    %638 = vmatpush.bf16.msra.mxu0 0
    %639 = vmatpush.bf16.msra.mxu0 0
    %640 = vmatpush.bf16.msra.mxu0 0
    %641 = vmatpush.bf16.msra.mxu0 0
    %642 = vmatpush.bf16.msra.mxu0 0
    %643 = vmatpush.bf16.msra.mxu0 0
    %644 = vmatpush.bf16.msra.mxu0 %v635
    %645 = vmatmul.bf16.gmra.mxu0 %v632
    %v646 = vpop.f32.mrf.mxu0
    %v647 = vadd.f32 0.0, %v646
    %v648 = vpop.f32.mrf.mxu0
    %v649 = vadd.f32 0.0, %v648
    %650 = vdwg.mxu0
    %vm651 = vcmask 294080
    %v652 = vsel %vm651, %v541, -inf
    %653 = vmax.xlane.f32.xlu0 %v652
    %v654 = vpop.xlane.xlu0 %653
    %vm655 = vcmask 289984
    %v656 = vsel %vm655, %v542, -inf
    %657 = vmax.xlane.f32.xlu0 %v656
    %v658 = vpop.xlane.xlu0 %657
    %v659 = vsub.f32 %v541, %v654
    %v660 = vsub.f32 %v542, %v658
    %v661 = vmul.f32 %v659, 1.442695
    %v662 = vpow.pop %v661
    %v663 = vmul.f32 %v660, 1.442695
    %v664 = vpow.pop %v663
    %667 = vrot.lane.b32.xlu0 %v662, 104
    %v668 = vpop.permute.xlu0 %667
    %669 = vrot.lane.b32.xlu0 %v664, 104
    %v670 = vpop.permute.xlu0 %669
    %v673 = vsel %vm168, %v668, 0.0
    %674 = vadd.xlane.f32.xlu0 %v673
    %v675 = vpop.xlane.xlu0 %674
    %v676 = vsel %vm546, %v670, 0.0
    %677 = vadd.xlane.f32.xlu0 %v676
    %v678 = vpop.xlane.xlu0 %677
    %v679 = vrcp.pop %v675
    %v680 = vrcp.pop %v678
    %v681 = vmul.f32 %v662, %v679
    %v682 = vmul.f32 %v664, %v680
    %v683 = vpack.c.bf16 %v682, %v681
    %685 = vrot.lane.b32.xlu0 %v683, 104
    %v686 = vpop.permute.xlu0 %685
    %687 = vrot.lane.b32.xlu0 %v571, 112
    %v688 = vpop.permute.xlu0 %687
    %v690 = vsel %vm168, %v686, 0
    %v693 = vsel %vm575, %v688, 0
    %695 = vmatpush.bf16.msra.mxu0 0
    %696 = vmatpush.bf16.msra.mxu0 0
    %697 = vmatpush.bf16.msra.mxu0 0
    %698 = vmatpush.bf16.msra.mxu0 0
    %699 = vmatpush.bf16.msra.mxu0 0
    %700 = vmatpush.bf16.msra.mxu0 0
    %701 = vmatpush.bf16.msra.mxu0 0
    %702 = vmatpush.bf16.msra.mxu0 %v693
    %703 = vmatmul.bf16.gmra.mxu0 %v690
    %v704 = vpop.f32.mrf.mxu0
    %v705 = vadd.f32 0.0, %v704
    %v706 = vpop.f32.mrf.mxu0
    %v707 = vadd.f32 0.0, %v706
    %708 = vdwg.mxu0
    %vm709 = vcmask 392480
    %v710 = vsel %vm709, %v541, -inf
    %711 = vmax.xlane.f32.xlu0 %v710
    %v712 = vpop.xlane.xlu0 %711
    %vm713 = vcmask 388384
    %v714 = vsel %vm713, %v542, -inf
    %715 = vmax.xlane.f32.xlu0 %v714
    %v716 = vpop.xlane.xlu0 %715
    %v717 = vsub.f32 %v541, %v712
    %v718 = vsub.f32 %v542, %v716
    %v719 = vmul.f32 %v717, 1.442695
    %v720 = vpow.pop %v719
    %v721 = vmul.f32 %v718, 1.442695
    %v722 = vpow.pop %v721
    %725 = vrot.lane.b32.xlu0 %v720, 92
    %v726 = vpop.permute.xlu0 %725
    %727 = vrot.lane.b32.xlu0 %v722, 92
    %v728 = vpop.permute.xlu0 %727
    %v731 = vsel %vm168, %v726, 0.0
    %732 = vadd.xlane.f32.xlu0 %v731
    %v733 = vpop.xlane.xlu0 %732
    %v734 = vsel %vm546, %v728, 0.0
    %735 = vadd.xlane.f32.xlu0 %v734
    %v736 = vpop.xlane.xlu0 %735
    %v737 = vrcp.pop %v733
    %v738 = vrcp.pop %v736
    %v739 = vmul.f32 %v720, %v737
    %v740 = vmul.f32 %v722, %v738
    %v741 = vpack.c.bf16 %v740, %v739
    %743 = vrot.lane.b32.xlu0 %v741, 92
    %v744 = vpop.permute.xlu0 %743
    %745 = vrot.lane.b32.xlu0 %v571, 104
    %v746 = vpop.permute.xlu0 %745
    %v748 = vsel %vm168, %v744, 0
    %v751 = vsel %vm575, %v746, 0
    %753 = vmatpush.bf16.msra.mxu0 0
    %754 = vmatpush.bf16.msra.mxu0 0
    %755 = vmatpush.bf16.msra.mxu0 0
    %756 = vmatpush.bf16.msra.mxu0 0
    %757 = vmatpush.bf16.msra.mxu0 0
    %758 = vmatpush.bf16.msra.mxu0 0
    %759 = vmatpush.bf16.msra.mxu0 0
    %760 = vmatpush.bf16.msra.mxu0 %v751
    %761 = vmatmul.bf16.gmra.mxu0 %v748
    %v762 = vpop.f32.mrf.mxu0
    %v763 = vadd.f32 0.0, %v762
    %v764 = vpop.f32.mrf.mxu0
    %v765 = vadd.f32 0.0, %v764
    %766 = vdwg.mxu0
    %769 = vrot.lane.b32.xlu0 %v647, 8
    %v770 = vpop.permute.xlu0 %769
    %771 = vrot.lane.b32.xlu0 %v649, 8
    %v772 = vpop.permute.xlu0 %771
    %777 = vrot.lane.b32.xlu0 %v705, 16
    %v778 = vpop.permute.xlu0 %777
    %779 = vrot.lane.b32.xlu0 %v707, 16
    %v780 = vpop.permute.xlu0 %779
    %785 = vrot.lane.b32.xlu0 %v763, 24
    %v786 = vpop.permute.xlu0 %785
    %787 = vrot.lane.b32.xlu0 %v765, 24
    %v788 = vpop.permute.xlu0 %787
    %vm791 = vcmask 64512
    %v792 = vsel %vm791, %v589, %v770
    %v793 = vsel %vm791, %v591, %v772
    %v794 = vsel %vm205, %v792, %v778
    %v795 = vsel %vm205, %v793, %v780
    %v796 = vsel %vm171, %v794, %v786
    %v797 = vsel %vm171, %v795, %v788
    %v798 = vld [vmem:[%s19] sm:$0x1]
    %v800 = vperm.slane %v798, 0
    %v802 = vadd.f32 %v796, %v800
    %v803 = vadd.f32 %v797, %v800
    %v804 = vpack.c.bf16 %v803, %v802
    %v805 = vld [vmem:[%s21] sm:$0xff]
    %v806 = vld [vmem:[%s21 + $0x8] sm:$0xff]
    %v807 = vld [vmem:[%s21 + $0x10] sm:$0xff]
    %v808 = vld [vmem:[%s21 + $0x18] sm:$0xff]
    %v809 = vpack.c.bf16 %v806, %v805
    %v810 = vpack.c.bf16 %v808, %v807
    %v811 = vld [vmem:[%s23] sm:$0x1]
    %v813 = vperm.slane %v811, 0
    %v816 = vsel %vm276, %v804, 0
    %818 = vmatpush.bf16.msra.mxu0 0
    %819 = vmatpush.bf16.msra.mxu0 0
    %820 = vmatpush.bf16.msra.mxu0 0
    %821 = vmatpush.bf16.msra.mxu0 0
    %822 = vmatpush.bf16.msra.mxu0 0
    %823 = vmatpush.bf16.msra.mxu0 0
    %824 = vmatpush.bf16.msra.mxu0 %v810
    %825 = vmatpush.bf16.msra.mxu0 %v809
    %826 = vmatmul.bf16.gmra.mxu0 %v816
    %v827 = vpop.f32.mrf.mxu0
    %v828 = vadd.f32 %v813, %v827
    %v829 = vpop.f32.mrf.mxu0
    %v830 = vadd.f32 %v813, %v829
    %831 = vdwg.mxu0
    %v832 = vmax.f32 %v828, 0.0
    %v833 = vmax.f32 %v830, 0.0
    %v834 = vpack.c.bf16 %v833, %v832
    %v835 = vld [vmem:[%s25] sm:$0xff]
    %v836 = vpack.c.bf16 %v835, %v835
    %v837 = vld [vmem:[%s27] sm:$0x1]
    %v839 = vperm.slane %v837, 0
    %v842 = vsel %vm791, %v834, 0
    %vm844 = vcmask 1043456
    %v846 = vsel %vm844, %v836, 0
    %848 = vmatpush.bf16.msra.mxu0 0
    %849 = vmatpush.bf16.msra.mxu0 0
    %850 = vmatpush.bf16.msra.mxu0 0
    %851 = vmatpush.bf16.msra.mxu0 0
    %852 = vmatpush.bf16.msra.mxu0 0
    %853 = vmatpush.bf16.msra.mxu0 0
    %854 = vmatpush.bf16.msra.mxu0 0
    %855 = vmatpush.bf16.msra.mxu0 %v846
    %856 = vmatmul.bf16.gmra.mxu0 %v842
    %v857 = vpop.f32.mrf.mxu0
    %v858 = vadd.f32 %v839, %v857
    %v859 = vpop.f32.mrf.mxu0
    %v860 = vadd.f32 %v839, %v859
    %861 = vdwg.mxu0
    %v862 = vpack.c.bf16 %v858, %v858
    %v863 = vpack.c.bf16 %v860, %v860
    %v864 = vpack.c.bf16 %v860, %v858
    %865 = vxpose.xlu0.b32.start [1/16] %v858, 128
    %866 = vxpose.xlu0.b32.cont [2/16] %v860, 128
    %867 = vxpose.xlu0.b32.cont [3/16] 0.0, 128
    %868 = vxpose.xlu0.b32.cont [4/16] 0.0, 128
    %869 = vxpose.xlu0.b32.cont [5/16] 0.0, 128
    %870 = vxpose.xlu0.b32.cont [6/16] 0.0, 128
    %871 = vxpose.xlu0.b32.cont [7/16] 0.0, 128
    %872 = vxpose.xlu0.b32.cont [8/16] 0.0, 128
    %873 = vxpose.xlu0.b32.cont [9/16] 0.0, 128
    %874 = vxpose.xlu0.b32.cont [10/16] 0.0, 128
    %875 = vxpose.xlu0.b32.cont [11/16] 0.0, 128
    %876 = vxpose.xlu0.b32.cont [12/16] 0.0, 128
    %877 = vxpose.xlu0.b32.cont [13/16] 0.0, 128
    %878 = vxpose.xlu0.b32.cont [14/16] 0.0, 128
    %879 = vxpose.xlu0.b32.cont [15/16] 0.0, 128
    %880 = vxpose.xlu0.b32.end [16/16] 0.0, 128
    %v881 = vpop.trf.xlu0
    %v882 = vpop.trf.xlu0
    %v883 = vpop.trf.xlu0
    %v884 = vpop.trf.xlu0
    %v885 = vpop.trf.xlu0
    %v886 = vpop.trf.xlu0
    %v887 = vpop.trf.xlu0
    %v888 = vpop.trf.xlu0
    %v889 = vpop.trf.xlu0
    %v890 = vpop.trf.xlu0
    %v891 = vpop.trf.xlu0
    %v892 = vpop.trf.xlu0
    %v893 = vpop.trf.xlu0
    %v894 = vpop.trf.xlu0
    %v895 = vpop.trf.xlu0
    %v896 = vpop.trf.xlu0
    %898 = vrot.lane.b32.xlu0 %v882, 12
    %v899 = vpop.permute.xlu0 %898
    %902 = vrot.lane.b32.xlu0 %v883, 24
    %v903 = vpop.permute.xlu0 %902
    %906 = vrot.lane.b32.xlu0 %v884, 36
    %v907 = vpop.permute.xlu0 %906
    %v909 = vsel %vm168, %v881, %v899
    %v910 = vsel %vm171, %v909, %v903
    %v911 = vsel %vm174, %v910, %v907
    %913 = vrot.lane.b32.xlu0 %v864, 96
    %v914 = vpop.permute.xlu0 %913
    %v916 = vsel %vm276, %v914, 0
    %918 = vmatpush.bf16.msra.mxu0 0
    %919 = vmatpush.bf16.msra.mxu0 0
    %920 = vmatpush.bf16.msra.mxu0 0
    %921 = vmatpush.bf16.msra.mxu0 0
    %922 = vmatpush.bf16.msra.mxu0 0
    %923 = vmatpush.bf16.msra.mxu0 0
    %924 = vmatpush.bf16.msra.mxu0 %v192
    %925 = vmatpush.bf16.msra.mxu0 %v189
    %926 = vmatmul.bf16.gmra.mxu0 %v916
    %v927 = vpop.f32.mrf.mxu0
    %v928 = vadd.f32 0.0, %v927
    %v929 = vpop.f32.mrf.mxu0
    %v930 = vadd.f32 0.0, %v929
    %931 = vdwg.mxu0
    %932 = vmatpush.bf16.msra.mxu0 0
    %933 = vmatpush.bf16.msra.mxu0 0
    %934 = vmatpush.bf16.msra.mxu0 0
    %935 = vmatpush.bf16.msra.mxu0 0
    %936 = vmatpush.bf16.msra.mxu0 0
    %937 = vmatpush.bf16.msra.mxu0 0
    %938 = vmatpush.bf16.msra.mxu0 %v193
    %939 = vmatpush.bf16.msra.mxu0 %v190
    %940 = vmatmul.bf16.gmra.mxu0 %v916
    %v941 = vpop.f32.mrf.mxu0
    %v942 = vadd.f32 0.0, %v941
    %v943 = vpop.f32.mrf.mxu0
    %v944 = vadd.f32 0.0, %v943
    %945 = vdwg.mxu0
    %946 = vmatpush.bf16.msra.mxu0 0
    %947 = vmatpush.bf16.msra.mxu0 0
    %948 = vmatpush.bf16.msra.mxu0 0
    %949 = vmatpush.bf16.msra.mxu0 0
    %950 = vmatpush.bf16.msra.mxu0 0
    %951 = vmatpush.bf16.msra.mxu0 0
    %952 = vmatpush.bf16.msra.mxu0 %v194
    %953 = vmatpush.bf16.msra.mxu0 %v191
    %954 = vmatmul.bf16.gmra.mxu0 %v916
    %v955 = vpop.f32.mrf.mxu0
    %v956 = vadd.f32 0.0, %v955
    %v957 = vpop.f32.mrf.mxu0
    %v958 = vadd.f32 0.0, %v957
    %959 = vdwg.mxu0
    %v960 = vld [vmem:[%s33] sm:$0xff]
    %v961 = vld [vmem:[%s33 + $0x8] sm:$0xff]
    %v962 = vld [vmem:[%s33 + $0x10] sm:$0xff]
    %v963 = vld [vmem:[%s33 + $0x18] sm:$0xff]
    %v964 = vpack.c.bf16 %v961, %v960
    %v965 = vpack.c.bf16 %v963, %v962
    %v966 = vld [vmem:[%s31] sm:$0xff]
    %v967 = vmul.f32 %v966, %v911
    %v968 = vsel %vm330, %v967, 0.0
    %v969 = vrot.slane %v968, 4
    %v970 = vadd.f32 %v968, %v969
    %v971 = vrot.slane %v970, 2
    %v972 = vadd.f32 %v970, %v971
    %v973 = vrot.slane %v972, 1
    %v974 = vadd.f32 %v972, %v973
    %975 = vmatpush.bf16.msra.mxu0 0
    %976 = vmatpush.bf16.msra.mxu0 0
    %977 = vmatpush.bf16.msra.mxu0 0
    %978 = vmatpush.bf16.msra.mxu0 0
    %979 = vmatpush.bf16.msra.mxu0 0
    %980 = vmatpush.bf16.msra.mxu0 0
    %981 = vmatpush.bf16.msra.mxu0 %v965
    %982 = vmatpush.bf16.msra.mxu0 %v964
    %983 = vmatmul.bf16.gmra.mxu0 %v916
    %v984 = vpop.f32.mrf.mxu0
    %v985 = vadd.f32 %v974, %v984
    %v986 = vpop.f32.mrf.mxu0
    %v987 = vadd.f32 %v974, %v986
    %988 = vdwg.mxu0
    %v989 = vld [vmem:[%s29] sm:$0xff]
    %v990 = vperm.slane %v911, 0
    %v991 = vadd.f32 %v928, %v990
    %v992 = vadd.f32 %v930, %v990
    %v993 = vand.u32 2147483647, %v991
    %v994 = vand.u32 2147483647, %v992
    %v995 = vperm.slane %v989, 0
    %v996 = vmul.f32 %v995, %v993
    %v997 = vmul.f32 %v995, %v994
    %v998 = vperm.slane %v911, 1
    %1000 = vrot.lane.b32.xlu0 %v998, 48
    %v1001 = vpop.permute.xlu0 %1000
    %v1003 = vadd.f32 %v928, %v1001
    %v1004 = vadd.f32 %v930, %v1001
    %v1005 = vand.u32 2147483647, %v1003
    %v1006 = vand.u32 2147483647, %v1004
    %v1007 = vperm.slane %v989, 1
    %1010 = vrot.lane.b32.xlu0 %v1005, 80
    %v1011 = vpop.permute.xlu0 %1010
    %1012 = vrot.lane.b32.xlu0 %v1006, 80
    %v1013 = vpop.permute.xlu0 %1012
    %v1016 = vmul.f32 %v1007, %v1011
    %v1017 = vmul.f32 %v1007, %v1013
    %v1018 = vadd.f32 %v996, %v1016
    %v1019 = vadd.f32 %v997, %v1017
    %v1020 = vperm.slane %v911, 2
    %1022 = vrot.lane.b32.xlu0 %v1020, 96
    %v1023 = vpop.permute.xlu0 %1022
    %v1025 = vadd.f32 %v928, %v1023
    %v1026 = vadd.f32 %v942, %v1023
    %v1027 = vadd.f32 %v930, %v1023
    %v1028 = vadd.f32 %v944, %v1023
    %v1029 = vand.u32 2147483647, %v1025
    %v1030 = vand.u32 2147483647, %v1026
    %v1031 = vand.u32 2147483647, %v1027
    %v1032 = vand.u32 2147483647, %v1028
    %v1033 = vperm.slane %v989, 2
    %1038 = vrot.lane.b32.xlu0 %v1029, 32
    %v1039 = vpop.permute.xlu0 %1038
    %1040 = vrot.lane.b32.xlu0 %v1030, 32
    %v1041 = vpop.permute.xlu0 %1040
    %1042 = vrot.lane.b32.xlu0 %v1031, 32
    %v1043 = vpop.permute.xlu0 %1042
    %1044 = vrot.lane.b32.xlu0 %v1032, 32
    %v1045 = vpop.permute.xlu0 %1044
    %v1046 = vsel %vm276, %v1039, %v1041
    %v1047 = vsel %vm276, %v1043, %v1045
    %v1050 = vmul.f32 %v1033, %v1046
    %v1051 = vmul.f32 %v1033, %v1047
    %v1052 = vadd.f32 %v1018, %v1050
    %v1053 = vadd.f32 %v1019, %v1051
    %v1054 = vperm.slane %v911, 3
    %1056 = vrot.lane.b32.xlu0 %v1054, 16
    %v1057 = vpop.permute.xlu0 %1056
    %v1059 = vadd.f32 %v942, %v1057
    %v1060 = vadd.f32 %v944, %v1057
    %v1061 = vand.u32 2147483647, %v1059
    %v1062 = vand.u32 2147483647, %v1060
    %v1063 = vperm.slane %v989, 3
    %1066 = vrot.lane.b32.xlu0 %v1061, 112
    %v1067 = vpop.permute.xlu0 %1066
    %1068 = vrot.lane.b32.xlu0 %v1062, 112
    %v1069 = vpop.permute.xlu0 %1068
    %v1072 = vmul.f32 %v1063, %v1067
    %v1073 = vmul.f32 %v1063, %v1069
    %v1074 = vadd.f32 %v1052, %v1072
    %v1075 = vadd.f32 %v1053, %v1073
    %v1076 = vperm.slane %v911, 4
    %1078 = vrot.lane.b32.xlu0 %v1076, 64
    %v1079 = vpop.permute.xlu0 %1078
    %v1081 = vadd.f32 %v942, %v1079
    %v1082 = vadd.f32 %v944, %v1079
    %v1083 = vand.u32 2147483647, %v1081
    %v1084 = vand.u32 2147483647, %v1082
    %v1085 = vperm.slane %v989, 4
    %1088 = vrot.lane.b32.xlu0 %v1083, 64
    %v1089 = vpop.permute.xlu0 %1088
    %1090 = vrot.lane.b32.xlu0 %v1084, 64
    %v1091 = vpop.permute.xlu0 %1090
    %v1094 = vmul.f32 %v1085, %v1089
    %v1095 = vmul.f32 %v1085, %v1091
    %v1096 = vadd.f32 %v1074, %v1094
    %v1097 = vadd.f32 %v1075, %v1095
    %v1098 = vperm.slane %v911, 5
    %1100 = vrot.lane.b32.xlu0 %v1098, 112
    %v1101 = vpop.permute.xlu0 %1100
    %v1103 = vadd.f32 %v942, %v1101
    %v1104 = vadd.f32 %v956, %v1101
    %v1105 = vadd.f32 %v944, %v1101
    %v1106 = vadd.f32 %v958, %v1101
    %v1107 = vand.u32 2147483647, %v1103
    %v1108 = vand.u32 2147483647, %v1104
    %v1109 = vand.u32 2147483647, %v1105
    %v1110 = vand.u32 2147483647, %v1106
    %v1111 = vperm.slane %v989, 5
    %1116 = vrot.lane.b32.xlu0 %v1107, 16
    %v1117 = vpop.permute.xlu0 %1116
    %1118 = vrot.lane.b32.xlu0 %v1108, 16
    %v1119 = vpop.permute.xlu0 %1118
    %1120 = vrot.lane.b32.xlu0 %v1109, 16
    %v1121 = vpop.permute.xlu0 %1120
    %1122 = vrot.lane.b32.xlu0 %v1110, 16
    %v1123 = vpop.permute.xlu0 %1122
    %v1124 = vsel %vm205, %v1117, %v1119
    %v1125 = vsel %vm205, %v1121, %v1123
    %v1128 = vmul.f32 %v1111, %v1124
    %v1129 = vmul.f32 %v1111, %v1125
    %v1130 = vadd.f32 %v1096, %v1128
    %v1131 = vadd.f32 %v1097, %v1129
    %v1132 = vperm.slane %v911, 6
    %1134 = vrot.lane.b32.xlu0 %v1132, 32
    %v1135 = vpop.permute.xlu0 %1134
    %v1137 = vadd.f32 %v956, %v1135
    %v1138 = vadd.f32 %v958, %v1135
    %v1139 = vand.u32 2147483647, %v1137
    %v1140 = vand.u32 2147483647, %v1138
    %v1141 = vperm.slane %v989, 6
    %1144 = vrot.lane.b32.xlu0 %v1139, 96
    %v1145 = vpop.permute.xlu0 %1144
    %1146 = vrot.lane.b32.xlu0 %v1140, 96
    %v1147 = vpop.permute.xlu0 %1146
    %v1150 = vmul.f32 %v1141, %v1145
    %v1151 = vmul.f32 %v1141, %v1147
    %v1152 = vadd.f32 %v1130, %v1150
    %v1153 = vadd.f32 %v1131, %v1151
    %v1154 = vperm.slane %v911, 7
    %1156 = vrot.lane.b32.xlu0 %v1154, 80
    %v1157 = vpop.permute.xlu0 %1156
    %v1159 = vadd.f32 %v956, %v1157
    %v1160 = vadd.f32 %v958, %v1157
    %v1161 = vand.u32 2147483647, %v1159
    %v1162 = vand.u32 2147483647, %v1160
    %v1163 = vperm.slane %v989, 7
    %1166 = vrot.lane.b32.xlu0 %v1161, 48
    %v1167 = vpop.permute.xlu0 %1166
    %1168 = vrot.lane.b32.xlu0 %v1162, 48
    %v1169 = vpop.permute.xlu0 %1168
    %v1172 = vmul.f32 %v1163, %v1167
    %v1173 = vmul.f32 %v1163, %v1169
    %v1174 = vadd.f32 %v1152, %v1172
    %v1175 = vadd.f32 %v1153, %v1173
    %v1176 = vadd.f32 %v985, %v1174
    %v1177 = vadd.f32 %v987, %v1175
    %v1178 = vadd.f32 %v1176, %v175
    %v1179 = vadd.f32 %v1177, %v176
    %v1180 = vsel %vm168, %v1178, -inf
    %1181 = vmax.xlane.f32.xlu0 %v1180
    %v1182 = vpop.xlane.xlu0 %1181
    %v1183 = vsel %vm546, %v1179, -inf
    %1184 = vmax.xlane.f32.xlu0 %v1183
    %v1185 = vpop.xlane.xlu0 %1184
    %v1186 = vsub.f32 %v1178, %v1182
    %v1187 = vsub.f32 %v1179, %v1185
    %v1188 = vmul.f32 %v1186, 1.442695
    %v1189 = vpow.pop %v1188
    %v1190 = vmul.f32 %v1187, 1.442695
    %v1191 = vpow.pop %v1190
    %v1192 = vsel %vm168, %v1189, 0.0
    %1193 = vadd.xlane.f32.xlu0 %v1192
    %v1194 = vpop.xlane.xlu0 %1193
    %v1195 = vsel %vm546, %v1191, 0.0
    %1196 = vadd.xlane.f32.xlu0 %v1195
    %v1197 = vpop.xlane.xlu0 %1196
    %v1198 = vrcp.pop %v1194
    %v1199 = vrcp.pop %v1197
    %v1200 = vmul.f32 %v1189, %v1198
    %v1201 = vmul.f32 %v1191, %v1199
    %v1202 = vpack.c.bf16 %v1201, %v1200
    %v1205 = vunpack.c.l.b16 %v862
    %v1206 = vunpack.c.l.b16 %v863
    %v1207 = vpack.c.b16 %v1206, %v1205
    %v1209 = vsel %vm168, %v1202, 0
    %v1212 = vsel %vm575, %v1207, 0
    %1214 = vmatpush.bf16.msra.mxu0 0
    %1215 = vmatpush.bf16.msra.mxu0 0
    %1216 = vmatpush.bf16.msra.mxu0 0
    %1217 = vmatpush.bf16.msra.mxu0 0
    %1218 = vmatpush.bf16.msra.mxu0 0
    %1219 = vmatpush.bf16.msra.mxu0 0
    %1220 = vmatpush.bf16.msra.mxu0 0
    %1221 = vmatpush.bf16.msra.mxu0 %v1212
    %1222 = vmatmul.bf16.gmra.mxu0 %v1209
    %v1223 = vpop.f32.mrf.mxu0
    %v1224 = vadd.f32 0.0, %v1223
    %v1225 = vpop.f32.mrf.mxu0
    %v1226 = vadd.f32 0.0, %v1225
    %1227 = vdwg.mxu0
    %v1228 = vsel %vm593, %v1178, -inf
    %1229 = vmax.xlane.f32.xlu0 %v1228
    %v1230 = vpop.xlane.xlu0 %1229
    %v1231 = vsel %vm597, %v1179, -inf
    %1232 = vmax.xlane.f32.xlu0 %v1231
    %v1233 = vpop.xlane.xlu0 %1232
    %v1234 = vsub.f32 %v1178, %v1230
    %v1235 = vsub.f32 %v1179, %v1233
    %v1236 = vmul.f32 %v1234, 1.442695
    %v1237 = vpow.pop %v1236
    %v1238 = vmul.f32 %v1235, 1.442695
    %v1239 = vpow.pop %v1238
    %1242 = vrot.lane.b32.xlu0 %v1237, 116
    %v1243 = vpop.permute.xlu0 %1242
    %1244 = vrot.lane.b32.xlu0 %v1239, 116
    %v1245 = vpop.permute.xlu0 %1244
    %v1248 = vsel %vm168, %v1243, 0.0
    %1249 = vadd.xlane.f32.xlu0 %v1248
    %v1250 = vpop.xlane.xlu0 %1249
    %v1251 = vsel %vm546, %v1245, 0.0
    %1252 = vadd.xlane.f32.xlu0 %v1251
    %v1253 = vpop.xlane.xlu0 %1252
    %v1254 = vrcp.pop %v1250
    %v1255 = vrcp.pop %v1253
    %v1256 = vmul.f32 %v1237, %v1254
    %v1257 = vmul.f32 %v1239, %v1255
    %v1258 = vpack.c.bf16 %v1257, %v1256
    %1260 = vrot.lane.b32.xlu0 %v1258, 116
    %v1261 = vpop.permute.xlu0 %1260
    %1262 = vrot.lane.b32.xlu0 %v1207, 120
    %v1263 = vpop.permute.xlu0 %1262
    %v1265 = vsel %vm168, %v1261, 0
    %v1268 = vsel %vm575, %v1263, 0
    %1270 = vmatpush.bf16.msra.mxu0 0
    %1271 = vmatpush.bf16.msra.mxu0 0
    %1272 = vmatpush.bf16.msra.mxu0 0
    %1273 = vmatpush.bf16.msra.mxu0 0
    %1274 = vmatpush.bf16.msra.mxu0 0
    %1275 = vmatpush.bf16.msra.mxu0 0
    %1276 = vmatpush.bf16.msra.mxu0 0
    %1277 = vmatpush.bf16.msra.mxu0 %v1268
    %1278 = vmatmul.bf16.gmra.mxu0 %v1265
    %v1279 = vpop.f32.mrf.mxu0
    %v1280 = vadd.f32 0.0, %v1279
    %v1281 = vpop.f32.mrf.mxu0
    %v1282 = vadd.f32 0.0, %v1281
    %1283 = vdwg.mxu0
    %v1284 = vsel %vm651, %v1178, -inf
    %1285 = vmax.xlane.f32.xlu0 %v1284
    %v1286 = vpop.xlane.xlu0 %1285
    %v1287 = vsel %vm655, %v1179, -inf
    %1288 = vmax.xlane.f32.xlu0 %v1287
    %v1289 = vpop.xlane.xlu0 %1288
    %v1290 = vsub.f32 %v1178, %v1286
    %v1291 = vsub.f32 %v1179, %v1289
    %v1292 = vmul.f32 %v1290, 1.442695
    %v1293 = vpow.pop %v1292
    %v1294 = vmul.f32 %v1291, 1.442695
    %v1295 = vpow.pop %v1294
    %1298 = vrot.lane.b32.xlu0 %v1293, 104
    %v1299 = vpop.permute.xlu0 %1298
    %1300 = vrot.lane.b32.xlu0 %v1295, 104
    %v1301 = vpop.permute.xlu0 %1300
    %v1304 = vsel %vm168, %v1299, 0.0
    %1305 = vadd.xlane.f32.xlu0 %v1304
    %v1306 = vpop.xlane.xlu0 %1305
    %v1307 = vsel %vm546, %v1301, 0.0
    %1308 = vadd.xlane.f32.xlu0 %v1307
    %v1309 = vpop.xlane.xlu0 %1308
    %v1310 = vrcp.pop %v1306
    %v1311 = vrcp.pop %v1309
    %v1312 = vmul.f32 %v1293, %v1310
    %v1313 = vmul.f32 %v1295, %v1311
    %v1314 = vpack.c.bf16 %v1313, %v1312
    %1316 = vrot.lane.b32.xlu0 %v1314, 104
    %v1317 = vpop.permute.xlu0 %1316
    %1318 = vrot.lane.b32.xlu0 %v1207, 112
    %v1319 = vpop.permute.xlu0 %1318
    %v1321 = vsel %vm168, %v1317, 0
    %v1324 = vsel %vm575, %v1319, 0
    %1326 = vmatpush.bf16.msra.mxu0 0
    %1327 = vmatpush.bf16.msra.mxu0 0
    %1328 = vmatpush.bf16.msra.mxu0 0
    %1329 = vmatpush.bf16.msra.mxu0 0
    %1330 = vmatpush.bf16.msra.mxu0 0
    %1331 = vmatpush.bf16.msra.mxu0 0
    %1332 = vmatpush.bf16.msra.mxu0 0
    %1333 = vmatpush.bf16.msra.mxu0 %v1324
    %1334 = vmatmul.bf16.gmra.mxu0 %v1321
    %v1335 = vpop.f32.mrf.mxu0
    %v1336 = vadd.f32 0.0, %v1335
    %v1337 = vpop.f32.mrf.mxu0
    %v1338 = vadd.f32 0.0, %v1337
    %1339 = vdwg.mxu0
    %v1340 = vsel %vm709, %v1178, -inf
    %1341 = vmax.xlane.f32.xlu0 %v1340
    %v1342 = vpop.xlane.xlu0 %1341
    %v1343 = vsel %vm713, %v1179, -inf
    %1344 = vmax.xlane.f32.xlu0 %v1343
    %v1345 = vpop.xlane.xlu0 %1344
    %v1346 = vsub.f32 %v1178, %v1342
    %v1347 = vsub.f32 %v1179, %v1345
    %v1348 = vmul.f32 %v1346, 1.442695
    %v1349 = vpow.pop %v1348
    %v1350 = vmul.f32 %v1347, 1.442695
    %v1351 = vpow.pop %v1350
    %1354 = vrot.lane.b32.xlu0 %v1349, 92
    %v1355 = vpop.permute.xlu0 %1354
    %1356 = vrot.lane.b32.xlu0 %v1351, 92
    %v1357 = vpop.permute.xlu0 %1356
    %v1360 = vsel %vm168, %v1355, 0.0
    %1361 = vadd.xlane.f32.xlu0 %v1360
    %v1362 = vpop.xlane.xlu0 %1361
    %v1363 = vsel %vm546, %v1357, 0.0
    %1364 = vadd.xlane.f32.xlu0 %v1363
    %v1365 = vpop.xlane.xlu0 %1364
    %v1366 = vrcp.pop %v1362
    %v1367 = vrcp.pop %v1365
    %v1368 = vmul.f32 %v1349, %v1366
    %v1369 = vmul.f32 %v1351, %v1367
    %v1370 = vpack.c.bf16 %v1369, %v1368
    %1372 = vrot.lane.b32.xlu0 %v1370, 92
    %v1373 = vpop.permute.xlu0 %1372
    %1374 = vrot.lane.b32.xlu0 %v1207, 104
    %v1375 = vpop.permute.xlu0 %1374
    %v1377 = vsel %vm168, %v1373, 0
    %v1380 = vsel %vm575, %v1375, 0
    %1382 = vmatpush.bf16.msra.mxu0 0
    %1383 = vmatpush.bf16.msra.mxu0 0
    %1384 = vmatpush.bf16.msra.mxu0 0
    %1385 = vmatpush.bf16.msra.mxu0 0
    %1386 = vmatpush.bf16.msra.mxu0 0
    %1387 = vmatpush.bf16.msra.mxu0 0
    %1388 = vmatpush.bf16.msra.mxu0 0
    %1389 = vmatpush.bf16.msra.mxu0 %v1380
    %1390 = vmatmul.bf16.gmra.mxu0 %v1377
    %v1391 = vpop.f32.mrf.mxu0
    %v1392 = vadd.f32 0.0, %v1391
    %v1393 = vpop.f32.mrf.mxu0
    %v1394 = vadd.f32 0.0, %v1393
    %1395 = vdwg.mxu0
    %1398 = vrot.lane.b32.xlu0 %v1280, 8
    %v1399 = vpop.permute.xlu0 %1398
    %1400 = vrot.lane.b32.xlu0 %v1282, 8
    %v1401 = vpop.permute.xlu0 %1400
    %1406 = vrot.lane.b32.xlu0 %v1336, 16
    %v1407 = vpop.permute.xlu0 %1406
    %1408 = vrot.lane.b32.xlu0 %v1338, 16
    %v1409 = vpop.permute.xlu0 %1408
    %1414 = vrot.lane.b32.xlu0 %v1392, 24
    %v1415 = vpop.permute.xlu0 %1414
    %1416 = vrot.lane.b32.xlu0 %v1394, 24
    %v1417 = vpop.permute.xlu0 %1416
    %v1420 = vsel %vm791, %v1224, %v1399
    %v1421 = vsel %vm791, %v1226, %v1401
    %v1422 = vsel %vm205, %v1420, %v1407
    %v1423 = vsel %vm205, %v1421, %v1409
    %v1424 = vsel %vm171, %v1422, %v1415
    %v1425 = vsel %vm171, %v1423, %v1417
    %v1426 = vld [vmem:[%s35] sm:$0x1]
    %v1428 = vperm.slane %v1426, 0
    %v1430 = vadd.f32 %v1424, %v1428
    %v1431 = vadd.f32 %v1425, %v1428
    %v1432 = vpack.c.bf16 %v1431, %v1430
    %v1433 = vld [vmem:[%s37] sm:$0xff]
    %v1434 = vld [vmem:[%s37 + $0x8] sm:$0xff]
    %v1435 = vld [vmem:[%s37 + $0x10] sm:$0xff]
    %v1436 = vld [vmem:[%s37 + $0x18] sm:$0xff]
    %v1437 = vpack.c.bf16 %v1434, %v1433
    %v1438 = vpack.c.bf16 %v1436, %v1435
    %v1439 = vld [vmem:[%s39] sm:$0x1]
    %v1441 = vperm.slane %v1439, 0
    %v1444 = vsel %vm276, %v1432, 0
    %1446 = vmatpush.bf16.msra.mxu0 0
    %1447 = vmatpush.bf16.msra.mxu0 0
    %1448 = vmatpush.bf16.msra.mxu0 0
    %1449 = vmatpush.bf16.msra.mxu0 0
    %1450 = vmatpush.bf16.msra.mxu0 0
    %1451 = vmatpush.bf16.msra.mxu0 0
    %1452 = vmatpush.bf16.msra.mxu0 %v1438
    %1453 = vmatpush.bf16.msra.mxu0 %v1437
    %1454 = vmatmul.bf16.gmra.mxu0 %v1444
    %v1455 = vpop.f32.mrf.mxu0
    %v1456 = vadd.f32 %v1441, %v1455
    %v1457 = vpop.f32.mrf.mxu0
    %v1458 = vadd.f32 %v1441, %v1457
    %1459 = vdwg.mxu0
    %v1460 = vmax.f32 %v1456, 0.0
    %v1461 = vmax.f32 %v1458, 0.0
    %v1462 = vpack.c.bf16 %v1461, %v1460
    %v1463 = vld [vmem:[%s41] sm:$0xff]
    %v1464 = vpack.c.bf16 %v1463, %v1463
    %v1465 = vld [vmem:[%s43] sm:$0x1]
    %v1467 = vperm.slane %v1465, 0
    %v1470 = vsel %vm791, %v1462, 0
    %v1473 = vsel %vm844, %v1464, 0
    %1475 = vmatpush.bf16.msra.mxu0 0
    %1476 = vmatpush.bf16.msra.mxu0 0
    %1477 = vmatpush.bf16.msra.mxu0 0
    %1478 = vmatpush.bf16.msra.mxu0 0
    %1479 = vmatpush.bf16.msra.mxu0 0
    %1480 = vmatpush.bf16.msra.mxu0 0
    %1481 = vmatpush.bf16.msra.mxu0 0
    %1482 = vmatpush.bf16.msra.mxu0 %v1473
    %1483 = vmatmul.bf16.gmra.mxu0 %v1470
    %v1484 = vpop.f32.mrf.mxu0
    %v1485 = vadd.f32 %v1467, %v1484
    %v1486 = vpop.f32.mrf.mxu0
    %v1487 = vadd.f32 %v1467, %v1486
    %1488 = vdwg.mxu0
    %v1489 = vpack.c.bf16 %v1485, %v1485
    %v1490 = vpack.c.bf16 %v1487, %v1487
    %v1491 = vpack.c.bf16 %v1487, %v1485
    %1492 = vxpose.xlu0.b32.start [1/16] %v1485, 128
    %1493 = vxpose.xlu0.b32.cont [2/16] %v1487, 128
    %1494 = vxpose.xlu0.b32.cont [3/16] 0.0, 128
    %1495 = vxpose.xlu0.b32.cont [4/16] 0.0, 128
    %1496 = vxpose.xlu0.b32.cont [5/16] 0.0, 128
    %1497 = vxpose.xlu0.b32.cont [6/16] 0.0, 128
    %1498 = vxpose.xlu0.b32.cont [7/16] 0.0, 128
    %1499 = vxpose.xlu0.b32.cont [8/16] 0.0, 128
    %1500 = vxpose.xlu0.b32.cont [9/16] 0.0, 128
    %1501 = vxpose.xlu0.b32.cont [10/16] 0.0, 128
    %1502 = vxpose.xlu0.b32.cont [11/16] 0.0, 128
    %1503 = vxpose.xlu0.b32.cont [12/16] 0.0, 128
    %1504 = vxpose.xlu0.b32.cont [13/16] 0.0, 128
    %1505 = vxpose.xlu0.b32.cont [14/16] 0.0, 128
    %1506 = vxpose.xlu0.b32.cont [15/16] 0.0, 128
    %1507 = vxpose.xlu0.b32.end [16/16] 0.0, 128
    %v1508 = vpop.trf.xlu0
    %v1509 = vpop.trf.xlu0
    %v1510 = vpop.trf.xlu0
    %v1511 = vpop.trf.xlu0
    %v1512 = vpop.trf.xlu0
    %v1513 = vpop.trf.xlu0
    %v1514 = vpop.trf.xlu0
    %v1515 = vpop.trf.xlu0
    %v1516 = vpop.trf.xlu0
    %v1517 = vpop.trf.xlu0
    %v1518 = vpop.trf.xlu0
    %v1519 = vpop.trf.xlu0
    %v1520 = vpop.trf.xlu0
    %v1521 = vpop.trf.xlu0
    %v1522 = vpop.trf.xlu0
    %v1523 = vpop.trf.xlu0
    %1525 = vrot.lane.b32.xlu0 %v1509, 12
    %v1526 = vpop.permute.xlu0 %1525
    %1529 = vrot.lane.b32.xlu0 %v1510, 24
    %v1530 = vpop.permute.xlu0 %1529
    %1533 = vrot.lane.b32.xlu0 %v1511, 36
    %v1534 = vpop.permute.xlu0 %1533
    %v1536 = vsel %vm168, %v1508, %v1526
    %v1537 = vsel %vm171, %v1536, %v1530
    %v1538 = vsel %vm174, %v1537, %v1534
    %1540 = vrot.lane.b32.xlu0 %v1491, 96
    %v1541 = vpop.permute.xlu0 %1540
    %v1543 = vsel %vm276, %v1541, 0
    %1545 = vmatpush.bf16.msra.mxu0 0
    %1546 = vmatpush.bf16.msra.mxu0 0
    %1547 = vmatpush.bf16.msra.mxu0 0
    %1548 = vmatpush.bf16.msra.mxu0 0
    %1549 = vmatpush.bf16.msra.mxu0 0
    %1550 = vmatpush.bf16.msra.mxu0 0
    %1551 = vmatpush.bf16.msra.mxu0 %v192
    %1552 = vmatpush.bf16.msra.mxu0 %v189
    %1553 = vmatmul.bf16.gmra.mxu0 %v1543
    %v1554 = vpop.f32.mrf.mxu0
    %v1555 = vadd.f32 0.0, %v1554
    %v1556 = vpop.f32.mrf.mxu0
    %v1557 = vadd.f32 0.0, %v1556
    %1558 = vdwg.mxu0
    %1559 = vmatpush.bf16.msra.mxu0 0
    %1560 = vmatpush.bf16.msra.mxu0 0
    %1561 = vmatpush.bf16.msra.mxu0 0
    %1562 = vmatpush.bf16.msra.mxu0 0
    %1563 = vmatpush.bf16.msra.mxu0 0
    %1564 = vmatpush.bf16.msra.mxu0 0
    %1565 = vmatpush.bf16.msra.mxu0 %v193
    %1566 = vmatpush.bf16.msra.mxu0 %v190
    %1567 = vmatmul.bf16.gmra.mxu0 %v1543
    %v1568 = vpop.f32.mrf.mxu0
    %v1569 = vadd.f32 0.0, %v1568
    %v1570 = vpop.f32.mrf.mxu0
    %v1571 = vadd.f32 0.0, %v1570
    %1572 = vdwg.mxu0
    %1573 = vmatpush.bf16.msra.mxu0 0
    %1574 = vmatpush.bf16.msra.mxu0 0
    %1575 = vmatpush.bf16.msra.mxu0 0
    %1576 = vmatpush.bf16.msra.mxu0 0
    %1577 = vmatpush.bf16.msra.mxu0 0
    %1578 = vmatpush.bf16.msra.mxu0 0
    %1579 = vmatpush.bf16.msra.mxu0 %v194
    %1580 = vmatpush.bf16.msra.mxu0 %v191
    %1581 = vmatmul.bf16.gmra.mxu0 %v1543
    %v1582 = vpop.f32.mrf.mxu0
    %v1583 = vadd.f32 0.0, %v1582
    %v1584 = vpop.f32.mrf.mxu0
    %v1585 = vadd.f32 0.0, %v1584
    %1586 = vdwg.mxu0
    %v1587 = vld [vmem:[%s49] sm:$0xff]
    %v1588 = vld [vmem:[%s49 + $0x8] sm:$0xff]
    %v1589 = vld [vmem:[%s49 + $0x10] sm:$0xff]
    %v1590 = vld [vmem:[%s49 + $0x18] sm:$0xff]
    %v1591 = vpack.c.bf16 %v1588, %v1587
    %v1592 = vpack.c.bf16 %v1590, %v1589
    %v1593 = vld [vmem:[%s47] sm:$0xff]
    %v1594 = vmul.f32 %v1593, %v1538
    %v1595 = vsel %vm330, %v1594, 0.0
    %v1596 = vrot.slane %v1595, 4
    %v1597 = vadd.f32 %v1595, %v1596
    %v1598 = vrot.slane %v1597, 2
    %v1599 = vadd.f32 %v1597, %v1598
    %v1600 = vrot.slane %v1599, 1
    %v1601 = vadd.f32 %v1599, %v1600
    %1602 = vmatpush.bf16.msra.mxu0 0
    %1603 = vmatpush.bf16.msra.mxu0 0
    %1604 = vmatpush.bf16.msra.mxu0 0
    %1605 = vmatpush.bf16.msra.mxu0 0
    %1606 = vmatpush.bf16.msra.mxu0 0
    %1607 = vmatpush.bf16.msra.mxu0 0
    %1608 = vmatpush.bf16.msra.mxu0 %v1592
    %1609 = vmatpush.bf16.msra.mxu0 %v1591
    %1610 = vmatmul.bf16.gmra.mxu0 %v1543
    %v1611 = vpop.f32.mrf.mxu0
    %v1612 = vadd.f32 %v1601, %v1611
    %v1613 = vpop.f32.mrf.mxu0
    %v1614 = vadd.f32 %v1601, %v1613
    %1615 = vdwg.mxu0
    %v1616 = vld [vmem:[%s45] sm:$0xff]
    %v1617 = vperm.slane %v1538, 0
    %v1618 = vadd.f32 %v1555, %v1617
    %v1619 = vadd.f32 %v1557, %v1617
    %v1620 = vand.u32 2147483647, %v1618
    %v1621 = vand.u32 2147483647, %v1619
    %v1622 = vperm.slane %v1616, 0
    %v1623 = vmul.f32 %v1622, %v1620
    %v1624 = vmul.f32 %v1622, %v1621
    %v1625 = vperm.slane %v1538, 1
    %1627 = vrot.lane.b32.xlu0 %v1625, 48
    %v1628 = vpop.permute.xlu0 %1627
    %v1630 = vadd.f32 %v1555, %v1628
    %v1631 = vadd.f32 %v1557, %v1628
    %v1632 = vand.u32 2147483647, %v1630
    %v1633 = vand.u32 2147483647, %v1631
    %v1634 = vperm.slane %v1616, 1
    %1637 = vrot.lane.b32.xlu0 %v1632, 80
    %v1638 = vpop.permute.xlu0 %1637
    %1639 = vrot.lane.b32.xlu0 %v1633, 80
    %v1640 = vpop.permute.xlu0 %1639
    %v1643 = vmul.f32 %v1634, %v1638
    %v1644 = vmul.f32 %v1634, %v1640
    %v1645 = vadd.f32 %v1623, %v1643
    %v1646 = vadd.f32 %v1624, %v1644
    %v1647 = vperm.slane %v1538, 2
    %1649 = vrot.lane.b32.xlu0 %v1647, 96
    %v1650 = vpop.permute.xlu0 %1649
    %v1652 = vadd.f32 %v1555, %v1650
    %v1653 = vadd.f32 %v1569, %v1650
    %v1654 = vadd.f32 %v1557, %v1650
    %v1655 = vadd.f32 %v1571, %v1650
    %v1656 = vand.u32 2147483647, %v1652
    %v1657 = vand.u32 2147483647, %v1653
    %v1658 = vand.u32 2147483647, %v1654
    %v1659 = vand.u32 2147483647, %v1655
    %v1660 = vperm.slane %v1616, 2
    %1665 = vrot.lane.b32.xlu0 %v1656, 32
    %v1666 = vpop.permute.xlu0 %1665
    %1667 = vrot.lane.b32.xlu0 %v1657, 32
    %v1668 = vpop.permute.xlu0 %1667
    %1669 = vrot.lane.b32.xlu0 %v1658, 32
    %v1670 = vpop.permute.xlu0 %1669
    %1671 = vrot.lane.b32.xlu0 %v1659, 32
    %v1672 = vpop.permute.xlu0 %1671
    %v1673 = vsel %vm276, %v1666, %v1668
    %v1674 = vsel %vm276, %v1670, %v1672
    %v1677 = vmul.f32 %v1660, %v1673
    %v1678 = vmul.f32 %v1660, %v1674
    %v1679 = vadd.f32 %v1645, %v1677
    %v1680 = vadd.f32 %v1646, %v1678
    %v1681 = vperm.slane %v1538, 3
    %1683 = vrot.lane.b32.xlu0 %v1681, 16
    %v1684 = vpop.permute.xlu0 %1683
    %v1686 = vadd.f32 %v1569, %v1684
    %v1687 = vadd.f32 %v1571, %v1684
    %v1688 = vand.u32 2147483647, %v1686
    %v1689 = vand.u32 2147483647, %v1687
    %v1690 = vperm.slane %v1616, 3
    %1693 = vrot.lane.b32.xlu0 %v1688, 112
    %v1694 = vpop.permute.xlu0 %1693
    %1695 = vrot.lane.b32.xlu0 %v1689, 112
    %v1696 = vpop.permute.xlu0 %1695
    %v1699 = vmul.f32 %v1690, %v1694
    %v1700 = vmul.f32 %v1690, %v1696
    %v1701 = vadd.f32 %v1679, %v1699
    %v1702 = vadd.f32 %v1680, %v1700
    %v1703 = vperm.slane %v1538, 4
    %1705 = vrot.lane.b32.xlu0 %v1703, 64
    %v1706 = vpop.permute.xlu0 %1705
    %v1708 = vadd.f32 %v1569, %v1706
    %v1709 = vadd.f32 %v1571, %v1706
    %v1710 = vand.u32 2147483647, %v1708
    %v1711 = vand.u32 2147483647, %v1709
    %v1712 = vperm.slane %v1616, 4
    %1715 = vrot.lane.b32.xlu0 %v1710, 64
    %v1716 = vpop.permute.xlu0 %1715
    %1717 = vrot.lane.b32.xlu0 %v1711, 64
    %v1718 = vpop.permute.xlu0 %1717
    %v1721 = vmul.f32 %v1712, %v1716
    %v1722 = vmul.f32 %v1712, %v1718
    %v1723 = vadd.f32 %v1701, %v1721
    %v1724 = vadd.f32 %v1702, %v1722
    %v1725 = vperm.slane %v1538, 5
    %1727 = vrot.lane.b32.xlu0 %v1725, 112
    %v1728 = vpop.permute.xlu0 %1727
    %v1730 = vadd.f32 %v1569, %v1728
    %v1731 = vadd.f32 %v1583, %v1728
    %v1732 = vadd.f32 %v1571, %v1728
    %v1733 = vadd.f32 %v1585, %v1728
    %v1734 = vand.u32 2147483647, %v1730
    %v1735 = vand.u32 2147483647, %v1731
    %v1736 = vand.u32 2147483647, %v1732
    %v1737 = vand.u32 2147483647, %v1733
    %v1738 = vperm.slane %v1616, 5
    %1743 = vrot.lane.b32.xlu0 %v1734, 16
    %v1744 = vpop.permute.xlu0 %1743
    %1745 = vrot.lane.b32.xlu0 %v1735, 16
    %v1746 = vpop.permute.xlu0 %1745
    %1747 = vrot.lane.b32.xlu0 %v1736, 16
    %v1748 = vpop.permute.xlu0 %1747
    %1749 = vrot.lane.b32.xlu0 %v1737, 16
    %v1750 = vpop.permute.xlu0 %1749
    %v1751 = vsel %vm205, %v1744, %v1746
    %v1752 = vsel %vm205, %v1748, %v1750
    %v1755 = vmul.f32 %v1738, %v1751
    %v1756 = vmul.f32 %v1738, %v1752
    %v1757 = vadd.f32 %v1723, %v1755
    %v1758 = vadd.f32 %v1724, %v1756
    %v1759 = vperm.slane %v1538, 6
    %1761 = vrot.lane.b32.xlu0 %v1759, 32
    %v1762 = vpop.permute.xlu0 %1761
    %v1764 = vadd.f32 %v1583, %v1762
    %v1765 = vadd.f32 %v1585, %v1762
    %v1766 = vand.u32 2147483647, %v1764
    %v1767 = vand.u32 2147483647, %v1765
    %v1768 = vperm.slane %v1616, 6
    %1771 = vrot.lane.b32.xlu0 %v1766, 96
    %v1772 = vpop.permute.xlu0 %1771
    %1773 = vrot.lane.b32.xlu0 %v1767, 96
    %v1774 = vpop.permute.xlu0 %1773
    %v1777 = vmul.f32 %v1768, %v1772
    %v1778 = vmul.f32 %v1768, %v1774
    %v1779 = vadd.f32 %v1757, %v1777
    %v1780 = vadd.f32 %v1758, %v1778
    %v1781 = vperm.slane %v1538, 7
    %1783 = vrot.lane.b32.xlu0 %v1781, 80
    %v1784 = vpop.permute.xlu0 %1783
    %v1786 = vadd.f32 %v1583, %v1784
    %v1787 = vadd.f32 %v1585, %v1784
    %v1788 = vand.u32 2147483647, %v1786
    %v1789 = vand.u32 2147483647, %v1787
    %v1790 = vperm.slane %v1616, 7
    %1793 = vrot.lane.b32.xlu0 %v1788, 48
    %v1794 = vpop.permute.xlu0 %1793
    %1795 = vrot.lane.b32.xlu0 %v1789, 48
    %v1796 = vpop.permute.xlu0 %1795
    %v1799 = vmul.f32 %v1790, %v1794
    %v1800 = vmul.f32 %v1790, %v1796
    %v1801 = vadd.f32 %v1779, %v1799
    %v1802 = vadd.f32 %v1780, %v1800
    %v1803 = vadd.f32 %v1612, %v1801
    %v1804 = vadd.f32 %v1614, %v1802
    %v1805 = vadd.f32 %v1803, %v175
    %v1806 = vadd.f32 %v1804, %v176
    %v1807 = vsel %vm168, %v1805, -inf
    %1808 = vmax.xlane.f32.xlu0 %v1807
    %v1809 = vpop.xlane.xlu0 %1808
    %v1810 = vsel %vm546, %v1806, -inf
    %1811 = vmax.xlane.f32.xlu0 %v1810
    %v1812 = vpop.xlane.xlu0 %1811
    %v1813 = vsub.f32 %v1805, %v1809
    %v1814 = vsub.f32 %v1806, %v1812
    %v1815 = vmul.f32 %v1813, 1.442695
    %v1816 = vpow.pop %v1815
    %v1817 = vmul.f32 %v1814, 1.442695
    %v1818 = vpow.pop %v1817
    %v1819 = vsel %vm168, %v1816, 0.0
    %1820 = vadd.xlane.f32.xlu0 %v1819
    %v1821 = vpop.xlane.xlu0 %1820
    %v1822 = vsel %vm546, %v1818, 0.0
    %1823 = vadd.xlane.f32.xlu0 %v1822
    %v1824 = vpop.xlane.xlu0 %1823
    %v1825 = vrcp.pop %v1821
    %v1826 = vrcp.pop %v1824
    %v1827 = vmul.f32 %v1816, %v1825
    %v1828 = vmul.f32 %v1818, %v1826
    %v1829 = vpack.c.bf16 %v1828, %v1827
    %v1832 = vunpack.c.l.b16 %v1489
    %v1833 = vunpack.c.l.b16 %v1490
    %v1834 = vpack.c.b16 %v1833, %v1832
    %v1836 = vsel %vm168, %v1829, 0
    %v1839 = vsel %vm575, %v1834, 0
    %1841 = vmatpush.bf16.msra.mxu0 0
    %1842 = vmatpush.bf16.msra.mxu0 0
    %1843 = vmatpush.bf16.msra.mxu0 0
    %1844 = vmatpush.bf16.msra.mxu0 0
    %1845 = vmatpush.bf16.msra.mxu0 0
    %1846 = vmatpush.bf16.msra.mxu0 0
    %1847 = vmatpush.bf16.msra.mxu0 0
    %1848 = vmatpush.bf16.msra.mxu0 %v1839
    %1849 = vmatmul.bf16.gmra.mxu0 %v1836
    %v1850 = vpop.f32.mrf.mxu0
    %v1851 = vadd.f32 0.0, %v1850
    %v1852 = vpop.f32.mrf.mxu0
    %v1853 = vadd.f32 0.0, %v1852
    %1854 = vdwg.mxu0
    %v1855 = vsel %vm593, %v1805, -inf
    %1856 = vmax.xlane.f32.xlu0 %v1855
    %v1857 = vpop.xlane.xlu0 %1856
    %v1858 = vsel %vm597, %v1806, -inf
    %1859 = vmax.xlane.f32.xlu0 %v1858
    %v1860 = vpop.xlane.xlu0 %1859
    %v1861 = vsub.f32 %v1805, %v1857
    %v1862 = vsub.f32 %v1806, %v1860
    %v1863 = vmul.f32 %v1861, 1.442695
    %v1864 = vpow.pop %v1863
    %v1865 = vmul.f32 %v1862, 1.442695
    %v1866 = vpow.pop %v1865
    %1869 = vrot.lane.b32.xlu0 %v1864, 116
    %v1870 = vpop.permute.xlu0 %1869
    %1871 = vrot.lane.b32.xlu0 %v1866, 116
    %v1872 = vpop.permute.xlu0 %1871
    %v1875 = vsel %vm168, %v1870, 0.0
    %1876 = vadd.xlane.f32.xlu0 %v1875
    %v1877 = vpop.xlane.xlu0 %1876
    %v1878 = vsel %vm546, %v1872, 0.0
    %1879 = vadd.xlane.f32.xlu0 %v1878
    %v1880 = vpop.xlane.xlu0 %1879
    %v1881 = vrcp.pop %v1877
    %v1882 = vrcp.pop %v1880
    %v1883 = vmul.f32 %v1864, %v1881
    %v1884 = vmul.f32 %v1866, %v1882
    %v1885 = vpack.c.bf16 %v1884, %v1883
    %1887 = vrot.lane.b32.xlu0 %v1885, 116
    %v1888 = vpop.permute.xlu0 %1887
    %1889 = vrot.lane.b32.xlu0 %v1834, 120
    %v1890 = vpop.permute.xlu0 %1889
    %v1892 = vsel %vm168, %v1888, 0
    %v1895 = vsel %vm575, %v1890, 0
    %1897 = vmatpush.bf16.msra.mxu0 0
    %1898 = vmatpush.bf16.msra.mxu0 0
    %1899 = vmatpush.bf16.msra.mxu0 0
    %1900 = vmatpush.bf16.msra.mxu0 0
    %1901 = vmatpush.bf16.msra.mxu0 0
    %1902 = vmatpush.bf16.msra.mxu0 0
    %1903 = vmatpush.bf16.msra.mxu0 0
    %1904 = vmatpush.bf16.msra.mxu0 %v1895
    %1905 = vmatmul.bf16.gmra.mxu0 %v1892
    %v1906 = vpop.f32.mrf.mxu0
    %v1907 = vadd.f32 0.0, %v1906
    %v1908 = vpop.f32.mrf.mxu0
    %v1909 = vadd.f32 0.0, %v1908
    %1910 = vdwg.mxu0
    %v1911 = vsel %vm651, %v1805, -inf
    %1912 = vmax.xlane.f32.xlu0 %v1911
    %v1913 = vpop.xlane.xlu0 %1912
    %v1914 = vsel %vm655, %v1806, -inf
    %1915 = vmax.xlane.f32.xlu0 %v1914
    %v1916 = vpop.xlane.xlu0 %1915
    %v1917 = vsub.f32 %v1805, %v1913
    %v1918 = vsub.f32 %v1806, %v1916
    %v1919 = vmul.f32 %v1917, 1.442695
    %v1920 = vpow.pop %v1919
    %v1921 = vmul.f32 %v1918, 1.442695
    %v1922 = vpow.pop %v1921
    %1925 = vrot.lane.b32.xlu0 %v1920, 104
    %v1926 = vpop.permute.xlu0 %1925
    %1927 = vrot.lane.b32.xlu0 %v1922, 104
    %v1928 = vpop.permute.xlu0 %1927
    %v1931 = vsel %vm168, %v1926, 0.0
    %1932 = vadd.xlane.f32.xlu0 %v1931
    %v1933 = vpop.xlane.xlu0 %1932
    %v1934 = vsel %vm546, %v1928, 0.0
    %1935 = vadd.xlane.f32.xlu0 %v1934
    %v1936 = vpop.xlane.xlu0 %1935
    %v1937 = vrcp.pop %v1933
    %v1938 = vrcp.pop %v1936
    %v1939 = vmul.f32 %v1920, %v1937
    %v1940 = vmul.f32 %v1922, %v1938
    %v1941 = vpack.c.bf16 %v1940, %v1939
    %1943 = vrot.lane.b32.xlu0 %v1941, 104
    %v1944 = vpop.permute.xlu0 %1943
    %1945 = vrot.lane.b32.xlu0 %v1834, 112
    %v1946 = vpop.permute.xlu0 %1945
    %v1948 = vsel %vm168, %v1944, 0
    %v1951 = vsel %vm575, %v1946, 0
    %1953 = vmatpush.bf16.msra.mxu0 0
    %1954 = vmatpush.bf16.msra.mxu0 0
    %1955 = vmatpush.bf16.msra.mxu0 0
    %1956 = vmatpush.bf16.msra.mxu0 0
    %1957 = vmatpush.bf16.msra.mxu0 0
    %1958 = vmatpush.bf16.msra.mxu0 0
    %1959 = vmatpush.bf16.msra.mxu0 0
    %1960 = vmatpush.bf16.msra.mxu0 %v1951
    %1961 = vmatmul.bf16.gmra.mxu0 %v1948
    %v1962 = vpop.f32.mrf.mxu0
    %v1963 = vadd.f32 0.0, %v1962
    %v1964 = vpop.f32.mrf.mxu0
    %v1965 = vadd.f32 0.0, %v1964
    %1966 = vdwg.mxu0
    %v1967 = vsel %vm709, %v1805, -inf
    %1968 = vmax.xlane.f32.xlu0 %v1967
    %v1969 = vpop.xlane.xlu0 %1968
    %v1970 = vsel %vm713, %v1806, -inf
    %1971 = vmax.xlane.f32.xlu0 %v1970
    %v1972 = vpop.xlane.xlu0 %1971
    %v1973 = vsub.f32 %v1805, %v1969
    %v1974 = vsub.f32 %v1806, %v1972
    %v1975 = vmul.f32 %v1973, 1.442695
    %v1976 = vpow.pop %v1975
    %v1977 = vmul.f32 %v1974, 1.442695
    %v1978 = vpow.pop %v1977
    %1981 = vrot.lane.b32.xlu0 %v1976, 92
    %v1982 = vpop.permute.xlu0 %1981
    %1983 = vrot.lane.b32.xlu0 %v1978, 92
    %v1984 = vpop.permute.xlu0 %1983
    %v1987 = vsel %vm168, %v1982, 0.0
    %1988 = vadd.xlane.f32.xlu0 %v1987
    %v1989 = vpop.xlane.xlu0 %1988
    %v1990 = vsel %vm546, %v1984, 0.0
    %1991 = vadd.xlane.f32.xlu0 %v1990
    %v1992 = vpop.xlane.xlu0 %1991
    %v1993 = vrcp.pop %v1989
    %v1994 = vrcp.pop %v1992
    %v1995 = vmul.f32 %v1976, %v1993
    %v1996 = vmul.f32 %v1978, %v1994
    %v1997 = vpack.c.bf16 %v1996, %v1995
    %1999 = vrot.lane.b32.xlu0 %v1997, 92
    %v2000 = vpop.permute.xlu0 %1999
    %2001 = vrot.lane.b32.xlu0 %v1834, 104
    %v2002 = vpop.permute.xlu0 %2001
    %v2004 = vsel %vm168, %v2000, 0
    %v2007 = vsel %vm575, %v2002, 0
    %2009 = vmatpush.bf16.msra.mxu0 0
    %2010 = vmatpush.bf16.msra.mxu0 0
    %2011 = vmatpush.bf16.msra.mxu0 0
    %2012 = vmatpush.bf16.msra.mxu0 0
    %2013 = vmatpush.bf16.msra.mxu0 0
    %2014 = vmatpush.bf16.msra.mxu0 0
    %2015 = vmatpush.bf16.msra.mxu0 0
    %2016 = vmatpush.bf16.msra.mxu0 %v2007
    %2017 = vmatmul.bf16.gmra.mxu0 %v2004
    %v2018 = vpop.f32.mrf.mxu0
    %v2019 = vadd.f32 0.0, %v2018
    %v2020 = vpop.f32.mrf.mxu0
    %v2021 = vadd.f32 0.0, %v2020
    %2022 = vdwg.mxu0
    %2025 = vrot.lane.b32.xlu0 %v1907, 8
    %v2026 = vpop.permute.xlu0 %2025
    %2027 = vrot.lane.b32.xlu0 %v1909, 8
    %v2028 = vpop.permute.xlu0 %2027
    %2033 = vrot.lane.b32.xlu0 %v1963, 16
    %v2034 = vpop.permute.xlu0 %2033
    %2035 = vrot.lane.b32.xlu0 %v1965, 16
    %v2036 = vpop.permute.xlu0 %2035
    %2041 = vrot.lane.b32.xlu0 %v2019, 24
    %v2042 = vpop.permute.xlu0 %2041
    %2043 = vrot.lane.b32.xlu0 %v2021, 24
    %v2044 = vpop.permute.xlu0 %2043
    %v2047 = vsel %vm791, %v1851, %v2026
    %v2048 = vsel %vm791, %v1853, %v2028
    %v2049 = vsel %vm205, %v2047, %v2034
    %v2050 = vsel %vm205, %v2048, %v2036
    %v2051 = vsel %vm171, %v2049, %v2042
    %v2052 = vsel %vm171, %v2050, %v2044
    %v2053 = vld [vmem:[%s51] sm:$0x1]
    %v2055 = vperm.slane %v2053, 0
    %v2057 = vadd.f32 %v2051, %v2055
    %v2058 = vadd.f32 %v2052, %v2055
    %v2059 = vpack.c.bf16 %v2058, %v2057
    %v2060 = vld [vmem:[%s53] sm:$0xff]
    %v2061 = vld [vmem:[%s53 + $0x8] sm:$0xff]
    %v2062 = vld [vmem:[%s53 + $0x10] sm:$0xff]
    %v2063 = vld [vmem:[%s53 + $0x18] sm:$0xff]
    %v2064 = vpack.c.bf16 %v2061, %v2060
    %v2065 = vpack.c.bf16 %v2063, %v2062
    %v2066 = vld [vmem:[%s55] sm:$0x1]
    %v2068 = vperm.slane %v2066, 0
    %v2071 = vsel %vm276, %v2059, 0
    %2073 = vmatpush.bf16.msra.mxu0 0
    %2074 = vmatpush.bf16.msra.mxu0 0
    %2075 = vmatpush.bf16.msra.mxu0 0
    %2076 = vmatpush.bf16.msra.mxu0 0
    %2077 = vmatpush.bf16.msra.mxu0 0
    %2078 = vmatpush.bf16.msra.mxu0 0
    %2079 = vmatpush.bf16.msra.mxu0 %v2065
    %2080 = vmatpush.bf16.msra.mxu0 %v2064
    %2081 = vmatmul.bf16.gmra.mxu0 %v2071
    %v2082 = vpop.f32.mrf.mxu0
    %v2083 = vadd.f32 %v2068, %v2082
    %v2084 = vpop.f32.mrf.mxu0
    %v2085 = vadd.f32 %v2068, %v2084
    %2086 = vdwg.mxu0
    %v2087 = vld [vmem:[%s5] sm:$0x3]
    %v2088 = vpack.c.bf16 %v2087, %v2087
    %v2089 = vpack.c.bf16 %v2085, %v2083
    %v2091 = vsel %vm168, %v2088, 0
    %v2094 = vsel %vm575, %v2089, 0
    %2096 = vmatpush.bf16.msra.mxu0 0
    %2097 = vmatpush.bf16.msra.mxu0 0
    %2098 = vmatpush.bf16.msra.mxu0 0
    %2099 = vmatpush.bf16.msra.mxu0 0
    %2100 = vmatpush.bf16.msra.mxu0 0
    %2101 = vmatpush.bf16.msra.mxu0 0
    %2102 = vmatpush.bf16.msra.mxu0 0
    %2103 = vmatpush.bf16.msra.mxu0 %v2094
    %2104 = vmatmul.bf16.gmra.mxu0 %v2091
    %v2105 = vpop.f32.mrf.mxu0
    %v2106 = vadd.f32 0.0, %v2105
    %v2107 = vpop.f32.mrf.mxu0
    %2108 = vdwg.mxu0
    %v2109 = vpack.c.bf16 %v2106, %v2106
    %v2110 = vld [vmem:[%s57] sm:$0xff]
    %v2111 = vpack.c.bf16 %v2110, %v2110
    %v2112 = vld [vmem:[%s59] sm:$0x1]
    %v2114 = vperm.slane %v2112, 0
    %v2117 = vsel %vm791, %v2109, 0
    %v2120 = vsel %vm844, %v2111, 0
    %2122 = vmatpush.bf16.msra.mxu0 0
    %2123 = vmatpush.bf16.msra.mxu0 0
    %2124 = vmatpush.bf16.msra.mxu0 0
    %2125 = vmatpush.bf16.msra.mxu0 0
    %2126 = vmatpush.bf16.msra.mxu0 0
    %2127 = vmatpush.bf16.msra.mxu0 0
    %2128 = vmatpush.bf16.msra.mxu0 0
    %2129 = vmatpush.bf16.msra.mxu0 %v2120
    %2130 = vmatmul.bf16.gmra.mxu0 %v2117
    %v2131 = vpop.f32.mrf.mxu0
    %v2132 = vadd.f32 %v2114, %v2131
    %v2133 = vpop.f32.mrf.mxu0
    %2134 = vdwg.mxu0
    %v2135 = vmax.f32 %v2132, 0.0
    %v2136 = vpack.c.bf16 %v2135, %v2135
    %v2137 = vld [vmem:[%s61] sm:$0xff]
    %v2138 = vld [vmem:[%s61 + $0x8] sm:$0xff]
    %v2139 = vld [vmem:[%s61 + $0x10] sm:$0xff]
    %v2140 = vld [vmem:[%s61 + $0x18] sm:$0xff]
    %v2141 = vpack.c.bf16 %v2138, %v2137
    %v2142 = vpack.c.bf16 %v2140, %v2139
    %v2143 = vld [vmem:[%s63] sm:$0x1]
    %v2145 = vperm.slane %v2143, 0
    %v2148 = vsel %vm276, %v2136, 0
    %2150 = vmatpush.bf16.msra.mxu0 0
    %2151 = vmatpush.bf16.msra.mxu0 0
    %2152 = vmatpush.bf16.msra.mxu0 0
    %2153 = vmatpush.bf16.msra.mxu0 0
    %2154 = vmatpush.bf16.msra.mxu0 0
    %2155 = vmatpush.bf16.msra.mxu0 0
    %2156 = vmatpush.bf16.msra.mxu0 %v2142
    %2157 = vmatpush.bf16.msra.mxu0 %v2141
    %2158 = vmatmul.bf16.gmra.mxu0 %v2148
    %v2159 = vpop.f32.mrf.mxu0
    %v2160 = vadd.f32 %v2145, %v2159
    %v2161 = vpop.f32.mrf.mxu0
    %2162 = vdwg.mxu0
    %vm2163 = vcmask 123904
    %2164 = vst.msk [vmem:[#allocation2] sm:$0x3] %vm2163, %v2160
    // Predicated region
    $region130: #{gat_encoder_v2.1} parent=1 // pred_check
      _
    $region131: #{gat_encoder_v2.1} parent=1 // pred_check_branch
      %2166 = sbr.rel (0) target = $region133
    $region132: #{gat_encoder_v2.1} parent=1 // pred_region
      %2168 = vsyncadd [#allocation3], 0
      %s2170 = sshll.u32 [#allocation2], 4
      %s2171 = int_to_ptr.vmem [resolvable:$true] %s2170
      %s2172 = sshll.u32 %s65, 4
      %s2173 = int_to_ptr.hbm [resolvable:$true] %s2172
      %2175 = dma.vmem_to_hbm [thread:$0]  %s2171, 32, %s2173, [#allocation3]
    $region133: #{gat_encoder_v2.1} parent=1 // pred_fallthru
      _
    // Predicated region
    $region134: #{gat_encoder_v2.1} parent=1 // pred_check
      _
    $region135: #{gat_encoder_v2.1} parent=1 // pred_check_branch
      %2177 = sbr.rel (0) target = $region137
    $region136: #{gat_encoder_v2.1} parent=1 // pred_region
      %2179 = dma.done [#allocation3], 32
    $region137: #{gat_encoder_v2.1} parent=1 // pred_fallthru
      _
    %2180 = vsyncpa [#allocation3], 1

</llo_original>
